<compile_context>
chip_gen: v7x
topology: tpu7x:2x2x1
jax: 0.10.0
libtpu: 0.0.40
codegen_flags: <defaults>
</compile_context>

<pallas_src>
import math
from functools import partial

import jax
import jax.numpy as jnp
from jax.experimental import pallas as pl
from jax.experimental.pallas import tpu as pltpu


def _vmem_limit_bytes():
    # Generation-aware scoped-VMEM limit (v5e/v6e: 128 MiB phys, v7x: 64 MiB).
    try:
        cap = int(pltpu.get_tpu_info().vmem_capacity_bytes)
    except Exception:
        cap = 64 * 1024 * 1024
    return int(max(16 * 1024 * 1024, min(cap // 2, 64 * 1024 * 1024)))


VMEM_LIMIT = _vmem_limit_bytes()


def _pick_block(n, target=256):
    """Largest multiple of 8 <= target that divides n (falls back to n)."""
    best = None
    b = 8
    cap = min(n, target)
    while b <= cap:
        if n % b == 0:
            best = b
        b += 8
    return best if best is not None else n


# ----------------------------- Pallas kernels -----------------------------

def _ln_linear_kernel(x_ref, g_ref, b_ref, w_ref, bias_ref, o_ref, *, gelu):
    # Fused LayerNorm + Linear (+ optional tanh-GELU epilogue).
    # x: (bm, C) f32, g/b: (1, C) f32, w: (C, N) bf16, bias: (1, N) f32.
    # Accumulate in f32; single cast on store (output is bf16).
    x = x_ref[...]
    mu = jnp.mean(x, axis=-1, keepdims=True)
    var = jnp.mean(jnp.square(x - mu), axis=-1, keepdims=True)
    xn = (x - mu) * jax.lax.rsqrt(var + 1e-5) * g_ref[...] + b_ref[...]
    acc = jnp.dot(xn.astype(jnp.bfloat16), w_ref[...],
                  preferred_element_type=jnp.float32) + bias_ref[...]
    if gelu:
        c = math.sqrt(2.0 / math.pi)
        acc = 0.5 * acc * (1.0 + jnp.tanh(c * (acc + 0.044715 * acc * acc * acc)))
    o_ref[...] = acc.astype(o_ref.dtype)


def _attn_proj_res_kernel(qkv_ref, wp_ref, bp_ref, res_ref, o_ref,
                          *, H, hd, scale):
    # One batch row-block: causal attention for ALL heads (static column
    # slices of the bf16 qkv slab, layout [q | k | v], hd-wide head columns),
    # a single full-C c_proj contraction, and the residual add.
    C = H * hd
    T = qkv_ref.shape[0]

    # Causal mask hoisted out of the per-head loop (built once per grid step).
    row = jax.lax.broadcasted_iota(jnp.int32, (T, T), 0)
    col = jax.lax.broadcasted_iota(jnp.int32, (T, T), 1)
    neg = jnp.where(col <= row, 0.0, -1e30).astype(jnp.float32)

    ys = []
    for h in range(H):  # static unroll; H is a compile-time constant
        q = qkv_ref[:, h * hd:(h + 1) * hd]                    # (T, hd) bf16
        k = qkv_ref[:, C + h * hd:C + (h + 1) * hd]            # (T, hd) bf16
        v = qkv_ref[:, 2 * C + h * hd:2 * C + (h + 1) * hd]    # (T, hd) bf16
        # TODO(synk): K is contracted on its last dim (in-kernel transpose);
        # at real sizes emit K pre-transposed (hd, T) from the qkv kernel.
        s = jax.lax.dot_general(
            q, k, (((1,), (1,)), ((), ())),
            preferred_element_type=jnp.float32) * scale        # (T, T) f32
        s = s + neg
        m = jnp.max(s, axis=-1, keepdims=True)
        p = jnp.exp(s - m)
        denom = jnp.sum(p, axis=-1, keepdims=True)
        # NOTE: approx reciprocal => softmax rows sum to 1 only to ~1e-3 rel.
        p = p * pl.reciprocal(denom, approx=True)              # EUP slot
        ys.append(jnp.dot(p.astype(jnp.bfloat16), v,
                          preferred_element_type=jnp.float32))  # (T, hd) f32

    # Single full-C contraction for c_proj (fills the 256-wide MXU on v6e/v7x
    # instead of H separate K=hd matmuls).
    y = jnp.concatenate(ys, axis=-1).astype(jnp.bfloat16)       # (T, C)
    acc = jnp.dot(y, wp_ref[...], preferred_element_type=jnp.float32)
    o_ref[...] = acc + bp_ref[...] + res_ref[...]               # f32 residual


def _proj_residual_kernel(h_ref, w_ref, bias_ref, res_ref, o_ref):
    # o = res + h @ w + bias  (h, w already bf16; f32 accumulate/residual)
    acc = jnp.dot(h_ref[...], w_ref[...], preferred_element_type=jnp.float32)
    o_ref[...] = acc + bias_ref[...] + res_ref[...]


def _ln_lmhead_kernel(x_ref, g_ref, b_ref, wt_ref, o_ref):
    # Final LayerNorm + tied lm_head; wt is the PRE-TRANSPOSED bf16 (C, bn)
    # block of wte, so no per-tile XLU transpose is needed.
    x = x_ref[...]
    mu = jnp.mean(x, axis=-1, keepdims=True)
    var = jnp.mean(jnp.square(x - mu), axis=-1, keepdims=True)
    xn = (x - mu) * jax.lax.rsqrt(var + 1e-5) * g_ref[...] + b_ref[...]
    o_ref[...] = jnp.dot(xn.astype(jnp.bfloat16), wt_ref[...],
                         preferred_element_type=jnp.float32)


# ----------------------------- kernel wrappers -----------------------------

def fused_ln_linear(x2d, g, b, w, bias, *, gelu, bm):
    M, C = x2d.shape
    N = w.shape[1]
    # TODO(synk): at real GPT-2 widths, tile N (and K with an f32 VMEM acc)
    # instead of holding the full (C, N) weight block resident per step.
    return pl.pallas_call(
        partial(_ln_linear_kernel, gelu=gelu),
        out_shape=jax.ShapeDtypeStruct((M, N), jnp.bfloat16),
        grid=(M // bm,),
        in_specs=[
            pl.BlockSpec((bm, C), lambda i: (i, 0)),
            pl.BlockSpec((1, C), lambda i: (0, 0)),
            pl.BlockSpec((1, C), lambda i: (0, 0)),
            pl.BlockSpec((C, N), lambda i: (0, 0)),
            pl.BlockSpec((1, N), lambda i: (0, 0)),
        ],
        out_specs=pl.BlockSpec((bm, N), lambda i: (i, 0)),
        compiler_params=pltpu.CompilerParams(
            dimension_semantics=("parallel",), vmem_limit_bytes=VMEM_LIMIT),
    )(x2d, g, b, w, bias)


def fused_attn_proj_residual(qkv, w_proj, b_proj, res2d, *, B, T, H, hd, C):
    # qkv: (B*T, 3C) bf16 laid out [q | k | v], heads in hd-wide column blocks.
    M = B * T
    scale = 1.0 / math.sqrt(hd)
    return pl.pallas_call(
        partial(_attn_proj_res_kernel, H=H, hd=hd, scale=scale),
        out_shape=jax.ShapeDtypeStruct((M, C), jnp.float32),
        grid=(B,),
        in_specs=[
            pl.BlockSpec((T, 3 * C), lambda b: (b, 0)),   # whole qkv row-block
            pl.BlockSpec((C, C), lambda b: (0, 0)),       # c_proj weight (bf16)
            pl.BlockSpec((1, C), lambda b: (0, 0)),       # c_proj bias (f32)
            pl.BlockSpec((T, C), lambda b: (b, 0)),       # residual (f32)
        ],
        out_specs=pl.BlockSpec((T, C), lambda b: (b, 0)),
        compiler_params=pltpu.CompilerParams(
            dimension_semantics=("parallel",), vmem_limit_bytes=VMEM_LIMIT),
    )(qkv, w_proj, b_proj, res2d)


def fused_proj_residual(h2d, w, bias, res2d, *, bm):
    M, K = h2d.shape
    N = w.shape[1]
    return pl.pallas_call(
        _proj_residual_kernel,
        out_shape=jax.ShapeDtypeStruct((M, N), jnp.float32),
        grid=(M // bm,),
        in_specs=[
            pl.BlockSpec((bm, K), lambda i: (i, 0)),
            pl.BlockSpec((K, N), lambda i: (0, 0)),
            pl.BlockSpec((1, N), lambda i: (0, 0)),
            pl.BlockSpec((bm, N), lambda i: (i, 0)),
        ],
        out_specs=pl.BlockSpec((bm, N), lambda i: (i, 0)),
        compiler_params=pltpu.CompilerParams(
            dimension_semantics=("parallel",), vmem_limit_bytes=VMEM_LIMIT),
    )(h2d, w, bias, res2d)


def fused_lnf_lm_head(x2d, g, b, wte_t, *, bm, bn):
    M, C = x2d.shape
    V = wte_t.shape[1]
    return pl.pallas_call(
        _ln_lmhead_kernel,
        out_shape=jax.ShapeDtypeStruct((M, V), jnp.float32),
        grid=(M // bm, V // bn),
        in_specs=[
            pl.BlockSpec((bm, C), lambda i, j: (i, 0)),
            pl.BlockSpec((1, C), lambda i, j: (0, 0)),
            pl.BlockSpec((1, C), lambda i, j: (0, 0)),
            pl.BlockSpec((C, bn), lambda i, j: (0, j)),   # pre-transposed wte
        ],
        out_specs=pl.BlockSpec((bm, bn), lambda i, j: (i, j)),
        compiler_params=pltpu.CompilerParams(
            dimension_semantics=("parallel", "parallel"),
            vmem_limit_bytes=VMEM_LIMIT),
    )(x2d, g, b, wte_t)


# ----------------------------- model definition -----------------------------

class Config:
    # Small demo config (lane-dense: n_embd and head_dim are 128-multiples).
    block_size = 64
    vocab_size = 512
    n_layer = 2
    n_head = 2
    n_embd = 256


def init_params(key, cfg):
    std = 0.02
    scaled_std = std * (2 * cfg.n_layer) ** (-0.5)
    C, V = cfg.n_embd, cfg.vocab_size

    def normal(k, shape, s, dtype):
        return (s * jax.random.normal(k, shape)).astype(dtype)

    keys = iter(jax.random.split(key, 64))
    wte = normal(next(keys), (V, C), std, jnp.bfloat16)       # tied lm_head
    params = {
        "wte": wte,
        "wte_t": wte.T,                                       # (C, V) bf16
        "wpe": normal(next(keys), (cfg.block_size, C), std, jnp.float32),
        "lnf_g": jnp.ones((1, C), jnp.float32),
        "lnf_b": jnp.zeros((1, C), jnp.float32),
        "blocks": [],
    }
    for _ in range(cfg.n_layer):
        blk = {
            "ln1_g": jnp.ones((1, C), jnp.float32),
            "ln1_b": jnp.zeros((1, C), jnp.float32),
            "c_attn_w": normal(next(keys), (C, 3 * C), std, jnp.bfloat16),
            "c_attn_b": jnp.zeros((1, 3 * C), jnp.float32),
            "c_proj_w": normal(next(keys), (C, C), scaled_std, jnp.bfloat16),   # SCALE_INIT_FLAG
            "c_proj_b": jnp.zeros((1, C), jnp.float32),
            "ln2_g": jnp.ones((1, C), jnp.float32),
            "ln2_b": jnp.zeros((1, C), jnp.float32),
            "c_fc_w": normal(next(keys), (C, 4 * C), std, jnp.bfloat16),
            "c_fc_b": jnp.zeros((1, 4 * C), jnp.float32),
            "mlp_proj_w": normal(next(keys), (4 * C, C), scaled_std, jnp.bfloat16),  # SCALE_INIT_FLAG
            "mlp_proj_b": jnp.zeros((1, C), jnp.float32),
        }
        params["blocks"].append(blk)
    return params


def gpt_forward(params, idx, cfg):
    B, T = idx.shape
    C, H = cfg.n_embd, cfg.n_head
    hd = C // H
    M = B * T
    assert T <= cfg.block_size and T % 8 == 0
    # Keep >= 2 "parallel" grid steps where possible (v7x dual-TensorCore).
    bm = _pick_block(M, target=max(8, min(256, M // 2)))
    bn = _pick_block(cfg.vocab_size, target=256)

    # TODO(synk): embedding row gather has no rectangular BlockSpec; plain JAX.
    tok_emb = jnp.take(params["wte"], idx, axis=0)             # (B, T, C) bf16
    pos_emb = params["wpe"][:T][None, :, :]                    # (1, T, C) f32
    x = (tok_emb.astype(jnp.float32) + pos_emb).reshape(M, C)  # residual f32

    for blk in params["blocks"]:
        # --- attention sub-block: 2 fused kernels, no XLA glue ---
        qkv = fused_ln_linear(x, blk["ln1_g"], blk["ln1_b"],
                              blk["c_attn_w"], blk["c_attn_b"],
                              gelu=False, bm=bm)               # (M, 3C) bf16
        x = fused_attn_proj_residual(qkv, blk["c_proj_w"], blk["c_proj_b"], x,
                                     B=B, T=T, H=H, hd=hd, C=C)

        # --- MLP sub-block: 2 fused kernels ---
        h = fused_ln_linear(x, blk["ln2_g"], blk["ln2_b"],
                            blk["c_fc_w"], blk["c_fc_b"],
                            gelu=True, bm=bm)                  # (M, 4C) bf16
        x = fused_proj_residual(h, blk["mlp_proj_w"], blk["mlp_proj_b"], x, bm=bm)

    logits = fused_lnf_lm_head(x, params["lnf_g"], params["lnf_b"],
                               params["wte_t"], bm=bm, bn=bn)
    return logits.reshape(B, T, cfg.vocab_size)


# ----------------------------- pure-JAX f32 reference -----------------------------

def _ref_ln(x, g, b):
    mu = jnp.mean(x, axis=-1, keepdims=True)
    var = jnp.mean((x - mu) ** 2, axis=-1, keepdims=True)
    return (x - mu) / jnp.sqrt(var + 1e-5) * g + b


def _ref_gelu(x):
    c = math.sqrt(2.0 / math.pi)
    return 0.5 * x * (1.0 + jnp.tanh(c * (x + 0.044715 * x ** 3)))


def gpt_forward_ref(params, idx, cfg):
    # Pure-f32 math on the same (bf16-quantized) weight values.
    B, T = idx.shape
    C, H = cfg.n_embd, cfg.n_head
    hd = C // H
    f32 = lambda a: a.astype(jnp.float32)
    x = f32(jnp.take(params["wte"], idx, axis=0)) + params["wpe"][:T][None]
    for blk in params["blocks"]:
        h = _ref_ln(x, blk["ln1_g"], blk["ln1_b"])
        qkv = h @ f32(blk["c_attn_w"]) + blk["c_attn_b"]
        q, k, v = jnp.split(qkv, 3, axis=-1)
        q = q.reshape(B, T, H, hd).transpose(0, 2, 1, 3)
        k = k.reshape(B, T, H, hd).transpose(0, 2, 1, 3)
        v = v.reshape(B, T, H, hd).transpose(0, 2, 1, 3)
        s = (q @ jnp.swapaxes(k, -1, -2)) / math.sqrt(hd)
        mask = jnp.tril(jnp.ones((T, T), bool))
        s = jnp.where(mask[None, None], s, -jnp.inf)
        p = jax.nn.softmax(s, axis=-1)
        y = (p @ v).transpose(0, 2, 1, 3).reshape(B, T, C)
        x = x + (y @ f32(blk["c_proj_w"]) + blk["c_proj_b"])
        h = _ref_ln(x, blk["ln2_g"], blk["ln2_b"])
        h = _ref_gelu(h @ f32(blk["c_fc_w"]) + blk["c_fc_b"])
        x = x + (h @ f32(blk["mlp_proj_w"]) + blk["mlp_proj_b"])
    x = _ref_ln(x, params["lnf_g"], params["lnf_b"])
    return x @ f32(params["wte"]).T


# ----------------------------- main -----------------------------

if __name__ == "__main__":
    cfg = Config()
    key = jax.random.PRNGKey(0)
    pkey, ikey = jax.random.split(key)
    params = init_params(pkey, cfg)

    B, T = 2, 32
    idx = jax.random.randint(ikey, (B, T), 0, cfg.vocab_size, dtype=jnp.int32)

    fwd = jax.jit(partial(gpt_forward, cfg=cfg))
    logits = jax.block_until_ready(fwd(params, idx))
    assert logits.shape == (B, T, cfg.vocab_size)

    ref = jax.block_until_ready(gpt_forward_ref(params, idx, cfg))
    # bf16 weights + bf16 inter-kernel activations (qkv / GELU hidden) +
    # approx reciprocal => compare to the f32 reference with a
    # bf16-appropriate tolerance (accumulation/statistics/residual stay f32).
    max_err = float(jnp.max(jnp.abs(logits - ref)))
    assert jnp.allclose(logits, ref, atol=5e-2, rtol=5e-2), max_err

    print("KERNEL_OK")
</pallas_src>

<mosaic_0001>
module attributes {stable_mosaic.version = 11 : i64} {
  func.func @_attn_proj_res_kernel(%arg0: i32, %arg1: memref<32x768xbf16, #tpu.memory_space<vmem>>, %arg2: memref<256x256xbf16, #tpu.memory_space<vmem>>, %arg3: memref<1x256xf32, #tpu.memory_space<vmem>>, %arg4: memref<32x256xf32, #tpu.memory_space<vmem>>, %arg5: memref<32x256xf32, #tpu.memory_space<vmem>>) attributes {dimension_semantics = [#tpu.dimension_semantics<parallel>], iteration_bounds = array<i64: 2>, scalar_prefetch = 0 : i64, scratch_operands = 0 : i64, tpu.core_type = #tpu.core_type<tc>, window_params = [{transform_indices = @transform_0, window_bounds = array<i64: 32, 768>}, {pipeline_mode = #tpu.pipeline_mode<synchronous>, transform_indices = @transform_1, window_bounds = array<i64: 256, 256>}, {pipeline_mode = #tpu.pipeline_mode<synchronous>, transform_indices = @transform_2, window_bounds = array<i64: 1, 256>}, {transform_indices = @transform_3, window_bounds = array<i64: 32, 256>}, {transform_indices = @transform_4, window_bounds = array<i64: 32, 256>}]} {
    %0 = tpu.iota {dimensions = array<i32: 0>} : vector<32x32xi32>
    %1 = tpu.iota {dimensions = array<i32: 1>} : vector<32x32xi32>
    %2 = arith.cmpi sle, %1, %0 : vector<32x32xi32>
    %cst = arith.constant 0.000000e+00 : f32
    %cst_0 = arith.constant -1.000000e+30 : f32
    %3 = vector.broadcast %cst : f32 to vector<32x32xf32>
    %4 = vector.broadcast %cst_0 : f32 to vector<32x32xf32>
    %5 = arith.select %2, %3, %4 : vector<32x32xi1>, vector<32x32xf32>
    %c0 = arith.constant 0 : index
    %c0_1 = arith.constant 0 : index
    %6 = vector.load %arg1[%c0, %c0_1] : memref<32x768xbf16, #tpu.memory_space<vmem>>, vector<32x128xbf16>
    %c0_2 = arith.constant 0 : index
    %c256 = arith.constant 256 : index
    %7 = vector.load %arg1[%c0_2, %c256] : memref<32x768xbf16, #tpu.memory_space<vmem>>, vector<32x128xbf16>
    %c0_3 = arith.constant 0 : index
    %c512 = arith.constant 512 : index
    %8 = vector.load %arg1[%c0_3, %c512] : memref<32x768xbf16, #tpu.memory_space<vmem>>, vector<32x128xbf16>
    %cst_4 = arith.constant dense<0.000000e+00> : vector<32x32xf32>
    %9 = tpu.matmul %6, %7, %cst_4 {dimension_numbers = #tpu.dot_dimension_numbers<[1], [1], [0], [0], [0, 0, 1, 0], [], []>} : vector<32x128xbf16>, vector<32x128xbf16>, vector<32x32xf32> -> vector<32x32xf32>
    %cst_5 = arith.constant 0.0883883461 : f32
    %10 = vector.broadcast %cst_5 : f32 to vector<32x32xf32>
    %11 = arith.mulf %9, %10 : vector<32x32xf32>
    %12 = arith.addf %11, %5 : vector<32x32xf32>
    %cst_6 = arith.constant dense<0xFF800000> : vector<32xf32>
    %13 = vector.multi_reduction <maximumf>, %12, %cst_6 [1] : vector<32x32xf32> to vector<32xf32>
    %14 = vector.shape_cast %13 : vector<32xf32> to vector<32x1xf32>
    %15 = vector.broadcast %14 : vector<32x1xf32> to vector<32x32xf32>
    %16 = arith.subf %12, %15 : vector<32x32xf32>
    %17 = math.exp %16 : vector<32x32xf32>
    %cst_7 = arith.constant dense<0.000000e+00> : vector<32xf32>
    %18 = vector.multi_reduction <add>, %17, %cst_7 [1] : vector<32x32xf32> to vector<32xf32>
    %19 = vector.shape_cast %18 : vector<32xf32> to vector<32x1xf32>
    %20 = tpu.reciprocal %19 {approx = true} : vector<32x1xf32> -> vector<32x1xf32>
    %21 = vector.broadcast %20 : vector<32x1xf32> to vector<32x32xf32>
    %22 = arith.mulf %17, %21 : vector<32x32xf32>
    %23 = arith.truncf %22 : vector<32x32xf32> to vector<32x32xbf16>
    %cst_8 = arith.constant dense<0.000000e+00> : vector<32x128xf32>
    %24 = tpu.matmul %23, %8, %cst_8 {dimension_numbers = #tpu.dot_dimension_numbers<[1], [0], [0], [1], [0, 0, 1, 1], [], []>} : vector<32x32xbf16>, vector<32x128xbf16>, vector<32x128xf32> -> vector<32x128xf32>
    %c0_9 = arith.constant 0 : index
    %c128 = arith.constant 128 : index
    %25 = vector.load %arg1[%c0_9, %c128] : memref<32x768xbf16, #tpu.memory_space<vmem>>, vector<32x128xbf16>
    %c0_10 = arith.constant 0 : index
    %c384 = arith.constant 384 : index
    %26 = vector.load %arg1[%c0_10, %c384] : memref<32x768xbf16, #tpu.memory_space<vmem>>, vector<32x128xbf16>
    %c0_11 = arith.constant 0 : index
    %c640 = arith.constant 640 : index
    %27 = vector.load %arg1[%c0_11, %c640] : memref<32x768xbf16, #tpu.memory_space<vmem>>, vector<32x128xbf16>
    %cst_12 = arith.constant dense<0.000000e+00> : vector<32x32xf32>
    %28 = tpu.matmul %25, %26, %cst_12 {dimension_numbers = #tpu.dot_dimension_numbers<[1], [1], [0], [0], [0, 0, 1, 0], [], []>} : vector<32x128xbf16>, vector<32x128xbf16>, vector<32x32xf32> -> vector<32x32xf32>
    %cst_13 = arith.constant 0.0883883461 : f32
    %29 = vector.broadcast %cst_13 : f32 to vector<32x32xf32>
    %30 = arith.mulf %28, %29 : vector<32x32xf32>
    %31 = arith.addf %30, %5 : vector<32x32xf32>
    %cst_14 = arith.constant dense<0xFF800000> : vector<32xf32>
    %32 = vector.multi_reduction <maximumf>, %31, %cst_14 [1] : vector<32x32xf32> to vector<32xf32>
    %33 = vector.shape_cast %32 : vector<32xf32> to vector<32x1xf32>
    %34 = vector.broadcast %33 : vector<32x1xf32> to vector<32x32xf32>
    %35 = arith.subf %31, %34 : vector<32x32xf32>
    %36 = math.exp %35 : vector<32x32xf32>
    %cst_15 = arith.constant dense<0.000000e+00> : vector<32xf32>
    %37 = vector.multi_reduction <add>, %36, %cst_15 [1] : vector<32x32xf32> to vector<32xf32>
    %38 = vector.shape_cast %37 : vector<32xf32> to vector<32x1xf32>
    %39 = tpu.reciprocal %38 {approx = true} : vector<32x1xf32> -> vector<32x1xf32>
    %40 = vector.broadcast %39 : vector<32x1xf32> to vector<32x32xf32>
    %41 = arith.mulf %36, %40 : vector<32x32xf32>
    %42 = arith.truncf %41 : vector<32x32xf32> to vector<32x32xbf16>
    %cst_16 = arith.constant dense<0.000000e+00> : vector<32x128xf32>
    %43 = tpu.matmul %42, %27, %cst_16 {dimension_numbers = #tpu.dot_dimension_numbers<[1], [0], [0], [1], [0, 0, 1, 1], [], []>} : vector<32x32xbf16>, vector<32x128xbf16>, vector<32x128xf32> -> vector<32x128xf32>
    %44 = tpu.concatenate %24, %43 in 1 : vector<32x128xf32>, vector<32x128xf32> -> vector<32x256xf32>
    %45 = arith.truncf %44 : vector<32x256xf32> to vector<32x256xbf16>
    %c0_17 = arith.constant 0 : index
    %c0_18 = arith.constant 0 : index
    %46 = vector.load %arg2[%c0_17, %c0_18] : memref<256x256xbf16, #tpu.memory_space<vmem>>, vector<256x256xbf16>
    %cst_19 = arith.constant dense<0.000000e+00> : vector<32x256xf32>
    %47 = tpu.matmul %45, %46, %cst_19 {dimension_numbers = #tpu.dot_dimension_numbers<[1], [0], [0], [1], [0, 0, 1, 1], [], []>} : vector<32x256xbf16>, vector<256x256xbf16>, vector<32x256xf32> -> vector<32x256xf32>
    %c0_20 = arith.constant 0 : index
    %c0_21 = arith.constant 0 : index
    %48 = vector.load %arg3[%c0_20, %c0_21] : memref<1x256xf32, #tpu.memory_space<vmem>>, vector<1x256xf32>
    %49 = vector.broadcast %48 : vector<1x256xf32> to vector<32x256xf32>
    %50 = arith.addf %47, %49 : vector<32x256xf32>
    %c0_22 = arith.constant 0 : index
    %c0_23 = arith.constant 0 : index
    %51 = vector.load %arg4[%c0_22, %c0_23] : memref<32x256xf32, #tpu.memory_space<vmem>>, vector<32x256xf32>
    %52 = arith.addf %50, %51 : vector<32x256xf32>
    %c0_24 = arith.constant 0 : index
    %c0_25 = arith.constant 0 : index
    %53 = vector.load %arg5[%c0_24, %c0_25] : memref<32x256xf32, #tpu.memory_space<vmem>>, vector<32x256xf32>
    tpu.vector_store %arg5[%c0_24, %c0_25], %52 {strides = array<i32>} : memref<32x256xf32, #tpu.memory_space<vmem>>, vector<32x256xf32>,
    return
  }
  func.func @transform_0(%arg0: i32) -> (i32, i32) {
    %c0_i32 = arith.constant 0 : i32
    %c0_i32_0 = arith.constant 0 : i32
    return %arg0, %c0_i32 : i32, i32
  }
  func.func @transform_1(%arg0: i32) -> (i32, i32) {
    %c0_i32 = arith.constant 0 : i32
    %c0_i32_0 = arith.constant 0 : i32
    %c0_i32_1 = arith.constant 0 : i32
    return %c0_i32, %c0_i32_0 : i32, i32
  }
  func.func @transform_2(%arg0: i32) -> (i32, i32) {
    %c0_i32 = arith.constant 0 : i32
    %c0_i32_0 = arith.constant 0 : i32
    %c0_i32_1 = arith.constant 0 : i32
    return %c0_i32, %c0_i32_0 : i32, i32
  }
  func.func @transform_3(%arg0: i32) -> (i32, i32) {
    %c0_i32 = arith.constant 0 : i32
    %c0_i32_0 = arith.constant 0 : i32
    return %arg0, %c0_i32 : i32, i32
  }
  func.func @transform_4(%arg0: i32) -> (i32, i32) {
    %c0_i32 = arith.constant 0 : i32
    %c0_i32_0 = arith.constant 0 : i32
    return %arg0, %c0_i32 : i32, i32
  }
}

module attributes {stable_mosaic.version = 11 : i64} {
  func.func @_ln_linear_kernel(%arg0: i32, %arg1: memref<32x256xf32, #tpu.memory_space<vmem>>, %arg2: memref<1x256xf32, #tpu.memory_space<vmem>>, %arg3: memref<1x256xf32, #tpu.memory_space<vmem>>, %arg4: memref<256x768xbf16, #tpu.memory_space<vmem>>, %arg5: memref<1x768xf32, #tpu.memory_space<vmem>>, %arg6: memref<32x768xbf16, #tpu.memory_space<vmem>>) attributes {dimension_semantics = [#tpu.dimension_semantics<parallel>], iteration_bounds = array<i64: 2>, scalar_prefetch = 0 : i64, scratch_operands = 0 : i64, tpu.core_type = #tpu.core_type<tc>, window_params = [{transform_indices = @transform_0, window_bounds = array<i64: 32, 256>}, {pipeline_mode = #tpu.pipeline_mode<synchronous>, transform_indices = @transform_1, window_bounds = array<i64: 1, 256>}, {pipeline_mode = #tpu.pipeline_mode<synchronous>, transform_indices = @transform_2, window_bounds = array<i64: 1, 256>}, {pipeline_mode = #tpu.pipeline_mode<synchronous>, transform_indices = @transform_3, window_bounds = array<i64: 256, 768>}, {pipeline_mode = #tpu.pipeline_mode<synchronous>, transform_indices = @transform_4, window_bounds = array<i64: 1, 768>}, {transform_indices = @transform_5, window_bounds = array<i64: 32, 768>}]} {
    %c0 = arith.constant 0 : index
    %c0_0 = arith.constant 0 : index
    %0 = vector.load %arg1[%c0, %c0_0] : memref<32x256xf32, #tpu.memory_space<vmem>>, vector<32x256xf32>
    %cst = arith.constant dense<0.000000e+00> : vector<32xf32>
    %1 = vector.multi_reduction <add>, %0, %cst [1] : vector<32x256xf32> to vector<32xf32>
    %2 = vector.shape_cast %1 : vector<32xf32> to vector<32x1xf32>
    %cst_1 = arith.constant 2.560000e+02 : f32
    %3 = vector.broadcast %cst_1 : f32 to vector<32x1xf32>
    %4 = arith.divf %2, %3 : vector<32x1xf32>
    %5 = vector.broadcast %4 : vector<32x1xf32> to vector<32x256xf32>
    %6 = arith.subf %0, %5 : vector<32x256xf32>
    %7 = arith.mulf %6, %6 : vector<32x256xf32>
    %cst_2 = arith.constant dense<0.000000e+00> : vector<32xf32>
    %8 = vector.multi_reduction <add>, %7, %cst_2 [1] : vector<32x256xf32> to vector<32xf32>
    %9 = vector.shape_cast %8 : vector<32xf32> to vector<32x1xf32>
    %cst_3 = arith.constant 2.560000e+02 : f32
    %10 = vector.broadcast %cst_3 : f32 to vector<32x1xf32>
    %11 = arith.divf %9, %10 : vector<32x1xf32>
    %12 = vector.broadcast %4 : vector<32x1xf32> to vector<32x256xf32>
    %13 = arith.subf %0, %12 : vector<32x256xf32>
    %cst_4 = arith.constant 9.99999974E-6 : f32
    %14 = vector.broadcast %cst_4 : f32 to vector<32x1xf32>
    %15 = arith.addf %11, %14 : vector<32x1xf32>
    %16 = math.rsqrt %15 : vector<32x1xf32>
    %17 = vector.broadcast %16 : vector<32x1xf32> to vector<32x256xf32>
    %18 = arith.mulf %13, %17 : vector<32x256xf32>
    %c0_5 = arith.constant 0 : index
    %c0_6 = arith.constant 0 : index
    %19 = vector.load %arg2[%c0_5, %c0_6] : memref<1x256xf32, #tpu.memory_space<vmem>>, vector<1x256xf32>
    %20 = vector.broadcast %19 : vector<1x256xf32> to vector<32x256xf32>
    %21 = arith.mulf %18, %20 : vector<32x256xf32>
    %c0_7 = arith.constant 0 : index
    %c0_8 = arith.constant 0 : index
    %22 = vector.load %arg3[%c0_7, %c0_8] : memref<1x256xf32, #tpu.memory_space<vmem>>, vector<1x256xf32>
    %23 = vector.broadcast %22 : vector<1x256xf32> to vector<32x256xf32>
    %24 = arith.addf %21, %23 : vector<32x256xf32>
    %25 = arith.truncf %24 : vector<32x256xf32> to vector<32x256xbf16>
    %c0_9 = arith.constant 0 : index
    %c0_10 = arith.constant 0 : index
    %26 = vector.load %arg4[%c0_9, %c0_10] : memref<256x768xbf16, #tpu.memory_space<vmem>>, vector<256x768xbf16>
    %cst_11 = arith.constant dense<0.000000e+00> : vector<32x768xf32>
    %27 = tpu.matmul %25, %26, %cst_11 {dimension_numbers = #tpu.dot_dimension_numbers<[1], [0], [0], [1], [0, 0, 1, 1], [], []>} : vector<32x256xbf16>, vector<256x768xbf16>, vector<32x768xf32> -> vector<32x768xf32>
    %c0_12 = arith.constant 0 : index
    %c0_13 = arith.constant 0 : index
    %28 = vector.load %arg5[%c0_12, %c0_13] : memref<1x768xf32, #tpu.memory_space<vmem>>, vector<1x768xf32>
    %29 = vector.broadcast %28 : vector<1x768xf32> to vector<32x768xf32>
    %30 = arith.addf %27, %29 : vector<32x768xf32>
    %31 = arith.truncf %30 : vector<32x768xf32> to vector<32x768xbf16>
    %c0_14 = arith.constant 0 : index
    %c0_15 = arith.constant 0 : index
    %32 = vector.load %arg6[%c0_14, %c0_15] : memref<32x768xbf16, #tpu.memory_space<vmem>>, vector<32x768xbf16>
    tpu.vector_store %arg6[%c0_14, %c0_15], %31 {strides = array<i32>} : memref<32x768xbf16, #tpu.memory_space<vmem>>, vector<32x768xbf16>,
    return
  }
  func.func @transform_0(%arg0: i32) -> (i32, i32) {
    %c0_i32 = arith.constant 0 : i32
    %c0_i32_0 = arith.constant 0 : i32
    return %arg0, %c0_i32 : i32, i32
  }
  func.func @transform_1(%arg0: i32) -> (i32, i32) {
    %c0_i32 = arith.constant 0 : i32
    %c0_i32_0 = arith.constant 0 : i32
    %c0_i32_1 = arith.constant 0 : i32
    return %c0_i32, %c0_i32_0 : i32, i32
  }
  func.func @transform_2(%arg0: i32) -> (i32, i32) {
    %c0_i32 = arith.constant 0 : i32
    %c0_i32_0 = arith.constant 0 : i32
    %c0_i32_1 = arith.constant 0 : i32
    return %c0_i32, %c0_i32_0 : i32, i32
  }
  func.func @transform_3(%arg0: i32) -> (i32, i32) {
    %c0_i32 = arith.constant 0 : i32
    %c0_i32_0 = arith.constant 0 : i32
    %c0_i32_1 = arith.constant 0 : i32
    return %c0_i32, %c0_i32_0 : i32, i32
  }
  func.func @transform_4(%arg0: i32) -> (i32, i32) {
    %c0_i32 = arith.constant 0 : i32
    %c0_i32_0 = arith.constant 0 : i32
    %c0_i32_1 = arith.constant 0 : i32
    return %c0_i32, %c0_i32_0 : i32, i32
  }
  func.func @transform_5(%arg0: i32) -> (i32, i32) {
    %c0_i32 = arith.constant 0 : i32
    %c0_i32_0 = arith.constant 0 : i32
    return %arg0, %c0_i32 : i32, i32
  }
}

module attributes {stable_mosaic.version = 11 : i64} {
  func.func @_ln_linear_kernel(%arg0: i32, %arg1: memref<32x256xf32, #tpu.memory_space<vmem>>, %arg2: memref<1x256xf32, #tpu.memory_space<vmem>>, %arg3: memref<1x256xf32, #tpu.memory_space<vmem>>, %arg4: memref<256x1024xbf16, #tpu.memory_space<vmem>>, %arg5: memref<1x1024xf32, #tpu.memory_space<vmem>>, %arg6: memref<32x1024xbf16, #tpu.memory_space<vmem>>) attributes {dimension_semantics = [#tpu.dimension_semantics<parallel>], iteration_bounds = array<i64: 2>, scalar_prefetch = 0 : i64, scratch_operands = 0 : i64, tpu.core_type = #tpu.core_type<tc>, window_params = [{transform_indices = @transform_0, window_bounds = array<i64: 32, 256>}, {pipeline_mode = #tpu.pipeline_mode<synchronous>, transform_indices = @transform_1, window_bounds = array<i64: 1, 256>}, {pipeline_mode = #tpu.pipeline_mode<synchronous>, transform_indices = @transform_2, window_bounds = array<i64: 1, 256>}, {pipeline_mode = #tpu.pipeline_mode<synchronous>, transform_indices = @transform_3, window_bounds = array<i64: 256, 1024>}, {pipeline_mode = #tpu.pipeline_mode<synchronous>, transform_indices = @transform_4, window_bounds = array<i64: 1, 1024>}, {transform_indices = @transform_5, window_bounds = array<i64: 32, 1024>}]} {
    %c0 = arith.constant 0 : index
    %c0_0 = arith.constant 0 : index
    %0 = vector.load %arg1[%c0, %c0_0] : memref<32x256xf32, #tpu.memory_space<vmem>>, vector<32x256xf32>
    %cst = arith.constant dense<0.000000e+00> : vector<32xf32>
    %1 = vector.multi_reduction <add>, %0, %cst [1] : vector<32x256xf32> to vector<32xf32>
    %2 = vector.shape_cast %1 : vector<32xf32> to vector<32x1xf32>
    %cst_1 = arith.constant 2.560000e+02 : f32
    %3 = vector.broadcast %cst_1 : f32 to vector<32x1xf32>
    %4 = arith.divf %2, %3 : vector<32x1xf32>
    %5 = vector.broadcast %4 : vector<32x1xf32> to vector<32x256xf32>
    %6 = arith.subf %0, %5 : vector<32x256xf32>
    %7 = arith.mulf %6, %6 : vector<32x256xf32>
    %cst_2 = arith.constant dense<0.000000e+00> : vector<32xf32>
    %8 = vector.multi_reduction <add>, %7, %cst_2 [1] : vector<32x256xf32> to vector<32xf32>
    %9 = vector.shape_cast %8 : vector<32xf32> to vector<32x1xf32>
    %cst_3 = arith.constant 2.560000e+02 : f32
    %10 = vector.broadcast %cst_3 : f32 to vector<32x1xf32>
    %11 = arith.divf %9, %10 : vector<32x1xf32>
    %12 = vector.broadcast %4 : vector<32x1xf32> to vector<32x256xf32>
    %13 = arith.subf %0, %12 : vector<32x256xf32>
    %cst_4 = arith.constant 9.99999974E-6 : f32
    %14 = vector.broadcast %cst_4 : f32 to vector<32x1xf32>
    %15 = arith.addf %11, %14 : vector<32x1xf32>
    %16 = math.rsqrt %15 : vector<32x1xf32>
    %17 = vector.broadcast %16 : vector<32x1xf32> to vector<32x256xf32>
    %18 = arith.mulf %13, %17 : vector<32x256xf32>
    %c0_5 = arith.constant 0 : index
    %c0_6 = arith.constant 0 : index
    %19 = vector.load %arg2[%c0_5, %c0_6] : memref<1x256xf32, #tpu.memory_space<vmem>>, vector<1x256xf32>
    %20 = vector.broadcast %19 : vector<1x256xf32> to vector<32x256xf32>
    %21 = arith.mulf %18, %20 : vector<32x256xf32>
    %c0_7 = arith.constant 0 : index
    %c0_8 = arith.constant 0 : index
    %22 = vector.load %arg3[%c0_7, %c0_8] : memref<1x256xf32, #tpu.memory_space<vmem>>, vector<1x256xf32>
    %23 = vector.broadcast %22 : vector<1x256xf32> to vector<32x256xf32>
    %24 = arith.addf %21, %23 : vector<32x256xf32>
    %25 = arith.truncf %24 : vector<32x256xf32> to vector<32x256xbf16>
    %c0_9 = arith.constant 0 : index
    %c0_10 = arith.constant 0 : index
    %26 = vector.load %arg4[%c0_9, %c0_10] : memref<256x1024xbf16, #tpu.memory_space<vmem>>, vector<256x1024xbf16>
    %cst_11 = arith.constant dense<0.000000e+00> : vector<32x1024xf32>
    %27 = tpu.matmul %25, %26, %cst_11 {dimension_numbers = #tpu.dot_dimension_numbers<[1], [0], [0], [1], [0, 0, 1, 1], [], []>} : vector<32x256xbf16>, vector<256x1024xbf16>, vector<32x1024xf32> -> vector<32x1024xf32>
    %c0_12 = arith.constant 0 : index
    %c0_13 = arith.constant 0 : index
    %28 = vector.load %arg5[%c0_12, %c0_13] : memref<1x1024xf32, #tpu.memory_space<vmem>>, vector<1x1024xf32>
    %29 = vector.broadcast %28 : vector<1x1024xf32> to vector<32x1024xf32>
    %30 = arith.addf %27, %29 : vector<32x1024xf32>
    %cst_14 = arith.constant 5.000000e-01 : f32
    %31 = vector.broadcast %cst_14 : f32 to vector<32x1024xf32>
    %32 = arith.mulf %31, %30 : vector<32x1024xf32>
    %cst_15 = arith.constant 4.471500e-02 : f32
    %33 = vector.broadcast %cst_15 : f32 to vector<32x1024xf32>
    %34 = arith.mulf %33, %30 : vector<32x1024xf32>
    %35 = arith.mulf %34, %30 : vector<32x1024xf32>
    %36 = arith.mulf %35, %30 : vector<32x1024xf32>
    %37 = arith.addf %30, %36 : vector<32x1024xf32>
    %cst_16 = arith.constant 0.797884583 : f32
    %38 = vector.broadcast %cst_16 : f32 to vector<32x1024xf32>
    %39 = arith.mulf %38, %37 : vector<32x1024xf32>
    %40 = math.tanh %39 : vector<32x1024xf32>
    %cst_17 = arith.constant 1.000000e+00 : f32
    %41 = vector.broadcast %cst_17 : f32 to vector<32x1024xf32>
    %42 = arith.addf %41, %40 : vector<32x1024xf32>
    %43 = arith.mulf %32, %42 : vector<32x1024xf32>
    %44 = arith.truncf %43 : vector<32x1024xf32> to vector<32x1024xbf16>
    %c0_18 = arith.constant 0 : index
    %c0_19 = arith.constant 0 : index
    %45 = vector.load %arg6[%c0_18, %c0_19] : memref<32x1024xbf16, #tpu.memory_space<vmem>>, vector<32x1024xbf16>
    tpu.vector_store %arg6[%c0_18, %c0_19], %44 {strides = array<i32>} : memref<32x1024xbf16, #tpu.memory_space<vmem>>, vector<32x1024xbf16>,
    return
  }
  func.func @transform_0(%arg0: i32) -> (i32, i32) {
    %c0_i32 = arith.constant 0 : i32
    %c0_i32_0 = arith.constant 0 : i32
    return %arg0, %c0_i32 : i32, i32
  }
  func.func @transform_1(%arg0: i32) -> (i32, i32) {
    %c0_i32 = arith.constant 0 : i32
    %c0_i32_0 = arith.constant 0 : i32
    %c0_i32_1 = arith.constant 0 : i32
    return %c0_i32, %c0_i32_0 : i32, i32
  }
  func.func @transform_2(%arg0: i32) -> (i32, i32) {
    %c0_i32 = arith.constant 0 : i32
    %c0_i32_0 = arith.constant 0 : i32
    %c0_i32_1 = arith.constant 0 : i32
    return %c0_i32, %c0_i32_0 : i32, i32
  }
  func.func @transform_3(%arg0: i32) -> (i32, i32) {
    %c0_i32 = arith.constant 0 : i32
    %c0_i32_0 = arith.constant 0 : i32
    %c0_i32_1 = arith.constant 0 : i32
    return %c0_i32, %c0_i32_0 : i32, i32
  }
  func.func @transform_4(%arg0: i32) -> (i32, i32) {
    %c0_i32 = arith.constant 0 : i32
    %c0_i32_0 = arith.constant 0 : i32
    %c0_i32_1 = arith.constant 0 : i32
    return %c0_i32, %c0_i32_0 : i32, i32
  }
  func.func @transform_5(%arg0: i32) -> (i32, i32) {
    %c0_i32 = arith.constant 0 : i32
    %c0_i32_0 = arith.constant 0 : i32
    return %arg0, %c0_i32 : i32, i32
  }
}

module attributes {stable_mosaic.version = 11 : i64} {
  func.func @_proj_residual_kernel(%arg0: i32, %arg1: memref<32x1024xbf16, #tpu.memory_space<vmem>>, %arg2: memref<1024x256xbf16, #tpu.memory_space<vmem>>, %arg3: memref<1x256xf32, #tpu.memory_space<vmem>>, %arg4: memref<32x256xf32, #tpu.memory_space<vmem>>, %arg5: memref<32x256xf32, #tpu.memory_space<vmem>>) attributes {dimension_semantics = [#tpu.dimension_semantics<parallel>], iteration_bounds = array<i64: 2>, scalar_prefetch = 0 : i64, scratch_operands = 0 : i64, tpu.core_type = #tpu.core_type<tc>, window_params = [{transform_indices = @transform_0, window_bounds = array<i64: 32, 1024>}, {pipeline_mode = #tpu.pipeline_mode<synchronous>, transform_indices = @transform_1, window_bounds = array<i64: 1024, 256>}, {pipeline_mode = #tpu.pipeline_mode<synchronous>, transform_indices = @transform_2, window_bounds = array<i64: 1, 256>}, {transform_indices = @transform_3, window_bounds = array<i64: 32, 256>}, {transform_indices = @transform_4, window_bounds = array<i64: 32, 256>}]} {
    %c0 = arith.constant 0 : index
    %c0_0 = arith.constant 0 : index
    %0 = vector.load %arg1[%c0, %c0_0] : memref<32x1024xbf16, #tpu.memory_space<vmem>>, vector<32x1024xbf16>
    %c0_1 = arith.constant 0 : index
    %c0_2 = arith.constant 0 : index
    %1 = vector.load %arg2[%c0_1, %c0_2] : memref<1024x256xbf16, #tpu.memory_space<vmem>>, vector<1024x256xbf16>
    %cst = arith.constant dense<0.000000e+00> : vector<32x256xf32>
    %2 = tpu.matmul %0, %1, %cst {dimension_numbers = #tpu.dot_dimension_numbers<[1], [0], [0], [1], [0, 0, 1, 1], [], []>} : vector<32x1024xbf16>, vector<1024x256xbf16>, vector<32x256xf32> -> vector<32x256xf32>
    %c0_3 = arith.constant 0 : index
    %c0_4 = arith.constant 0 : index
    %3 = vector.load %arg3[%c0_3, %c0_4] : memref<1x256xf32, #tpu.memory_space<vmem>>, vector<1x256xf32>
    %4 = vector.broadcast %3 : vector<1x256xf32> to vector<32x256xf32>
    %5 = arith.addf %2, %4 : vector<32x256xf32>
    %c0_5 = arith.constant 0 : index
    %c0_6 = arith.constant 0 : index
    %6 = vector.load %arg4[%c0_5, %c0_6] : memref<32x256xf32, #tpu.memory_space<vmem>>, vector<32x256xf32>
    %7 = arith.addf %5, %6 : vector<32x256xf32>
    %c0_7 = arith.constant 0 : index
    %c0_8 = arith.constant 0 : index
    %8 = vector.load %arg5[%c0_7, %c0_8] : memref<32x256xf32, #tpu.memory_space<vmem>>, vector<32x256xf32>
    tpu.vector_store %arg5[%c0_7, %c0_8], %7 {strides = array<i32>} : memref<32x256xf32, #tpu.memory_space<vmem>>, vector<32x256xf32>,
    return
  }
  func.func @transform_0(%arg0: i32) -> (i32, i32) {
    %c0_i32 = arith.constant 0 : i32
    %c0_i32_0 = arith.constant 0 : i32
    return %arg0, %c0_i32 : i32, i32
  }
  func.func @transform_1(%arg0: i32) -> (i32, i32) {
    %c0_i32 = arith.constant 0 : i32
    %c0_i32_0 = arith.constant 0 : i32
    %c0_i32_1 = arith.constant 0 : i32
    return %c0_i32, %c0_i32_0 : i32, i32
  }
  func.func @transform_2(%arg0: i32) -> (i32, i32) {
    %c0_i32 = arith.constant 0 : i32
    %c0_i32_0 = arith.constant 0 : i32
    %c0_i32_1 = arith.constant 0 : i32
    return %c0_i32, %c0_i32_0 : i32, i32
  }
  func.func @transform_3(%arg0: i32) -> (i32, i32) {
    %c0_i32 = arith.constant 0 : i32
    %c0_i32_0 = arith.constant 0 : i32
    return %arg0, %c0_i32 : i32, i32
  }
  func.func @transform_4(%arg0: i32) -> (i32, i32) {
    %c0_i32 = arith.constant 0 : i32
    %c0_i32_0 = arith.constant 0 : i32
    return %arg0, %c0_i32 : i32, i32
  }
}

module attributes {stable_mosaic.version = 11 : i64} {
  func.func @_ln_lmhead_kernel(%arg0: i32, %arg1: i32, %arg2: memref<32x256xf32, #tpu.memory_space<vmem>>, %arg3: memref<1x256xf32, #tpu.memory_space<vmem>>, %arg4: memref<1x256xf32, #tpu.memory_space<vmem>>, %arg5: memref<256x256xbf16, #tpu.memory_space<vmem>>, %arg6: memref<32x256xf32, #tpu.memory_space<vmem>>) attributes {dimension_semantics = [#tpu.dimension_semantics<parallel>, #tpu.dimension_semantics<parallel>], iteration_bounds = array<i64: 2, 2>, scalar_prefetch = 0 : i64, scratch_operands = 0 : i64, tpu.core_type = #tpu.core_type<tc>, window_params = [{transform_indices = @transform_0, window_bounds = array<i64: 32, 256>}, {pipeline_mode = #tpu.pipeline_mode<synchronous>, transform_indices = @transform_1, window_bounds = array<i64: 1, 256>}, {pipeline_mode = #tpu.pipeline_mode<synchronous>, transform_indices = @transform_2, window_bounds = array<i64: 1, 256>}, {transform_indices = @transform_3, window_bounds = array<i64: 256, 256>}, {transform_indices = @transform_4, window_bounds = array<i64: 32, 256>}]} {
    %c0 = arith.constant 0 : index
    %c0_0 = arith.constant 0 : index
    %0 = vector.load %arg2[%c0, %c0_0] : memref<32x256xf32, #tpu.memory_space<vmem>>, vector<32x256xf32>
    %cst = arith.constant dense<0.000000e+00> : vector<32xf32>
    %1 = vector.multi_reduction <add>, %0, %cst [1] : vector<32x256xf32> to vector<32xf32>
    %2 = vector.shape_cast %1 : vector<32xf32> to vector<32x1xf32>
    %cst_1 = arith.constant 2.560000e+02 : f32
    %3 = vector.broadcast %cst_1 : f32 to vector<32x1xf32>
    %4 = arith.divf %2, %3 : vector<32x1xf32>
    %5 = vector.broadcast %4 : vector<32x1xf32> to vector<32x256xf32>
    %6 = arith.subf %0, %5 : vector<32x256xf32>
    %7 = arith.mulf %6, %6 : vector<32x256xf32>
    %cst_2 = arith.constant dense<0.000000e+00> : vector<32xf32>
    %8 = vector.multi_reduction <add>, %7, %cst_2 [1] : vector<32x256xf32> to vector<32xf32>
    %9 = vector.shape_cast %8 : vector<32xf32> to vector<32x1xf32>
    %cst_3 = arith.constant 2.560000e+02 : f32
    %10 = vector.broadcast %cst_3 : f32 to vector<32x1xf32>
    %11 = arith.divf %9, %10 : vector<32x1xf32>
    %12 = vector.broadcast %4 : vector<32x1xf32> to vector<32x256xf32>
    %13 = arith.subf %0, %12 : vector<32x256xf32>
    %cst_4 = arith.constant 9.99999974E-6 : f32
    %14 = vector.broadcast %cst_4 : f32 to vector<32x1xf32>
    %15 = arith.addf %11, %14 : vector<32x1xf32>
    %16 = math.rsqrt %15 : vector<32x1xf32>
    %17 = vector.broadcast %16 : vector<32x1xf32> to vector<32x256xf32>
    %18 = arith.mulf %13, %17 : vector<32x256xf32>
    %c0_5 = arith.constant 0 : index
    %c0_6 = arith.constant 0 : index
    %19 = vector.load %arg3[%c0_5, %c0_6] : memref<1x256xf32, #tpu.memory_space<vmem>>, vector<1x256xf32>
    %20 = vector.broadcast %19 : vector<1x256xf32> to vector<32x256xf32>
    %21 = arith.mulf %18, %20 : vector<32x256xf32>
    %c0_7 = arith.constant 0 : index
    %c0_8 = arith.constant 0 : index
    %22 = vector.load %arg4[%c0_7, %c0_8] : memref<1x256xf32, #tpu.memory_space<vmem>>, vector<1x256xf32>
    %23 = vector.broadcast %22 : vector<1x256xf32> to vector<32x256xf32>
    %24 = arith.addf %21, %23 : vector<32x256xf32>
    %25 = arith.truncf %24 : vector<32x256xf32> to vector<32x256xbf16>
    %c0_9 = arith.constant 0 : index
    %c0_10 = arith.constant 0 : index
    %26 = vector.load %arg5[%c0_9, %c0_10] : memref<256x256xbf16, #tpu.memory_space<vmem>>, vector<256x256xbf16>
    %cst_11 = arith.constant dense<0.000000e+00> : vector<32x256xf32>
    %27 = tpu.matmul %25, %26, %cst_11 {dimension_numbers = #tpu.dot_dimension_numbers<[1], [0], [0], [1], [0, 0, 1, 1], [], []>} : vector<32x256xbf16>, vector<256x256xbf16>, vector<32x256xf32> -> vector<32x256xf32>
    %c0_12 = arith.constant 0 : index
    %c0_13 = arith.constant 0 : index
    %28 = vector.load %arg6[%c0_12, %c0_13] : memref<32x256xf32, #tpu.memory_space<vmem>>, vector<32x256xf32>
    tpu.vector_store %arg6[%c0_12, %c0_13], %27 {strides = array<i32>} : memref<32x256xf32, #tpu.memory_space<vmem>>, vector<32x256xf32>,
    return
  }
  func.func @transform_0(%arg0: i32, %arg1: i32) -> (i32, i32) {
    %c0_i32 = arith.constant 0 : i32
    %c0_i32_0 = arith.constant 0 : i32
    return %arg0, %c0_i32 : i32, i32
  }
  func.func @transform_1(%arg0: i32, %arg1: i32) -> (i32, i32) {
    %c0_i32 = arith.constant 0 : i32
    %c0_i32_0 = arith.constant 0 : i32
    %c0_i32_1 = arith.constant 0 : i32
    return %c0_i32, %c0_i32_0 : i32, i32
  }
  func.func @transform_2(%arg0: i32, %arg1: i32) -> (i32, i32) {
    %c0_i32 = arith.constant 0 : i32
    %c0_i32_0 = arith.constant 0 : i32
    %c0_i32_1 = arith.constant 0 : i32
    return %c0_i32, %c0_i32_0 : i32, i32
  }
  func.func @transform_3(%arg0: i32, %arg1: i32) -> (i32, i32) {
    %c0_i32 = arith.constant 0 : i32
    %c0_i32_0 = arith.constant 0 : i32
    return %c0_i32, %arg1 : i32, i32
  }
  func.func @transform_4(%arg0: i32, %arg1: i32) -> (i32, i32) {
    %c0_i32 = arith.constant 0 : i32
    return %arg0, %arg1 : i32, i32
  }
}

</mosaic_0001>

<llo_original>
// kernel: gpt_forward.10
$region0: #{gpt_forward.10}
  #allocation0 [shape = 'u32[]', space=smem, size = 0x4, offset = 0x4, fixed_abs, tag = 'smem constant byte address 0x4 - core index']
  #allocation1 [shape = 'u32[144,128]{1,0:T(1,128)}', space=vmem, size = 0x12000, scoped, tag = 'internal scratch']
  %s0 = inlined_call_operand.vmem [shape: bf16[64,768], index: 0, kind: input, shape index: {}]
  %s1 = inlined_call_operand.vmem [shape: bf16[256,256], index: 1, kind: input, shape index: {}]
  %s2 = inlined_call_operand.vmem [shape: f32[1,256], index: 2, kind: input, shape index: {}]
  %s3 = inlined_call_operand.vmem [shape: f32[64,256], index: 3, kind: input, shape index: {}]
  %s4 = inlined_call_operand.vmem [shape: f32[64,256], index: 4, kind: output, shape index: {}]
  %s5 = sld [smem:[#allocation0]]
  $region49: #{gpt_forward.10} parent=0
    _
  %s7 = ssub.s32 1, %s5
  %s8 = scalar_select 0, %s7, %s5
  loop: start=0, step=1, limit=4
  $region2: #{gpt_forward.10} parent=0 // loop_pre_header
    _
  $region3: #{gpt_forward.10} parent=0 // loop_header
    %s10 = sphi 0, %s14
    %p11 = scmp.ge.s32.totalorder %s10, 4
    %s20 = sphi 0, %s22
    %s23 = sphi 0, %s20
    %s24 = sphi 0, %s23
    %s40 = sphi 0, %s24
    %s44 = sphi 0, %s44
    %s46 = sphi 0, %s44
    %s47 = sphi 0, %s46
    %s61 = sphi 0, %s47
    %s65 = sphi 0, %s65
    %s67 = sphi 0, %s65
    %s68 = sphi 0, %s67
    %s82 = sphi 0, %s68
    %s88 = sphi 0, %s90
    %s91 = sphi 0, %s88
    %s92 = sphi 0, %s91
    %s108 = sphi 0, %s92
    %s114 = sphi 0, %s116
    %s117 = sphi 0, %s114
    %s118 = sphi 0, %s117
    %s134 = sphi 0, %s118
  $region4: #{gpt_forward.10} parent=0 // loop_header_branch
    %13 = sbr.rel (%p11) target = $region8
  $region5: #{gpt_forward.10} parent=0 // loop_body
    %s15 = ssub.s32 %s10, 1
    %s16 = ssub.s32 %s10, 2
    %s17 = sadd.s32 %s10, 1
    %s18 = ssub.s32 %s10, %s17
    %p19 = scmp.eq.s32.totalorder %s18, 0
    %s21 = sadd.s32 %s20, 1
    %s22 = scalar_select %p19, %s20, %s21
    %p25 = pneg %p19
    %p26 = scmp.eq.s32.totalorder %s10, 1
    %p27 = por %p25, %p26
    %p28 = scmp.ne.s32.totalorder %s20, %s23
    %p29 = scmp.eq.s32.totalorder %s10, 0
    %p30 = por %p28, %p29
    %p31 = scmp.ne.s32.totalorder %s20, %s23
    %p32 = scmp.eq.s32.totalorder %s15, 1
    %p33 = por %p31, %p32
    %p34 = scmp.ne.s32.totalorder %s23, %s24
    %p35 = scmp.eq.s32.totalorder %s15, 0
    %p36 = por %p34, %p35
    %p37 = scmp.ne.s32.totalorder %s23, %s24
    %p38 = scmp.eq.s32.totalorder %s16, 1
    %p39 = por %p37, %p38
    %p41 = scmp.ne.s32.totalorder %s24, %s40
    %p42 = scmp.eq.s32.totalorder %s16, 0
    %p43 = por %p41, %p42
    %s45 = sadd.s32 %s44, 1
    %p48 = scmp.eq.s32.totalorder %s10, 1
    %p49 = scmp.ne.s32.totalorder %s44, %s46
    %p50 = scmp.eq.s32.totalorder %s10, 0
    %p51 = por %p49, %p50
    %p52 = scmp.ne.s32.totalorder %s44, %s46
    %p53 = scmp.eq.s32.totalorder %s15, 1
    %p54 = por %p52, %p53
    %p55 = scmp.ne.s32.totalorder %s46, %s47
    %p56 = scmp.eq.s32.totalorder %s15, 0
    %p57 = por %p55, %p56
    %p58 = scmp.ne.s32.totalorder %s46, %s47
    %p59 = scmp.eq.s32.totalorder %s16, 1
    %p60 = por %p58, %p59
    %p62 = scmp.ne.s32.totalorder %s47, %s61
    %p63 = scmp.eq.s32.totalorder %s16, 0
    %p64 = por %p62, %p63
    %s66 = sadd.s32 %s65, 1
    %p69 = scmp.eq.s32.totalorder %s10, 1
    %p70 = scmp.ne.s32.totalorder %s65, %s67
    %p71 = scmp.eq.s32.totalorder %s10, 0
    %p72 = por %p70, %p71
    %p73 = scmp.ne.s32.totalorder %s65, %s67
    %p74 = scmp.eq.s32.totalorder %s15, 1
    %p75 = por %p73, %p74
    %p76 = scmp.ne.s32.totalorder %s67, %s68
    %p77 = scmp.eq.s32.totalorder %s15, 0
    %p78 = por %p76, %p77
    %p79 = scmp.ne.s32.totalorder %s67, %s68
    %p80 = scmp.eq.s32.totalorder %s16, 1
    %p81 = por %p79, %p80
    %p83 = scmp.ne.s32.totalorder %s68, %s82
    %p84 = scmp.eq.s32.totalorder %s16, 0
    %p85 = por %p83, %p84
    %s86 = ssub.s32 %s10, %s17
    %p87 = scmp.eq.s32.totalorder %s86, 0
    %s89 = sadd.s32 %s88, 1
    %s90 = scalar_select %p87, %s88, %s89
    %p93 = pneg %p87
    %p94 = scmp.eq.s32.totalorder %s10, 1
    %p95 = por %p93, %p94
    %p96 = scmp.ne.s32.totalorder %s88, %s91
    %p97 = scmp.eq.s32.totalorder %s10, 0
    %p98 = por %p96, %p97
    %p99 = scmp.ne.s32.totalorder %s88, %s91
    %p100 = scmp.eq.s32.totalorder %s15, 1
    %p101 = por %p99, %p100
    %p102 = scmp.ne.s32.totalorder %s91, %s92
    %p103 = scmp.eq.s32.totalorder %s15, 0
    %p104 = por %p102, %p103
    %p105 = scmp.ne.s32.totalorder %s91, %s92
    %p106 = scmp.eq.s32.totalorder %s16, 1
    %p107 = por %p105, %p106
    %p109 = scmp.ne.s32.totalorder %s92, %s108
    %p110 = scmp.eq.s32.totalorder %s16, 0
    %p111 = por %p109, %p110
    %s112 = ssub.s32 %s10, %s17
    %p113 = scmp.eq.s32.totalorder %s112, 0
    %s115 = sadd.s32 %s114, 1
    %s116 = scalar_select %p113, %s114, %s115
    %p119 = pneg %p113
    %p120 = scmp.eq.s32.totalorder %s10, 1
    %p121 = por %p119, %p120
    %p122 = scmp.ne.s32.totalorder %s114, %s117
    %p123 = scmp.eq.s32.totalorder %s10, 0
    %p124 = por %p122, %p123
    %p125 = scmp.ne.s32.totalorder %s114, %s117
    %p126 = scmp.eq.s32.totalorder %s15, 1
    %p127 = por %p125, %p126
    %p128 = scmp.ne.s32.totalorder %s117, %s118
    %p129 = scmp.eq.s32.totalorder %s15, 0
    %p130 = por %p128, %p129
    %p131 = scmp.ne.s32.totalorder %s117, %s118
    %p132 = scmp.eq.s32.totalorder %s16, 1
    %p133 = por %p131, %p132
    %p135 = scmp.ne.s32.totalorder %s118, %s134
    %p136 = scmp.eq.s32.totalorder %s16, 0
    %p137 = por %p135, %p136
    %p138 = scmp.le.s32.totalorder 1, %s10
    %p139 = scmp.lt.s32.totalorder %s10, 3
    %p140 = pnand %p138, %p139
    %p141 = pneg %p140
    // Predicated region
    $region9: #{gpt_forward.10} parent=5 // pred_check
      _
    $region10: #{gpt_forward.10} parent=5 // pred_check_branch
      %143 = sbr.rel (%p140) target = $region12
    $region11: #{gpt_forward.10} parent=5 // pred_region
      %s144 = ssub.s32 %s10, 1
      // Predicated region
      $region13: #{gpt_forward.10} parent=11 // pred_check
        %p145 = pneg %p57
      $region14: #{gpt_forward.10} parent=11 // pred_check_branch
        %147 = sbr.rel (%p145) target = $region16
      $region15: #{gpt_forward.10} parent=11 // pred_region
        _
      $region16: #{gpt_forward.10} parent=11 // pred_fallthru
        _
      // Predicated region
      $region17: #{gpt_forward.10} parent=11 // pred_check
        %p148 = pneg %p78
      $region18: #{gpt_forward.10} parent=11 // pred_check_branch
        %150 = sbr.rel (%p148) target = $region20
      $region19: #{gpt_forward.10} parent=11 // pred_region
        _
      $region20: #{gpt_forward.10} parent=11 // pred_fallthru
        _
    $region12: #{gpt_forward.10} parent=5 // pred_fallthru
      _
    %p151 = scmp.lt.s32.totalorder %s10, 2
    // Predicated region
    $region21: #{gpt_forward.10} parent=5 // pred_check
      %p152 = pneg %p151
    $region22: #{gpt_forward.10} parent=5 // pred_check_branch
      %154 = sbr.rel (%p152) target = $region24
    $region23: #{gpt_forward.10} parent=5 // pred_region
      // Predicated region
      $region25: #{gpt_forward.10} parent=23 // pred_check
        %p155 = pneg %p30
      $region26: #{gpt_forward.10} parent=23 // pred_check_branch
        %157 = sbr.rel (%p155) target = $region28
      $region27: #{gpt_forward.10} parent=23 // pred_region
        %s158 = smul.u32 4, %s10
        %p159 = scmp.lt.s32.totalorder %s158, 7
        %s160 = scalar_select %p159, %s158, 7
        %s161 = smul.addr %s160, 6
        %s162 = smul.addr %s161, 4
        %s163 = scalar_lea.vmem %s0, %s162
        %s164 = smul.u32 4, %s10
      $region28: #{gpt_forward.10} parent=23 // pred_fallthru
        _
      // Predicated region
      $region29: #{gpt_forward.10} parent=23 // pred_check
        %p165 = pneg %p98
      $region30: #{gpt_forward.10} parent=23 // pred_check_branch
        %167 = sbr.rel (%p165) target = $region32
      $region31: #{gpt_forward.10} parent=23 // pred_region
        %s168 = smul.u32 4, %s10
        %p169 = scmp.lt.s32.totalorder %s168, 7
        %s170 = scalar_select %p169, %s168, 7
        %s171 = smul.addr %s170, 2
        %s172 = smul.addr %s171, 8
        %s173 = scalar_lea.vmem %s3, %s172
        %s174 = smul.u32 4, %s10
      $region32: #{gpt_forward.10} parent=23 // pred_fallthru
        _
    $region24: #{gpt_forward.10} parent=5 // pred_fallthru
      _
    %p175 = scmp.le.s32.totalorder 1, %s10
    %p176 = scmp.lt.s32.totalorder %s10, 3
    %p177 = pnand %p175, %p176
    %p178 = pneg %p177
    // Predicated region
    $region33: #{gpt_forward.10} parent=5 // pred_check
      _
    $region34: #{gpt_forward.10} parent=5 // pred_check_branch
      %180 = sbr.rel (%p177) target = $region36
    $region35: #{gpt_forward.10} parent=5 // pred_region
      %s181 = ssub.s32 %s10, 1
      %s182 = smul.u32 4, %s15
      %p183 = scmp.lt.s32.totalorder %s182, 7
      %s184 = scalar_select %p183, %s182, 7
      %s185 = smul.addr %s184, 6
      %s186 = smul.addr %s185, 4
      %s187 = scalar_lea.vmem %s0, %s186
      %p188 = pneg %p36
      %p189 = pneg %p33
      %p190 = pneg %p57
      %p191 = pneg %p54
      %p192 = pneg %p78
      %p193 = pneg %p75
      %s194 = smul.u32 4, %s15
      %p195 = scmp.lt.s32.totalorder %s194, 7
      %s196 = scalar_select %p195, %s194, 7
      %s197 = smul.addr %s196, 2
      %s198 = smul.addr %s197, 8
      %s199 = scalar_lea.vmem %s3, %s198
      %p200 = pneg %p104
      %p201 = pneg %p101
      %p202 = pneg %p130
      %p203 = pneg %p127
      %s204 = smul.u32 4, %s15
      %p205 = scmp.lt.s32.totalorder %s204, 7
      %s206 = scalar_select %p205, %s204, 7
      %s207 = smul.addr %s206, 2
      %s208 = smul.addr %s207, 8
      %s209 = scalar_lea.vmem %s4, %s208
      %s210 = smul.u32 4, %s15
      %p211 = scmp.lt.s32.totalorder %s210, 7
      %s212 = scalar_select %p211, %s210, 7
      %s213 = smul.addr %s212, 6
      %s214 = smul.addr %s213, 4
      %s215 = scalar_lea.vmem %s0, %s214
      %s216 = smul.u32 4, %s15
      %s217 = smul.u32 4, %s15
      %p218 = scmp.lt.s32.totalorder %s217, 7
      %s219 = scalar_select %p218, %s217, 7
      %s220 = smul.addr %s219, 2
      %s221 = smul.addr %s220, 8
      %s222 = scalar_lea.vmem %s3, %s221
      %s223 = smul.u32 4, %s15
      %s224 = smul.u32 4, %s15
      %p225 = scmp.lt.s32.totalorder %s224, 7
      %s226 = scalar_select %p225, %s224, 7
      %s227 = smul.addr %s226, 2
      %s228 = smul.addr %s227, 8
      %s229 = scalar_lea.vmem %s4, %s228
      %s230 = smul.u32 4, %s15
      %v232 = vlaneseq
      %v233 = vshrl.u32 %v232, 7
      %v234 = vadd.s32 %v233, 8
      %v235 = vadd.s32 %v233, 16
      %v236 = vadd.s32 %v233, 24
      %v237 = vlaneseq
      %v238 = vand.u32 %v237, 127
      %vm239 = vcmp.le.s32.totalorder %v238, %v233
      %vm240 = vcmp.le.s32.totalorder %v238, %v234
      %vm241 = vcmp.le.s32.totalorder %v238, %v235
      %vm242 = vcmp.le.s32.totalorder %v238, %v236
      %v243 = vsel %vm239, 0.0, -1e+30
      %v244 = vsel %vm240, 0.0, -1e+30
      %v245 = vsel %vm241, 0.0, -1e+30
      %v246 = vsel %vm242, 0.0, -1e+30
      %v247 = vld [vmem:[%s215] sm:$0xf]
      %v248 = vld [vmem:[%s215 + $0x18] sm:$0xf]
      %v249 = vld [vmem:[%s215 + $0x30] sm:$0xf]
      %v250 = vld [vmem:[%s215 + $0x48] sm:$0xf]
      %v251 = vld [vmem:[%s215 + $0x8] sm:$0xf]
      %v252 = vld [vmem:[%s215 + $0x20] sm:$0xf]
      %v253 = vld [vmem:[%s215 + $0x38] sm:$0xf]
      %v254 = vld [vmem:[%s215 + $0x50] sm:$0xf]
      %v255 = vld [vmem:[%s215 + $0x10] sm:$0xf]
      %v256 = vld [vmem:[%s215 + $0x28] sm:$0xf]
      %v257 = vld [vmem:[%s215 + $0x40] sm:$0xf]
      %v258 = vld [vmem:[%s215 + $0x58] sm:$0xf]
      %v263 = vunpack.c.l.b16 %v247
      %v264 = vunpack.c.l.b16 %v248
      %v265 = vunpack.c.l.b16 %v249
      %v266 = vunpack.c.l.b16 %v250
      %v267 = vpack.c.b16 %v264, %v263
      %v268 = vpack.c.b16 %v266, %v265
      %v275 = vunpack.c.l.b16 %v251
      %v276 = vunpack.c.l.b16 %v252
      %v277 = vunpack.c.l.b16 %v253
      %v278 = vunpack.c.l.b16 %v254
      %v279 = vpack.c.b16 %v276, %v275
      %v280 = vpack.c.b16 %v278, %v277
      %283 = vmatprep.subr.bf16.mxu0 0
      %284 = vmatpush1.bf16.xpose.msra.mxu0 %v279
      %285 = vmatprep.subr.bf16.mxu0 0
      %286 = vmatpush1.bf16.xpose.msra.mxu0 %v280
      %287 = vmatprep.subr.bf16.mxu0 0
      %288 = vmatpush1.bf16.xpose.msra.mxu0 0
      %289 = vmatprep.subr.bf16.mxu0 0
      %290 = vmatpush1.bf16.xpose.msra.mxu0 0
      %291 = vmatprep.subr.bf16.mxu0 0
      %292 = vmatpush1.bf16.xpose.msra.mxu0 0
      %293 = vmatprep.subr.bf16.mxu0 0
      %294 = vmatpush1.bf16.xpose.msra.mxu0 0
      %295 = vmatprep.subr.bf16.mxu0 0
      %296 = vmatpush1.bf16.xpose.msra.mxu0 0
      %297 = vmatprep.subr.bf16.mxu0 0
      %298 = vmatpush1.bf16.xpose.msra.mxu0 0
      %299 = vmatprep.subr.bf16.mxu0 0
      %300 = vmatpush1.bf16.xpose.msra.mxu0 0
      %301 = vmatprep.subr.bf16.mxu0 0
      %302 = vmatpush1.bf16.xpose.msra.mxu0 0
      %303 = vmatprep.subr.bf16.mxu0 0
      %304 = vmatpush1.bf16.xpose.msra.mxu0 0
      %305 = vmatprep.subr.bf16.mxu0 0
      %306 = vmatpush1.bf16.xpose.msra.mxu0 0
      %307 = vmatprep.subr.bf16.mxu0 0
      %308 = vmatpush1.bf16.xpose.msra.mxu0 0
      %309 = vmatprep.subr.bf16.mxu0 0
      %310 = vmatpush1.bf16.xpose.msra.mxu0 0
      %311 = vmatprep.subr.bf16.mxu0 0
      %312 = vmatpush1.bf16.xpose.msra.mxu0 0
      %313 = vmatprep.subr.bf16.mxu0 0
      %314 = vmatpush1.bf16.xpose.msra.mxu0 0
      %315 = vmatprep.mubr.bf16.mxu0 0
      %316 = vmatmul.mubr.bf16.gmra.mrb[0].mxu0 %v267
      %v317 = vpop.f32.mrb[0].mxu0
      %v318 = vadd.f32 0.0, %v317
      %v319 = vpop.f32.mrb[0].mxu0
      %v320 = vpop.f32.mrb[0].mxu0
      %v321 = vadd.f32 0.0, %v320
      %v322 = vpop.f32.mrb[0].mxu0
      %323 = vmatprep.mubr.bf16.mxu0 0
      %324 = vmatmul.mubr.bf16.gmra.mrb[0].mxu0 %v268
      %v325 = vpop.f32.mrb[0].mxu0
      %v326 = vadd.f32 0.0, %v325
      %v327 = vpop.f32.mrb[0].mxu0
      %v328 = vpop.f32.mrb[0].mxu0
      %v329 = vadd.f32 0.0, %v328
      %v330 = vpop.f32.mrb[0].mxu0
      %331 = vdwg.mxu0
      %v332 = vmul.f32 %v318, 0.088388346
      %v333 = vmul.f32 %v321, 0.088388346
      %v334 = vmul.f32 %v326, 0.088388346
      %v335 = vmul.f32 %v329, 0.088388346
      %v336 = vadd.f32 %v332, %v243
      %v337 = vadd.f32 %v333, %v244
      %v338 = vadd.f32 %v334, %v245
      %v339 = vadd.f32 %v335, %v246
      %vm340 = vcmask 261120
      %v341 = vsel %vm340, %v336, -inf
      %342 = vmax.xlane.f32.xlu0 %v341
      %v343 = vpop.xlane.xlu0 %342
      %v344 = vsel %vm340, %v337, -inf
      %345 = vmax.xlane.f32.xlu0 %v344
      %v346 = vpop.xlane.xlu0 %345
      %v347 = vsel %vm340, %v338, -inf
      %348 = vmax.xlane.f32.xlu0 %v347
      %v349 = vpop.xlane.xlu0 %348
      %v350 = vsel %vm340, %v339, -inf
      %351 = vmax.xlane.f32.xlu0 %v350
      %v352 = vpop.xlane.xlu0 %351
      %v353 = vsub.f32 %v336, %v343
      %v354 = vsub.f32 %v337, %v346
      %v355 = vsub.f32 %v338, %v349
      %v356 = vsub.f32 %v339, %v352
      %v357 = vmul.f32 %v353, 1.442695
      %v358 = vpow.pop %v357
      %v359 = vmul.f32 %v354, 1.442695
      %v360 = vpow.pop %v359
      %v361 = vmul.f32 %v355, 1.442695
      %v362 = vpow.pop %v361
      %v363 = vmul.f32 %v356, 1.442695
      %v364 = vpow.pop %v363
      %v365 = vsel %vm340, %v358, 0.0
      %366 = vadd.xlane.f32.xlu0 %v365
      %v367 = vpop.xlane.xlu0 %366
      %v368 = vsel %vm340, %v360, 0.0
      %369 = vadd.xlane.f32.xlu0 %v368
      %v370 = vpop.xlane.xlu0 %369
      %v371 = vsel %vm340, %v362, 0.0
      %372 = vadd.xlane.f32.xlu0 %v371
      %v373 = vpop.xlane.xlu0 %372
      %v374 = vsel %vm340, %v364, 0.0
      %375 = vadd.xlane.f32.xlu0 %v374
      %v376 = vpop.xlane.xlu0 %375
      %v377 = vrcp.pop %v367
      %v378 = vrcp.pop %v370
      %v379 = vrcp.pop %v373
      %v380 = vrcp.pop %v376
      %v381 = vmul.f32 %v358, %v377
      %v382 = vmul.f32 %v360, %v378
      %v383 = vmul.f32 %v362, %v379
      %v384 = vmul.f32 %v364, %v380
      %v385 = vpack.c.bf16 %v382, %v381
      %v386 = vpack.c.bf16 %v384, %v383
      %v391 = vunpack.c.l.b16 %v255
      %v392 = vunpack.c.l.b16 %v256
      %v393 = vunpack.c.l.b16 %v257
      %v394 = vunpack.c.l.b16 %v258
      %v395 = vpack.c.b16 %v392, %v391
      %v396 = vpack.c.b16 %v394, %v393
      %v400 = vsel %vm340, %v385, 0
      %v403 = vsel %vm340, %v386, 0
      %405 = vmatprep.subr.bf16.mxu0 0
      %406 = vmatpush1.bf16.msra.mxu0 %v395
      %407 = vmatprep.subr.bf16.mxu0 0
      %408 = vmatpush1.bf16.msra.mxu0 %v396
      %409 = vmatprep.subr.bf16.mxu0 0
      %410 = vmatpush1.bf16.msra.mxu0 0
      %411 = vmatprep.subr.bf16.mxu0 0
      %412 = vmatpush1.bf16.msra.mxu0 0
      %413 = vmatprep.subr.bf16.mxu0 0
      %414 = vmatpush1.bf16.msra.mxu0 0
      %415 = vmatprep.subr.bf16.mxu0 0
      %416 = vmatpush1.bf16.msra.mxu0 0
      %417 = vmatprep.subr.bf16.mxu0 0
      %418 = vmatpush1.bf16.msra.mxu0 0
      %419 = vmatprep.subr.bf16.mxu0 0
      %420 = vmatpush1.bf16.msra.mxu0 0
      %421 = vmatprep.subr.bf16.mxu0 0
      %422 = vmatpush1.bf16.msra.mxu0 0
      %423 = vmatprep.subr.bf16.mxu0 0
      %424 = vmatpush1.bf16.msra.mxu0 0
      %425 = vmatprep.subr.bf16.mxu0 0
      %426 = vmatpush1.bf16.msra.mxu0 0
      %427 = vmatprep.subr.bf16.mxu0 0
      %428 = vmatpush1.bf16.msra.mxu0 0
      %429 = vmatprep.subr.bf16.mxu0 0
      %430 = vmatpush1.bf16.msra.mxu0 0
      %431 = vmatprep.subr.bf16.mxu0 0
      %432 = vmatpush1.bf16.msra.mxu0 0
      %433 = vmatprep.subr.bf16.mxu0 0
      %434 = vmatpush1.bf16.msra.mxu0 0
      %435 = vmatprep.subr.bf16.mxu0 0
      %436 = vmatpush1.bf16.msra.mxu0 0
      %437 = vmatprep.mubr.bf16.mxu0 0
      %438 = vmatmul.mubr.bf16.gmra.mrb[0].mxu0 %v400
      %v439 = vpop.f32.mrb[0].mxu0
      %v440 = vadd.f32 0.0, %v439
      %v441 = vpop.f32.mrb[0].mxu0
      %v442 = vpop.f32.mrb[0].mxu0
      %v443 = vadd.f32 0.0, %v442
      %v444 = vpop.f32.mrb[0].mxu0
      %445 = vmatprep.mubr.bf16.mxu0 0
      %446 = vmatmul.mubr.bf16.gmra.mrb[0].mxu0 %v403
      %v447 = vpop.f32.mrb[0].mxu0
      %v448 = vadd.f32 0.0, %v447
      %v449 = vpop.f32.mrb[0].mxu0
      %v450 = vpop.f32.mrb[0].mxu0
      %v451 = vadd.f32 0.0, %v450
      %v452 = vpop.f32.mrb[0].mxu0
      %453 = vdwg.mxu0
      %v454 = vld [vmem:[%s215 + $0x4] sm:$0xf]
      %v455 = vld [vmem:[%s215 + $0x1c] sm:$0xf]
      %v456 = vld [vmem:[%s215 + $0x34] sm:$0xf]
      %v457 = vld [vmem:[%s215 + $0x4c] sm:$0xf]
      %v458 = vld [vmem:[%s215 + $0xc] sm:$0xf]
      %v459 = vld [vmem:[%s215 + $0x24] sm:$0xf]
      %v460 = vld [vmem:[%s215 + $0x3c] sm:$0xf]
      %v461 = vld [vmem:[%s215 + $0x54] sm:$0xf]
      %v462 = vld [vmem:[%s215 + $0x14] sm:$0xf]
      %v463 = vld [vmem:[%s215 + $0x2c] sm:$0xf]
      %v464 = vld [vmem:[%s215 + $0x44] sm:$0xf]
      %v465 = vld [vmem:[%s215 + $0x5c] sm:$0xf]
      %v470 = vunpack.c.l.b16 %v454
      %v471 = vunpack.c.l.b16 %v455
      %v472 = vunpack.c.l.b16 %v456
      %v473 = vunpack.c.l.b16 %v457
      %v474 = vpack.c.b16 %v471, %v470
      %v475 = vpack.c.b16 %v473, %v472
      %v482 = vunpack.c.l.b16 %v458
      %v483 = vunpack.c.l.b16 %v459
      %v484 = vunpack.c.l.b16 %v460
      %v485 = vunpack.c.l.b16 %v461
      %v486 = vpack.c.b16 %v483, %v482
      %v487 = vpack.c.b16 %v485, %v484
      %490 = vmatprep.subr.bf16.mxu0 0
      %491 = vmatpush1.bf16.xpose.msra.mxu0 %v486
      %492 = vmatprep.subr.bf16.mxu0 0
      %493 = vmatpush1.bf16.xpose.msra.mxu0 %v487
      %494 = vmatprep.subr.bf16.mxu0 0
      %495 = vmatpush1.bf16.xpose.msra.mxu0 0
      %496 = vmatprep.subr.bf16.mxu0 0
      %497 = vmatpush1.bf16.xpose.msra.mxu0 0
      %498 = vmatprep.subr.bf16.mxu0 0
      %499 = vmatpush1.bf16.xpose.msra.mxu0 0
      %500 = vmatprep.subr.bf16.mxu0 0
      %501 = vmatpush1.bf16.xpose.msra.mxu0 0
      %502 = vmatprep.subr.bf16.mxu0 0
      %503 = vmatpush1.bf16.xpose.msra.mxu0 0
      %504 = vmatprep.subr.bf16.mxu0 0
      %505 = vmatpush1.bf16.xpose.msra.mxu0 0
      %506 = vmatprep.subr.bf16.mxu0 0
      %507 = vmatpush1.bf16.xpose.msra.mxu0 0
      %508 = vmatprep.subr.bf16.mxu0 0
      %509 = vmatpush1.bf16.xpose.msra.mxu0 0
      %510 = vmatprep.subr.bf16.mxu0 0
      %511 = vmatpush1.bf16.xpose.msra.mxu0 0
      %512 = vmatprep.subr.bf16.mxu0 0
      %513 = vmatpush1.bf16.xpose.msra.mxu0 0
      %514 = vmatprep.subr.bf16.mxu0 0
      %515 = vmatpush1.bf16.xpose.msra.mxu0 0
      %516 = vmatprep.subr.bf16.mxu0 0
      %517 = vmatpush1.bf16.xpose.msra.mxu0 0
      %518 = vmatprep.subr.bf16.mxu0 0
      %519 = vmatpush1.bf16.xpose.msra.mxu0 0
      %520 = vmatprep.subr.bf16.mxu0 0
      %521 = vmatpush1.bf16.xpose.msra.mxu0 0
      %522 = vmatprep.mubr.bf16.mxu0 0
      %523 = vmatmul.mubr.bf16.gmra.mrb[0].mxu0 %v474
      %v524 = vpop.f32.mrb[0].mxu0
      %v525 = vadd.f32 0.0, %v524
      %v526 = vpop.f32.mrb[0].mxu0
      %v527 = vpop.f32.mrb[0].mxu0
      %v528 = vadd.f32 0.0, %v527
      %v529 = vpop.f32.mrb[0].mxu0
      %530 = vmatprep.mubr.bf16.mxu0 0
      %531 = vmatmul.mubr.bf16.gmra.mrb[0].mxu0 %v475
      %v532 = vpop.f32.mrb[0].mxu0
      %v533 = vadd.f32 0.0, %v532
      %v534 = vpop.f32.mrb[0].mxu0
      %v535 = vpop.f32.mrb[0].mxu0
      %v536 = vadd.f32 0.0, %v535
      %v537 = vpop.f32.mrb[0].mxu0
      %538 = vdwg.mxu0
      %v539 = vmul.f32 %v525, 0.088388346
      %v540 = vmul.f32 %v528, 0.088388346
      %v541 = vmul.f32 %v533, 0.088388346
      %v542 = vmul.f32 %v536, 0.088388346
      %v543 = vadd.f32 %v539, %v243
      %v544 = vadd.f32 %v540, %v244
      %v545 = vadd.f32 %v541, %v245
      %v546 = vadd.f32 %v542, %v246
      %v547 = vsel %vm340, %v543, -inf
      %548 = vmax.xlane.f32.xlu0 %v547
      %v549 = vpop.xlane.xlu0 %548
      %v550 = vsel %vm340, %v544, -inf
      %551 = vmax.xlane.f32.xlu0 %v550
      %v552 = vpop.xlane.xlu0 %551
      %v553 = vsel %vm340, %v545, -inf
      %554 = vmax.xlane.f32.xlu0 %v553
      %v555 = vpop.xlane.xlu0 %554
      %v556 = vsel %vm340, %v546, -inf
      %557 = vmax.xlane.f32.xlu0 %v556
      %v558 = vpop.xlane.xlu0 %557
      %v559 = vsub.f32 %v543, %v549
      %v560 = vsub.f32 %v544, %v552
      %v561 = vsub.f32 %v545, %v555
      %v562 = vsub.f32 %v546, %v558
      %v563 = vmul.f32 %v559, 1.442695
      %v564 = vpow.pop %v563
      %v565 = vmul.f32 %v560, 1.442695
      %v566 = vpow.pop %v565
      %v567 = vmul.f32 %v561, 1.442695
      %v568 = vpow.pop %v567
      %v569 = vmul.f32 %v562, 1.442695
      %v570 = vpow.pop %v569
      %v571 = vsel %vm340, %v564, 0.0
      %572 = vadd.xlane.f32.xlu0 %v571
      %v573 = vpop.xlane.xlu0 %572
      %v574 = vsel %vm340, %v566, 0.0
      %575 = vadd.xlane.f32.xlu0 %v574
      %v576 = vpop.xlane.xlu0 %575
      %v577 = vsel %vm340, %v568, 0.0
      %578 = vadd.xlane.f32.xlu0 %v577
      %v579 = vpop.xlane.xlu0 %578
      %v580 = vsel %vm340, %v570, 0.0
      %581 = vadd.xlane.f32.xlu0 %v580
      %v582 = vpop.xlane.xlu0 %581
      %v583 = vrcp.pop %v573
      %v584 = vrcp.pop %v576
      %v585 = vrcp.pop %v579
      %v586 = vrcp.pop %v582
      %v587 = vmul.f32 %v564, %v583
      %v588 = vmul.f32 %v566, %v584
      %v589 = vmul.f32 %v568, %v585
      %v590 = vmul.f32 %v570, %v586
      %v591 = vpack.c.bf16 %v588, %v587
      %v592 = vpack.c.bf16 %v590, %v589
      %v597 = vunpack.c.l.b16 %v462
      %v598 = vunpack.c.l.b16 %v463
      %v599 = vunpack.c.l.b16 %v464
      %v600 = vunpack.c.l.b16 %v465
      %v601 = vpack.c.b16 %v598, %v597
      %v602 = vpack.c.b16 %v600, %v599
      %v606 = vsel %vm340, %v591, 0
      %v609 = vsel %vm340, %v592, 0
      %611 = vmatprep.subr.bf16.mxu0 0
      %612 = vmatpush1.bf16.msra.mxu0 %v601
      %613 = vmatprep.subr.bf16.mxu0 0
      %614 = vmatpush1.bf16.msra.mxu0 %v602
      %615 = vmatprep.subr.bf16.mxu0 0
      %616 = vmatpush1.bf16.msra.mxu0 0
      %617 = vmatprep.subr.bf16.mxu0 0
      %618 = vmatpush1.bf16.msra.mxu0 0
      %619 = vmatprep.subr.bf16.mxu0 0
      %620 = vmatpush1.bf16.msra.mxu0 0
      %621 = vmatprep.subr.bf16.mxu0 0
      %622 = vmatpush1.bf16.msra.mxu0 0
      %623 = vmatprep.subr.bf16.mxu0 0
      %624 = vmatpush1.bf16.msra.mxu0 0
      %625 = vmatprep.subr.bf16.mxu0 0
      %626 = vmatpush1.bf16.msra.mxu0 0
      %627 = vmatprep.subr.bf16.mxu0 0
      %628 = vmatpush1.bf16.msra.mxu0 0
      %629 = vmatprep.subr.bf16.mxu0 0
      %630 = vmatpush1.bf16.msra.mxu0 0
      %631 = vmatprep.subr.bf16.mxu0 0
      %632 = vmatpush1.bf16.msra.mxu0 0
      %633 = vmatprep.subr.bf16.mxu0 0
      %634 = vmatpush1.bf16.msra.mxu0 0
      %635 = vmatprep.subr.bf16.mxu0 0
      %636 = vmatpush1.bf16.msra.mxu0 0
      %637 = vmatprep.subr.bf16.mxu0 0
      %638 = vmatpush1.bf16.msra.mxu0 0
      %639 = vmatprep.subr.bf16.mxu0 0
      %640 = vmatpush1.bf16.msra.mxu0 0
      %641 = vmatprep.subr.bf16.mxu0 0
      %642 = vmatpush1.bf16.msra.mxu0 0
      %643 = vmatprep.mubr.bf16.mxu0 0
      %644 = vmatmul.mubr.bf16.gmra.mrb[0].mxu0 %v606
      %v645 = vpop.f32.mrb[0].mxu0
      %v646 = vadd.f32 0.0, %v645
      %v647 = vpop.f32.mrb[0].mxu0
      %v648 = vpop.f32.mrb[0].mxu0
      %v649 = vadd.f32 0.0, %v648
      %v650 = vpop.f32.mrb[0].mxu0
      %651 = vmatprep.mubr.bf16.mxu0 0
      %652 = vmatmul.mubr.bf16.gmra.mrb[0].mxu0 %v609
      %v653 = vpop.f32.mrb[0].mxu0
      %v654 = vadd.f32 0.0, %v653
      %v655 = vpop.f32.mrb[0].mxu0
      %v656 = vpop.f32.mrb[0].mxu0
      %v657 = vadd.f32 0.0, %v656
      %v658 = vpop.f32.mrb[0].mxu0
      %659 = vdwg.mxu0
      %v660 = vpack.c.bf16 %v443, %v440
      %v661 = vpack.c.bf16 %v649, %v646
      %v662 = vpack.c.bf16 %v451, %v448
      %v663 = vpack.c.bf16 %v657, %v654
      %v664 = vld [vmem:[%s1] sm:$0xff]
      %v665 = vld [vmem:[%s1 + $0x8] sm:$0xff]
      %v666 = vld [vmem:[%s1 + $0x10] sm:$0xff]
      %v667 = vld [vmem:[%s1 + $0x18] sm:$0xff]
      %v668 = vld [vmem:[%s1 + $0x20] sm:$0xff]
      %v669 = vld [vmem:[%s1 + $0x28] sm:$0xff]
      %v670 = vld [vmem:[%s1 + $0x30] sm:$0xff]
      %v671 = vld [vmem:[%s1 + $0x38] sm:$0xff]
      %v672 = vld [vmem:[%s1 + $0x40] sm:$0xff]
      %v673 = vld [vmem:[%s1 + $0x48] sm:$0xff]
      %v674 = vld [vmem:[%s1 + $0x50] sm:$0xff]
      %v675 = vld [vmem:[%s1 + $0x58] sm:$0xff]
      %v676 = vld [vmem:[%s1 + $0x60] sm:$0xff]
      %v677 = vld [vmem:[%s1 + $0x68] sm:$0xff]
      %v678 = vld [vmem:[%s1 + $0x70] sm:$0xff]
      %v679 = vld [vmem:[%s1 + $0x78] sm:$0xff]
      %v680 = vld [vmem:[%s1 + $0x80] sm:$0xff]
      %v681 = vld [vmem:[%s1 + $0x88] sm:$0xff]
      %v682 = vld [vmem:[%s1 + $0x90] sm:$0xff]
      %v683 = vld [vmem:[%s1 + $0x98] sm:$0xff]
      %v684 = vld [vmem:[%s1 + $0xa0] sm:$0xff]
      %v685 = vld [vmem:[%s1 + $0xa8] sm:$0xff]
      %v686 = vld [vmem:[%s1 + $0xb0] sm:$0xff]
      %v687 = vld [vmem:[%s1 + $0xb8] sm:$0xff]
      %v688 = vld [vmem:[%s1 + $0xc0] sm:$0xff]
      %v689 = vld [vmem:[%s1 + $0xc8] sm:$0xff]
      %v690 = vld [vmem:[%s1 + $0xd0] sm:$0xff]
      %v691 = vld [vmem:[%s1 + $0xd8] sm:$0xff]
      %v692 = vld [vmem:[%s1 + $0xe0] sm:$0xff]
      %v693 = vld [vmem:[%s1 + $0xe8] sm:$0xff]
      %v694 = vld [vmem:[%s1 + $0xf0] sm:$0xff]
      %v695 = vld [vmem:[%s1 + $0xf8] sm:$0xff]
      %v696 = vld [vmem:[%s2] sm:$0x3]
      %v698 = vlaneseq
      %v699 = vshrl.u32 %v698, 7
      %v700 = vsub.s32 0, %v699
      %v701 = vrot.slane %v696, %v700
      %v702 = vlaneseq
      %v703 = vshrl.u32 %v702, 7
      %v704 = vsub.s32 1, %v703
      %v705 = vrot.slane %v696, %v704
      %v740 = vunpack.c.l.b16 %v664
      %v741 = vunpack.c.h.b16 %v664
      %v742 = vunpack.c.l.b16 %v665
      %v743 = vunpack.c.h.b16 %v665
      %v744 = vunpack.c.l.b16 %v666
      %v745 = vunpack.c.h.b16 %v666
      %v746 = vunpack.c.l.b16 %v667
      %v747 = vunpack.c.h.b16 %v667
      %v748 = vunpack.c.l.b16 %v668
      %v749 = vunpack.c.h.b16 %v668
      %v750 = vunpack.c.l.b16 %v669
      %v751 = vunpack.c.h.b16 %v669
      %v752 = vunpack.c.l.b16 %v670
      %v753 = vunpack.c.h.b16 %v670
      %v754 = vunpack.c.l.b16 %v671
      %v755 = vunpack.c.h.b16 %v671
      %v756 = vunpack.c.l.b16 %v672
      %v757 = vunpack.c.h.b16 %v672
      %v758 = vunpack.c.l.b16 %v673
      %v759 = vunpack.c.h.b16 %v673
      %v760 = vunpack.c.l.b16 %v674
      %v761 = vunpack.c.h.b16 %v674
      %v762 = vunpack.c.l.b16 %v675
      %v763 = vunpack.c.h.b16 %v675
      %v764 = vunpack.c.l.b16 %v676
      %v765 = vunpack.c.h.b16 %v676
      %v766 = vunpack.c.l.b16 %v677
      %v767 = vunpack.c.h.b16 %v677
      %v768 = vunpack.c.l.b16 %v678
      %v769 = vunpack.c.h.b16 %v678
      %v770 = vunpack.c.l.b16 %v679
      %v771 = vunpack.c.h.b16 %v679
      %v772 = vunpack.c.l.b16 %v680
      %v773 = vunpack.c.h.b16 %v680
      %v774 = vunpack.c.l.b16 %v681
      %v775 = vunpack.c.h.b16 %v681
      %v776 = vunpack.c.l.b16 %v682
      %v777 = vunpack.c.h.b16 %v682
      %v778 = vunpack.c.l.b16 %v683
      %v779 = vunpack.c.h.b16 %v683
      %v780 = vunpack.c.l.b16 %v684
      %v781 = vunpack.c.h.b16 %v684
      %v782 = vunpack.c.l.b16 %v685
      %v783 = vunpack.c.h.b16 %v685
      %v784 = vunpack.c.l.b16 %v686
      %v785 = vunpack.c.h.b16 %v686
      %v786 = vunpack.c.l.b16 %v687
      %v787 = vunpack.c.h.b16 %v687
      %v788 = vunpack.c.l.b16 %v688
      %v789 = vunpack.c.h.b16 %v688
      %v790 = vunpack.c.l.b16 %v689
      %v791 = vunpack.c.h.b16 %v689
      %v792 = vunpack.c.l.b16 %v690
      %v793 = vunpack.c.h.b16 %v690
      %v794 = vunpack.c.l.b16 %v691
      %v795 = vunpack.c.h.b16 %v691
      %v796 = vunpack.c.l.b16 %v692
      %v797 = vunpack.c.h.b16 %v692
      %v798 = vunpack.c.l.b16 %v693
      %v799 = vunpack.c.h.b16 %v693
      %v800 = vunpack.c.l.b16 %v694
      %v801 = vunpack.c.h.b16 %v694
      %v802 = vunpack.c.l.b16 %v695
      %v803 = vunpack.c.h.b16 %v695
      %v804 = vpack.c.b16 %v742, %v740
      %v805 = vpack.c.b16 %v743, %v741
      %v806 = vpack.c.b16 %v746, %v744
      %v807 = vpack.c.b16 %v747, %v745
      %v808 = vpack.c.b16 %v750, %v748
      %v809 = vpack.c.b16 %v751, %v749
      %v810 = vpack.c.b16 %v754, %v752
      %v811 = vpack.c.b16 %v755, %v753
      %v812 = vpack.c.b16 %v758, %v756
      %v813 = vpack.c.b16 %v759, %v757
      %v814 = vpack.c.b16 %v762, %v760
      %v815 = vpack.c.b16 %v763, %v761
      %v816 = vpack.c.b16 %v766, %v764
      %v817 = vpack.c.b16 %v767, %v765
      %v818 = vpack.c.b16 %v770, %v768
      %v819 = vpack.c.b16 %v771, %v769
      %v820 = vpack.c.b16 %v774, %v772
      %v821 = vpack.c.b16 %v775, %v773
      %v822 = vpack.c.b16 %v778, %v776
      %v823 = vpack.c.b16 %v779, %v777
      %v824 = vpack.c.b16 %v782, %v780
      %v825 = vpack.c.b16 %v783, %v781
      %v826 = vpack.c.b16 %v786, %v784
      %v827 = vpack.c.b16 %v787, %v785
      %v828 = vpack.c.b16 %v790, %v788
      %v829 = vpack.c.b16 %v791, %v789
      %v830 = vpack.c.b16 %v794, %v792
      %v831 = vpack.c.b16 %v795, %v793
      %v832 = vpack.c.b16 %v798, %v796
      %v833 = vpack.c.b16 %v799, %v797
      %v834 = vpack.c.b16 %v802, %v800
      %v835 = vpack.c.b16 %v803, %v801
      %868 = vmatprep.subr.bf16.mxu0 %v805
      %869 = vmatpush1.bf16.msra.mxu0 %v804
      %870 = vmatprep.subr.bf16.mxu0 %v807
      %871 = vmatpush1.bf16.msra.mxu0 %v806
      %872 = vmatprep.subr.bf16.mxu0 %v809
      %873 = vmatpush1.bf16.msra.mxu0 %v808
      %874 = vmatprep.subr.bf16.mxu0 %v811
      %875 = vmatpush1.bf16.msra.mxu0 %v810
      %876 = vmatprep.subr.bf16.mxu0 %v813
      %877 = vmatpush1.bf16.msra.mxu0 %v812
      %878 = vmatprep.subr.bf16.mxu0 %v815
      %879 = vmatpush1.bf16.msra.mxu0 %v814
      %880 = vmatprep.subr.bf16.mxu0 %v817
      %881 = vmatpush1.bf16.msra.mxu0 %v816
      %882 = vmatprep.subr.bf16.mxu0 %v819
      %883 = vmatpush1.bf16.msra.mxu0 %v818
      %884 = vmatprep.subr.bf16.mxu0 %v821
      %885 = vmatpush1.bf16.msra.mxu0 %v820
      %886 = vmatprep.subr.bf16.mxu0 %v823
      %887 = vmatpush1.bf16.msra.mxu0 %v822
      %888 = vmatprep.subr.bf16.mxu0 %v825
      %889 = vmatpush1.bf16.msra.mxu0 %v824
      %890 = vmatprep.subr.bf16.mxu0 %v827
      %891 = vmatpush1.bf16.msra.mxu0 %v826
      %892 = vmatprep.subr.bf16.mxu0 %v829
      %893 = vmatpush1.bf16.msra.mxu0 %v828
      %894 = vmatprep.subr.bf16.mxu0 %v831
      %895 = vmatpush1.bf16.msra.mxu0 %v830
      %896 = vmatprep.subr.bf16.mxu0 %v833
      %897 = vmatpush1.bf16.msra.mxu0 %v832
      %898 = vmatprep.subr.bf16.mxu0 %v835
      %899 = vmatpush1.bf16.msra.mxu0 %v834
      %900 = vmatprep.mubr.bf16.mxu0 %v661
      %901 = vmatmul.mubr.bf16.gmra.mrb[0].mxu0 %v660
      %v902 = vpop.f32.mrb[0].mxu0
      %v903 = vadd.f32 %v701, %v902
      %v904 = vpop.f32.mrb[0].mxu0
      %v905 = vadd.f32 %v705, %v904
      %v906 = vpop.f32.mrb[0].mxu0
      %v907 = vadd.f32 %v701, %v906
      %v908 = vpop.f32.mrb[0].mxu0
      %v909 = vadd.f32 %v705, %v908
      %910 = vmatprep.mubr.bf16.mxu0 %v663
      %911 = vmatmul.mubr.bf16.gmra.mrb[0].mxu0 %v662
      %v912 = vpop.f32.mrb[0].mxu0
      %v913 = vadd.f32 %v701, %v912
      %v914 = vpop.f32.mrb[0].mxu0
      %v915 = vadd.f32 %v705, %v914
      %v916 = vpop.f32.mrb[0].mxu0
      %v917 = vadd.f32 %v701, %v916
      %v918 = vpop.f32.mrb[0].mxu0
      %v919 = vadd.f32 %v705, %v918
      %920 = vdwg.mxu0
      %v921 = vld [vmem:[%s222] sm:$0xff]
      %v922 = vld [vmem:[%s222 + $0x8] sm:$0xff]
      %v923 = vld [vmem:[%s222 + $0x10] sm:$0xff]
      %v924 = vld [vmem:[%s222 + $0x18] sm:$0xff]
      %v925 = vld [vmem:[%s222 + $0x20] sm:$0xff]
      %v926 = vld [vmem:[%s222 + $0x28] sm:$0xff]
      %v927 = vld [vmem:[%s222 + $0x30] sm:$0xff]
      %v928 = vld [vmem:[%s222 + $0x38] sm:$0xff]
      %v929 = vadd.f32 %v903, %v921
      %v930 = vadd.f32 %v905, %v922
      %v931 = vadd.f32 %v907, %v923
      %v932 = vadd.f32 %v909, %v924
      %v933 = vadd.f32 %v913, %v925
      %v934 = vadd.f32 %v915, %v926
      %v935 = vadd.f32 %v917, %v927
      %v936 = vadd.f32 %v919, %v928
      %937 = vst [vmem:[%s229] sm:$0xff] %v929
      %938 = vst [vmem:[%s229 + $0x8] sm:$0xff] %v930
      %939 = vst [vmem:[%s229 + $0x10] sm:$0xff] %v931
      %940 = vst [vmem:[%s229 + $0x18] sm:$0xff] %v932
      %941 = vst [vmem:[%s229 + $0x20] sm:$0xff] %v933
      %942 = vst [vmem:[%s229 + $0x28] sm:$0xff] %v934
      %943 = vst [vmem:[%s229 + $0x30] sm:$0xff] %v935
      %944 = vst [vmem:[%s229 + $0x38] sm:$0xff] %v936
      %s945 = smul.u32 4, %s15
      %p946 = scmp.lt.s32.totalorder %s945, 7
      %s947 = scalar_select %p946, %s945, 7
      %s948 = smul.addr %s947, 2
      %s949 = smul.addr %s948, 8
      %s950 = scalar_lea.vmem %s4, %s949
      // Predicated region
      $region37: #{gpt_forward.10} parent=35 // pred_check
        %p951 = pneg %p127
      $region38: #{gpt_forward.10} parent=35 // pred_check_branch
        %953 = sbr.rel (%p951) target = $region40
      $region39: #{gpt_forward.10} parent=35 // pred_region
        %s954 = smul.u32 4, %s15
      $region40: #{gpt_forward.10} parent=35 // pred_fallthru
        _
    $region36: #{gpt_forward.10} parent=5 // pred_fallthru
      _
    %p955 = scmp.le.s32.totalorder 2, %s10
    // Predicated region
    $region41: #{gpt_forward.10} parent=5 // pred_check
      %p956 = pneg %p955
    $region42: #{gpt_forward.10} parent=5 // pred_check_branch
      %958 = sbr.rel (%p956) target = $region44
    $region43: #{gpt_forward.10} parent=5 // pred_region
      %s959 = ssub.s32 %s10, 2
      // Predicated region
      $region45: #{gpt_forward.10} parent=43 // pred_check
        %p960 = pneg %p133
      $region46: #{gpt_forward.10} parent=43 // pred_check_branch
        %962 = sbr.rel (%p960) target = $region48
      $region47: #{gpt_forward.10} parent=43 // pred_region
        %s963 = smul.u32 4, %s16
        %p964 = scmp.lt.s32.totalorder %s963, 7
        %s965 = scalar_select %p964, %s963, 7
        %s966 = smul.addr %s965, 2
        %s967 = smul.addr %s966, 8
        %s968 = scalar_lea.vmem %s4, %s967
      $region48: #{gpt_forward.10} parent=43 // pred_fallthru
        _
    $region44: #{gpt_forward.10} parent=5 // pred_fallthru
      _
  $region6: #{gpt_forward.10} parent=0 // loop_footer
    %s14 = sadd.s32 1, %s10
  $region7: #{gpt_forward.10} parent=0 // loop_footer_branch
    %9 = sbr.rel target = $region3
  $region8: #{gpt_forward.10} parent=0 // loop_exit
    _

// kernel: gpt_forward.9
$region0: #{gpt_forward.9}
  #allocation0 [shape = 'u32[]', space=smem, size = 0x4, offset = 0x4, fixed_abs, tag = 'smem constant byte address 0x4 - core index']
  #allocation1 [shape = 'u32[144,128]{1,0:T(1,128)}', space=vmem, size = 0x12000, scoped, tag = 'internal scratch']
  %s0 = inlined_call_operand.vmem [shape: f32[64,256], index: 0, kind: input, shape index: {}]
  %s1 = inlined_call_operand.vmem [shape: f32[1,256], index: 1, kind: input, shape index: {}]
  %s2 = inlined_call_operand.vmem [shape: f32[1,256], index: 2, kind: input, shape index: {}]
  %s3 = inlined_call_operand.vmem [shape: bf16[256,768], index: 3, kind: input, shape index: {}]
  %s4 = inlined_call_operand.vmem [shape: f32[1,768], index: 4, kind: input, shape index: {}]
  %s5 = inlined_call_operand.vmem [shape: bf16[64,768], index: 5, kind: output, shape index: {}]
  %s6 = sld [smem:[#allocation0]]
  $region53: #{gpt_forward.9} parent=0
    _
  %s8 = ssub.s32 1, %s6
  %s9 = scalar_select 0, %s8, %s6
  loop: start=0, step=1, limit=4
  $region2: #{gpt_forward.9} parent=0 // loop_pre_header
    _
  $region3: #{gpt_forward.9} parent=0 // loop_header
    %s11 = sphi 0, %s15
    %p12 = scmp.ge.s32.totalorder %s11, 4
    %s21 = sphi 0, %s23
    %s24 = sphi 0, %s21
    %s25 = sphi 0, %s24
    %s41 = sphi 0, %s25
    %s45 = sphi 0, %s45
    %s47 = sphi 0, %s45
    %s48 = sphi 0, %s47
    %s62 = sphi 0, %s48
    %s66 = sphi 0, %s66
    %s68 = sphi 0, %s66
    %s69 = sphi 0, %s68
    %s83 = sphi 0, %s69
    %s87 = sphi 0, %s87
    %s89 = sphi 0, %s87
    %s90 = sphi 0, %s89
    %s104 = sphi 0, %s90
    %s108 = sphi 0, %s108
    %s110 = sphi 0, %s108
    %s111 = sphi 0, %s110
    %s125 = sphi 0, %s111
    %s131 = sphi 0, %s133
    %s134 = sphi 0, %s131
    %s135 = sphi 0, %s134
    %s151 = sphi 0, %s135
  $region4: #{gpt_forward.9} parent=0 // loop_header_branch
    %14 = sbr.rel (%p12) target = $region8
  $region5: #{gpt_forward.9} parent=0 // loop_body
    %s16 = ssub.s32 %s11, 1
    %s17 = ssub.s32 %s11, 2
    %s18 = sadd.s32 %s11, 1
    %s19 = ssub.s32 %s11, %s18
    %p20 = scmp.eq.s32.totalorder %s19, 0
    %s22 = sadd.s32 %s21, 1
    %s23 = scalar_select %p20, %s21, %s22
    %p26 = pneg %p20
    %p27 = scmp.eq.s32.totalorder %s11, 1
    %p28 = por %p26, %p27
    %p29 = scmp.ne.s32.totalorder %s21, %s24
    %p30 = scmp.eq.s32.totalorder %s11, 0
    %p31 = por %p29, %p30
    %p32 = scmp.ne.s32.totalorder %s21, %s24
    %p33 = scmp.eq.s32.totalorder %s16, 1
    %p34 = por %p32, %p33
    %p35 = scmp.ne.s32.totalorder %s24, %s25
    %p36 = scmp.eq.s32.totalorder %s16, 0
    %p37 = por %p35, %p36
    %p38 = scmp.ne.s32.totalorder %s24, %s25
    %p39 = scmp.eq.s32.totalorder %s17, 1
    %p40 = por %p38, %p39
    %p42 = scmp.ne.s32.totalorder %s25, %s41
    %p43 = scmp.eq.s32.totalorder %s17, 0
    %p44 = por %p42, %p43
    %s46 = sadd.s32 %s45, 1
    %p49 = scmp.eq.s32.totalorder %s11, 1
    %p50 = scmp.ne.s32.totalorder %s45, %s47
    %p51 = scmp.eq.s32.totalorder %s11, 0
    %p52 = por %p50, %p51
    %p53 = scmp.ne.s32.totalorder %s45, %s47
    %p54 = scmp.eq.s32.totalorder %s16, 1
    %p55 = por %p53, %p54
    %p56 = scmp.ne.s32.totalorder %s47, %s48
    %p57 = scmp.eq.s32.totalorder %s16, 0
    %p58 = por %p56, %p57
    %p59 = scmp.ne.s32.totalorder %s47, %s48
    %p60 = scmp.eq.s32.totalorder %s17, 1
    %p61 = por %p59, %p60
    %p63 = scmp.ne.s32.totalorder %s48, %s62
    %p64 = scmp.eq.s32.totalorder %s17, 0
    %p65 = por %p63, %p64
    %s67 = sadd.s32 %s66, 1
    %p70 = scmp.eq.s32.totalorder %s11, 1
    %p71 = scmp.ne.s32.totalorder %s66, %s68
    %p72 = scmp.eq.s32.totalorder %s11, 0
    %p73 = por %p71, %p72
    %p74 = scmp.ne.s32.totalorder %s66, %s68
    %p75 = scmp.eq.s32.totalorder %s16, 1
    %p76 = por %p74, %p75
    %p77 = scmp.ne.s32.totalorder %s68, %s69
    %p78 = scmp.eq.s32.totalorder %s16, 0
    %p79 = por %p77, %p78
    %p80 = scmp.ne.s32.totalorder %s68, %s69
    %p81 = scmp.eq.s32.totalorder %s17, 1
    %p82 = por %p80, %p81
    %p84 = scmp.ne.s32.totalorder %s69, %s83
    %p85 = scmp.eq.s32.totalorder %s17, 0
    %p86 = por %p84, %p85
    %s88 = sadd.s32 %s87, 1
    %p91 = scmp.eq.s32.totalorder %s11, 1
    %p92 = scmp.ne.s32.totalorder %s87, %s89
    %p93 = scmp.eq.s32.totalorder %s11, 0
    %p94 = por %p92, %p93
    %p95 = scmp.ne.s32.totalorder %s87, %s89
    %p96 = scmp.eq.s32.totalorder %s16, 1
    %p97 = por %p95, %p96
    %p98 = scmp.ne.s32.totalorder %s89, %s90
    %p99 = scmp.eq.s32.totalorder %s16, 0
    %p100 = por %p98, %p99
    %p101 = scmp.ne.s32.totalorder %s89, %s90
    %p102 = scmp.eq.s32.totalorder %s17, 1
    %p103 = por %p101, %p102
    %p105 = scmp.ne.s32.totalorder %s90, %s104
    %p106 = scmp.eq.s32.totalorder %s17, 0
    %p107 = por %p105, %p106
    %s109 = sadd.s32 %s108, 1
    %p112 = scmp.eq.s32.totalorder %s11, 1
    %p113 = scmp.ne.s32.totalorder %s108, %s110
    %p114 = scmp.eq.s32.totalorder %s11, 0
    %p115 = por %p113, %p114
    %p116 = scmp.ne.s32.totalorder %s108, %s110
    %p117 = scmp.eq.s32.totalorder %s16, 1
    %p118 = por %p116, %p117
    %p119 = scmp.ne.s32.totalorder %s110, %s111
    %p120 = scmp.eq.s32.totalorder %s16, 0
    %p121 = por %p119, %p120
    %p122 = scmp.ne.s32.totalorder %s110, %s111
    %p123 = scmp.eq.s32.totalorder %s17, 1
    %p124 = por %p122, %p123
    %p126 = scmp.ne.s32.totalorder %s111, %s125
    %p127 = scmp.eq.s32.totalorder %s17, 0
    %p128 = por %p126, %p127
    %s129 = ssub.s32 %s11, %s18
    %p130 = scmp.eq.s32.totalorder %s129, 0
    %s132 = sadd.s32 %s131, 1
    %s133 = scalar_select %p130, %s131, %s132
    %p136 = pneg %p130
    %p137 = scmp.eq.s32.totalorder %s11, 1
    %p138 = por %p136, %p137
    %p139 = scmp.ne.s32.totalorder %s131, %s134
    %p140 = scmp.eq.s32.totalorder %s11, 0
    %p141 = por %p139, %p140
    %p142 = scmp.ne.s32.totalorder %s131, %s134
    %p143 = scmp.eq.s32.totalorder %s16, 1
    %p144 = por %p142, %p143
    %p145 = scmp.ne.s32.totalorder %s134, %s135
    %p146 = scmp.eq.s32.totalorder %s16, 0
    %p147 = por %p145, %p146
    %p148 = scmp.ne.s32.totalorder %s134, %s135
    %p149 = scmp.eq.s32.totalorder %s17, 1
    %p150 = por %p148, %p149
    %p152 = scmp.ne.s32.totalorder %s135, %s151
    %p153 = scmp.eq.s32.totalorder %s17, 0
    %p154 = por %p152, %p153
    %p155 = scmp.le.s32.totalorder 1, %s11
    %p156 = scmp.lt.s32.totalorder %s11, 3
    %p157 = pnand %p155, %p156
    %p158 = pneg %p157
    // Predicated region
    $region9: #{gpt_forward.9} parent=5 // pred_check
      _
    $region10: #{gpt_forward.9} parent=5 // pred_check_branch
      %160 = sbr.rel (%p157) target = $region12
    $region11: #{gpt_forward.9} parent=5 // pred_region
      %s161 = ssub.s32 %s11, 1
      // Predicated region
      $region13: #{gpt_forward.9} parent=11 // pred_check
        %p162 = pneg %p58
      $region14: #{gpt_forward.9} parent=11 // pred_check_branch
        %164 = sbr.rel (%p162) target = $region16
      $region15: #{gpt_forward.9} parent=11 // pred_region
        _
      $region16: #{gpt_forward.9} parent=11 // pred_fallthru
        _
      // Predicated region
      $region17: #{gpt_forward.9} parent=11 // pred_check
        %p165 = pneg %p79
      $region18: #{gpt_forward.9} parent=11 // pred_check_branch
        %167 = sbr.rel (%p165) target = $region20
      $region19: #{gpt_forward.9} parent=11 // pred_region
        _
      $region20: #{gpt_forward.9} parent=11 // pred_fallthru
        _
      // Predicated region
      $region21: #{gpt_forward.9} parent=11 // pred_check
        %p168 = pneg %p100
      $region22: #{gpt_forward.9} parent=11 // pred_check_branch
        %170 = sbr.rel (%p168) target = $region24
      $region23: #{gpt_forward.9} parent=11 // pred_region
        _
      $region24: #{gpt_forward.9} parent=11 // pred_fallthru
        _
      // Predicated region
      $region25: #{gpt_forward.9} parent=11 // pred_check
        %p171 = pneg %p121
      $region26: #{gpt_forward.9} parent=11 // pred_check_branch
        %173 = sbr.rel (%p171) target = $region28
      $region27: #{gpt_forward.9} parent=11 // pred_region
        _
      $region28: #{gpt_forward.9} parent=11 // pred_fallthru
        _
    $region12: #{gpt_forward.9} parent=5 // pred_fallthru
      _
    %p174 = scmp.lt.s32.totalorder %s11, 2
    // Predicated region
    $region29: #{gpt_forward.9} parent=5 // pred_check
      %p175 = pneg %p174
    $region30: #{gpt_forward.9} parent=5 // pred_check_branch
      %177 = sbr.rel (%p175) target = $region32
    $region31: #{gpt_forward.9} parent=5 // pred_region
      // Predicated region
      $region33: #{gpt_forward.9} parent=31 // pred_check
        %p178 = pneg %p31
      $region34: #{gpt_forward.9} parent=31 // pred_check_branch
        %180 = sbr.rel (%p178) target = $region36
      $region35: #{gpt_forward.9} parent=31 // pred_region
        %s181 = smul.u32 4, %s11
        %p182 = scmp.lt.s32.totalorder %s181, 7
        %s183 = scalar_select %p182, %s181, 7
        %s184 = smul.addr %s183, 2
        %s185 = smul.addr %s184, 8
        %s186 = scalar_lea.vmem %s0, %s185
        %s187 = smul.u32 4, %s11
      $region36: #{gpt_forward.9} parent=31 // pred_fallthru
        _
    $region32: #{gpt_forward.9} parent=5 // pred_fallthru
      _
    %p188 = scmp.le.s32.totalorder 1, %s11
    %p189 = scmp.lt.s32.totalorder %s11, 3
    %p190 = pnand %p188, %p189
    %p191 = pneg %p190
    // Predicated region
    $region37: #{gpt_forward.9} parent=5 // pred_check
      _
    $region38: #{gpt_forward.9} parent=5 // pred_check_branch
      %193 = sbr.rel (%p190) target = $region40
    $region39: #{gpt_forward.9} parent=5 // pred_region
      %s194 = ssub.s32 %s11, 1
      %s195 = smul.u32 4, %s16
      %p196 = scmp.lt.s32.totalorder %s195, 7
      %s197 = scalar_select %p196, %s195, 7
      %s198 = smul.addr %s197, 2
      %s199 = smul.addr %s198, 8
      %s200 = scalar_lea.vmem %s0, %s199
      %p201 = pneg %p37
      %p202 = pneg %p34
      %p203 = pneg %p58
      %p204 = pneg %p55
      %p205 = pneg %p79
      %p206 = pneg %p76
      %p207 = pneg %p100
      %p208 = pneg %p97
      %p209 = pneg %p121
      %p210 = pneg %p118
      %p211 = pneg %p147
      %p212 = pneg %p144
      %s213 = smul.u32 4, %s16
      %p214 = scmp.lt.s32.totalorder %s213, 7
      %s215 = scalar_select %p214, %s213, 7
      %s216 = smul.addr %s215, 6
      %s217 = smul.addr %s216, 4
      %s218 = scalar_lea.vmem %s5, %s217
      %s219 = smul.u32 4, %s16
      %p220 = scmp.lt.s32.totalorder %s219, 7
      %s221 = scalar_select %p220, %s219, 7
      %s222 = smul.addr %s221, 2
      %s223 = smul.addr %s222, 8
      %s224 = scalar_lea.vmem %s0, %s223
      %s225 = smul.u32 4, %s16
      %s226 = smul.u32 4, %s16
      %p227 = scmp.lt.s32.totalorder %s226, 7
      %s228 = scalar_select %p227, %s226, 7
      %s229 = smul.addr %s228, 6
      %s230 = smul.addr %s229, 4
      %s231 = scalar_lea.vmem %s5, %s230
      %s232 = smul.u32 4, %s16
      %v233 = vld [vmem:[%s224] sm:$0xff]
      %v234 = vld [vmem:[%s224 + $0x8] sm:$0xff]
      %v235 = vld [vmem:[%s224 + $0x10] sm:$0xff]
      %v236 = vld [vmem:[%s224 + $0x18] sm:$0xff]
      %v237 = vld [vmem:[%s224 + $0x20] sm:$0xff]
      %v238 = vld [vmem:[%s224 + $0x28] sm:$0xff]
      %v239 = vld [vmem:[%s224 + $0x30] sm:$0xff]
      %v240 = vld [vmem:[%s224 + $0x38] sm:$0xff]
      %v241 = vadd.f32 %v233, %v234
      %242 = vadd.xlane.f32.xlu0 %v241
      %v243 = vpop.xlane.xlu0 %242
      %v244 = vadd.f32 %v235, %v236
      %245 = vadd.xlane.f32.xlu0 %v244
      %v246 = vpop.xlane.xlu0 %245
      %v247 = vadd.f32 %v237, %v238
      %248 = vadd.xlane.f32.xlu0 %v247
      %v249 = vpop.xlane.xlu0 %248
      %v250 = vadd.f32 %v239, %v240
      %251 = vadd.xlane.f32.xlu0 %v250
      %v252 = vpop.xlane.xlu0 %251
      %v253 = vrcp.pop 256.0
      %v254 = vmul.f32 %v243, %v253
      %v255 = vmul.f32 %v246, %v253
      %v256 = vmul.f32 %v249, %v253
      %v257 = vmul.f32 %v252, %v253
      %v258 = vsub.f32 %v233, %v254
      %v259 = vsub.f32 %v234, %v254
      %v260 = vsub.f32 %v235, %v255
      %v261 = vsub.f32 %v236, %v255
      %v262 = vsub.f32 %v237, %v256
      %v263 = vsub.f32 %v238, %v256
      %v264 = vsub.f32 %v239, %v257
      %v265 = vsub.f32 %v240, %v257
      %v266 = vmul.f32 %v258, %v258
      %v267 = vmul.f32 %v259, %v259
      %v268 = vmul.f32 %v260, %v260
      %v269 = vmul.f32 %v261, %v261
      %v270 = vmul.f32 %v262, %v262
      %v271 = vmul.f32 %v263, %v263
      %v272 = vmul.f32 %v264, %v264
      %v273 = vmul.f32 %v265, %v265
      %v274 = vadd.f32 %v266, %v267
      %275 = vadd.xlane.f32.xlu0 %v274
      %v276 = vpop.xlane.xlu0 %275
      %v277 = vadd.f32 %v268, %v269
      %278 = vadd.xlane.f32.xlu0 %v277
      %v279 = vpop.xlane.xlu0 %278
      %v280 = vadd.f32 %v270, %v271
      %281 = vadd.xlane.f32.xlu0 %v280
      %v282 = vpop.xlane.xlu0 %281
      %v283 = vadd.f32 %v272, %v273
      %284 = vadd.xlane.f32.xlu0 %v283
      %v285 = vpop.xlane.xlu0 %284
      %v286 = vmul.f32 %v276, %v253
      %v287 = vmul.f32 %v279, %v253
      %v288 = vmul.f32 %v282, %v253
      %v289 = vmul.f32 %v285, %v253
      %v290 = vadd.f32 %v286, 1e-05
      %v291 = vadd.f32 %v287, 1e-05
      %v292 = vadd.f32 %v288, 1e-05
      %v293 = vadd.f32 %v289, 1e-05
      %v294 = vrsqrt.pop %v290
      %v295 = vrsqrt.pop %v291
      %v296 = vrsqrt.pop %v292
      %v297 = vrsqrt.pop %v293
      %v298 = vmul.f32 %v258, %v294
      %v299 = vmul.f32 %v259, %v294
      %v300 = vmul.f32 %v260, %v295
      %v301 = vmul.f32 %v261, %v295
      %v302 = vmul.f32 %v262, %v296
      %v303 = vmul.f32 %v263, %v296
      %v304 = vmul.f32 %v264, %v297
      %v305 = vmul.f32 %v265, %v297
      %v306 = vld [vmem:[%s1] sm:$0x3]
      %v308 = vlaneseq
      %v309 = vshrl.u32 %v308, 7
      %v310 = vsub.s32 0, %v309
      %v311 = vrot.slane %v306, %v310
      %v312 = vlaneseq
      %v313 = vshrl.u32 %v312, 7
      %v314 = vsub.s32 1, %v313
      %v315 = vrot.slane %v306, %v314
      %v318 = vmul.f32 %v298, %v311
      %v319 = vmul.f32 %v299, %v315
      %v320 = vmul.f32 %v300, %v311
      %v321 = vmul.f32 %v301, %v315
      %v322 = vmul.f32 %v302, %v311
      %v323 = vmul.f32 %v303, %v315
      %v324 = vmul.f32 %v304, %v311
      %v325 = vmul.f32 %v305, %v315
      %v326 = vld [vmem:[%s2] sm:$0x3]
      %v328 = vlaneseq
      %v329 = vshrl.u32 %v328, 7
      %v330 = vsub.s32 0, %v329
      %v331 = vrot.slane %v326, %v330
      %v332 = vlaneseq
      %v333 = vshrl.u32 %v332, 7
      %v334 = vsub.s32 1, %v333
      %v335 = vrot.slane %v326, %v334
      %v338 = vadd.f32 %v318, %v331
      %v339 = vadd.f32 %v319, %v335
      %v340 = vadd.f32 %v320, %v331
      %v341 = vadd.f32 %v321, %v335
      %v342 = vadd.f32 %v322, %v331
      %v343 = vadd.f32 %v323, %v335
      %v344 = vadd.f32 %v324, %v331
      %v345 = vadd.f32 %v325, %v335
      %v346 = vpack.c.bf16 %v340, %v338
      %v347 = vpack.c.bf16 %v341, %v339
      %v348 = vpack.c.bf16 %v344, %v342
      %v349 = vpack.c.bf16 %v345, %v343
      %v350 = vld [vmem:[%s3] sm:$0xff]
      %v351 = vld [vmem:[%s3 + $0x8] sm:$0xff]
      %v352 = vld [vmem:[%s3 + $0x10] sm:$0xff]
      %v353 = vld [vmem:[%s3 + $0x18] sm:$0xff]
      %v354 = vld [vmem:[%s3 + $0x20] sm:$0xff]
      %v355 = vld [vmem:[%s3 + $0x28] sm:$0xff]
      %v356 = vld [vmem:[%s3 + $0x30] sm:$0xff]
      %v357 = vld [vmem:[%s3 + $0x38] sm:$0xff]
      %v358 = vld [vmem:[%s3 + $0x40] sm:$0xff]
      %v359 = vld [vmem:[%s3 + $0x48] sm:$0xff]
      %v360 = vld [vmem:[%s3 + $0x50] sm:$0xff]
      %v361 = vld [vmem:[%s3 + $0x58] sm:$0xff]
      %v362 = vld [vmem:[%s3 + $0x60] sm:$0xff]
      %v363 = vld [vmem:[%s3 + $0x68] sm:$0xff]
      %v364 = vld [vmem:[%s3 + $0x70] sm:$0xff]
      %v365 = vld [vmem:[%s3 + $0x78] sm:$0xff]
      %v366 = vld [vmem:[%s3 + $0x80] sm:$0xff]
      %v367 = vld [vmem:[%s3 + $0x88] sm:$0xff]
      %v368 = vld [vmem:[%s3 + $0x90] sm:$0xff]
      %v369 = vld [vmem:[%s3 + $0x98] sm:$0xff]
      %v370 = vld [vmem:[%s3 + $0xa0] sm:$0xff]
      %v371 = vld [vmem:[%s3 + $0xa8] sm:$0xff]
      %v372 = vld [vmem:[%s3 + $0xb0] sm:$0xff]
      %v373 = vld [vmem:[%s3 + $0xb8] sm:$0xff]
      %v374 = vld [vmem:[%s3 + $0xc0] sm:$0xff]
      %v375 = vld [vmem:[%s3 + $0xc8] sm:$0xff]
      %v376 = vld [vmem:[%s3 + $0xd0] sm:$0xff]
      %v377 = vld [vmem:[%s3 + $0xd8] sm:$0xff]
      %v378 = vld [vmem:[%s3 + $0xe0] sm:$0xff]
      %v379 = vld [vmem:[%s3 + $0xe8] sm:$0xff]
      %v380 = vld [vmem:[%s3 + $0xf0] sm:$0xff]
      %v381 = vld [vmem:[%s3 + $0xf8] sm:$0xff]
      %v382 = vld [vmem:[%s3 + $0x100] sm:$0xff]
      %v383 = vld [vmem:[%s3 + $0x108] sm:$0xff]
      %v384 = vld [vmem:[%s3 + $0x110] sm:$0xff]
      %v385 = vld [vmem:[%s3 + $0x118] sm:$0xff]
      %v386 = vld [vmem:[%s3 + $0x120] sm:$0xff]
      %v387 = vld [vmem:[%s3 + $0x128] sm:$0xff]
      %v388 = vld [vmem:[%s3 + $0x130] sm:$0xff]
      %v389 = vld [vmem:[%s3 + $0x138] sm:$0xff]
      %v390 = vld [vmem:[%s3 + $0x140] sm:$0xff]
      %v391 = vld [vmem:[%s3 + $0x148] sm:$0xff]
      %v392 = vld [vmem:[%s3 + $0x150] sm:$0xff]
      %v393 = vld [vmem:[%s3 + $0x158] sm:$0xff]
      %v394 = vld [vmem:[%s3 + $0x160] sm:$0xff]
      %v395 = vld [vmem:[%s3 + $0x168] sm:$0xff]
      %v396 = vld [vmem:[%s3 + $0x170] sm:$0xff]
      %v397 = vld [vmem:[%s3 + $0x178] sm:$0xff]
      %v398 = vld [vmem:[%s3 + $0x180] sm:$0xff]
      %v399 = vld [vmem:[%s3 + $0x188] sm:$0xff]
      %v400 = vld [vmem:[%s3 + $0x190] sm:$0xff]
      %v401 = vld [vmem:[%s3 + $0x198] sm:$0xff]
      %v402 = vld [vmem:[%s3 + $0x1a0] sm:$0xff]
      %v403 = vld [vmem:[%s3 + $0x1a8] sm:$0xff]
      %v404 = vld [vmem:[%s3 + $0x1b0] sm:$0xff]
      %v405 = vld [vmem:[%s3 + $0x1b8] sm:$0xff]
      %v406 = vld [vmem:[%s3 + $0x1c0] sm:$0xff]
      %v407 = vld [vmem:[%s3 + $0x1c8] sm:$0xff]
      %v408 = vld [vmem:[%s3 + $0x1d0] sm:$0xff]
      %v409 = vld [vmem:[%s3 + $0x1d8] sm:$0xff]
      %v410 = vld [vmem:[%s3 + $0x1e0] sm:$0xff]
      %v411 = vld [vmem:[%s3 + $0x1e8] sm:$0xff]
      %v412 = vld [vmem:[%s3 + $0x1f0] sm:$0xff]
      %v413 = vld [vmem:[%s3 + $0x1f8] sm:$0xff]
      %v414 = vld [vmem:[%s3 + $0x200] sm:$0xff]
      %v415 = vld [vmem:[%s3 + $0x208] sm:$0xff]
      %v416 = vld [vmem:[%s3 + $0x210] sm:$0xff]
      %v417 = vld [vmem:[%s3 + $0x218] sm:$0xff]
      %v418 = vld [vmem:[%s3 + $0x220] sm:$0xff]
      %v419 = vld [vmem:[%s3 + $0x228] sm:$0xff]
      %v420 = vld [vmem:[%s3 + $0x230] sm:$0xff]
      %v421 = vld [vmem:[%s3 + $0x238] sm:$0xff]
      %v422 = vld [vmem:[%s3 + $0x240] sm:$0xff]
      %v423 = vld [vmem:[%s3 + $0x248] sm:$0xff]
      %v424 = vld [vmem:[%s3 + $0x250] sm:$0xff]
      %v425 = vld [vmem:[%s3 + $0x258] sm:$0xff]
      %v426 = vld [vmem:[%s3 + $0x260] sm:$0xff]
      %v427 = vld [vmem:[%s3 + $0x268] sm:$0xff]
      %v428 = vld [vmem:[%s3 + $0x270] sm:$0xff]
      %v429 = vld [vmem:[%s3 + $0x278] sm:$0xff]
      %v430 = vld [vmem:[%s3 + $0x280] sm:$0xff]
      %v431 = vld [vmem:[%s3 + $0x288] sm:$0xff]
      %v432 = vld [vmem:[%s3 + $0x290] sm:$0xff]
      %v433 = vld [vmem:[%s3 + $0x298] sm:$0xff]
      %v434 = vld [vmem:[%s3 + $0x2a0] sm:$0xff]
      %v435 = vld [vmem:[%s3 + $0x2a8] sm:$0xff]
      %v436 = vld [vmem:[%s3 + $0x2b0] sm:$0xff]
      %v437 = vld [vmem:[%s3 + $0x2b8] sm:$0xff]
      %v438 = vld [vmem:[%s3 + $0x2c0] sm:$0xff]
      %v439 = vld [vmem:[%s3 + $0x2c8] sm:$0xff]
      %v440 = vld [vmem:[%s3 + $0x2d0] sm:$0xff]
      %v441 = vld [vmem:[%s3 + $0x2d8] sm:$0xff]
      %v442 = vld [vmem:[%s3 + $0x2e0] sm:$0xff]
      %v443 = vld [vmem:[%s3 + $0x2e8] sm:$0xff]
      %v444 = vld [vmem:[%s3 + $0x2f0] sm:$0xff]
      %v445 = vld [vmem:[%s3 + $0x2f8] sm:$0xff]
      %v446 = vld [vmem:[%s4] sm:$0x3f]
      %v448 = vlaneseq
      %v449 = vshrl.u32 %v448, 7
      %v450 = vsub.s32 0, %v449
      %v451 = vrot.slane %v446, %v450
      %v452 = vlaneseq
      %v453 = vshrl.u32 %v452, 7
      %v454 = vsub.s32 1, %v453
      %v455 = vrot.slane %v446, %v454
      %v456 = vlaneseq
      %v457 = vshrl.u32 %v456, 7
      %v458 = vsub.s32 2, %v457
      %v459 = vrot.slane %v446, %v458
      %v460 = vlaneseq
      %v461 = vshrl.u32 %v460, 7
      %v462 = vsub.s32 3, %v461
      %v463 = vrot.slane %v446, %v462
      %v464 = vlaneseq
      %v465 = vshrl.u32 %v464, 7
      %v466 = vsub.s32 4, %v465
      %v467 = vrot.slane %v446, %v466
      %v468 = vlaneseq
      %v469 = vshrl.u32 %v468, 7
      %v470 = vsub.s32 5, %v469
      %v471 = vrot.slane %v446, %v470
      %v574 = vunpack.c.l.b16 %v350
      %v575 = vunpack.c.h.b16 %v350
      %v576 = vunpack.c.l.b16 %v351
      %v577 = vunpack.c.h.b16 %v351
      %v578 = vunpack.c.l.b16 %v352
      %v579 = vunpack.c.h.b16 %v352
      %v580 = vunpack.c.l.b16 %v353
      %v581 = vunpack.c.h.b16 %v353
      %v582 = vunpack.c.l.b16 %v354
      %v583 = vunpack.c.h.b16 %v354
      %v584 = vunpack.c.l.b16 %v355
      %v585 = vunpack.c.h.b16 %v355
      %v586 = vunpack.c.l.b16 %v356
      %v587 = vunpack.c.h.b16 %v356
      %v588 = vunpack.c.l.b16 %v357
      %v589 = vunpack.c.h.b16 %v357
      %v590 = vunpack.c.l.b16 %v358
      %v591 = vunpack.c.h.b16 %v358
      %v592 = vunpack.c.l.b16 %v359
      %v593 = vunpack.c.h.b16 %v359
      %v594 = vunpack.c.l.b16 %v360
      %v595 = vunpack.c.h.b16 %v360
      %v596 = vunpack.c.l.b16 %v361
      %v597 = vunpack.c.h.b16 %v361
      %v598 = vunpack.c.l.b16 %v362
      %v599 = vunpack.c.h.b16 %v362
      %v600 = vunpack.c.l.b16 %v363
      %v601 = vunpack.c.h.b16 %v363
      %v602 = vunpack.c.l.b16 %v364
      %v603 = vunpack.c.h.b16 %v364
      %v604 = vunpack.c.l.b16 %v365
      %v605 = vunpack.c.h.b16 %v365
      %v606 = vunpack.c.l.b16 %v366
      %v607 = vunpack.c.h.b16 %v366
      %v608 = vunpack.c.l.b16 %v367
      %v609 = vunpack.c.h.b16 %v367
      %v610 = vunpack.c.l.b16 %v368
      %v611 = vunpack.c.h.b16 %v368
      %v612 = vunpack.c.l.b16 %v369
      %v613 = vunpack.c.h.b16 %v369
      %v614 = vunpack.c.l.b16 %v370
      %v615 = vunpack.c.h.b16 %v370
      %v616 = vunpack.c.l.b16 %v371
      %v617 = vunpack.c.h.b16 %v371
      %v618 = vunpack.c.l.b16 %v372
      %v619 = vunpack.c.h.b16 %v372
      %v620 = vunpack.c.l.b16 %v373
      %v621 = vunpack.c.h.b16 %v373
      %v622 = vunpack.c.l.b16 %v374
      %v623 = vunpack.c.h.b16 %v374
      %v624 = vunpack.c.l.b16 %v375
      %v625 = vunpack.c.h.b16 %v375
      %v626 = vunpack.c.l.b16 %v376
      %v627 = vunpack.c.h.b16 %v376
      %v628 = vunpack.c.l.b16 %v377
      %v629 = vunpack.c.h.b16 %v377
      %v630 = vunpack.c.l.b16 %v378
      %v631 = vunpack.c.h.b16 %v378
      %v632 = vunpack.c.l.b16 %v379
      %v633 = vunpack.c.h.b16 %v379
      %v634 = vunpack.c.l.b16 %v380
      %v635 = vunpack.c.h.b16 %v380
      %v636 = vunpack.c.l.b16 %v381
      %v637 = vunpack.c.h.b16 %v381
      %v638 = vunpack.c.l.b16 %v382
      %v639 = vunpack.c.h.b16 %v382
      %v640 = vunpack.c.l.b16 %v383
      %v641 = vunpack.c.h.b16 %v383
      %v642 = vunpack.c.l.b16 %v384
      %v643 = vunpack.c.h.b16 %v384
      %v644 = vunpack.c.l.b16 %v385
      %v645 = vunpack.c.h.b16 %v385
      %v646 = vunpack.c.l.b16 %v386
      %v647 = vunpack.c.h.b16 %v386
      %v648 = vunpack.c.l.b16 %v387
      %v649 = vunpack.c.h.b16 %v387
      %v650 = vunpack.c.l.b16 %v388
      %v651 = vunpack.c.h.b16 %v388
      %v652 = vunpack.c.l.b16 %v389
      %v653 = vunpack.c.h.b16 %v389
      %v654 = vunpack.c.l.b16 %v390
      %v655 = vunpack.c.h.b16 %v390
      %v656 = vunpack.c.l.b16 %v391
      %v657 = vunpack.c.h.b16 %v391
      %v658 = vunpack.c.l.b16 %v392
      %v659 = vunpack.c.h.b16 %v392
      %v660 = vunpack.c.l.b16 %v393
      %v661 = vunpack.c.h.b16 %v393
      %v662 = vunpack.c.l.b16 %v394
      %v663 = vunpack.c.h.b16 %v394
      %v664 = vunpack.c.l.b16 %v395
      %v665 = vunpack.c.h.b16 %v395
      %v666 = vunpack.c.l.b16 %v396
      %v667 = vunpack.c.h.b16 %v396
      %v668 = vunpack.c.l.b16 %v397
      %v669 = vunpack.c.h.b16 %v397
      %v670 = vunpack.c.l.b16 %v398
      %v671 = vunpack.c.h.b16 %v398
      %v672 = vunpack.c.l.b16 %v399
      %v673 = vunpack.c.h.b16 %v399
      %v674 = vunpack.c.l.b16 %v400
      %v675 = vunpack.c.h.b16 %v400
      %v676 = vunpack.c.l.b16 %v401
      %v677 = vunpack.c.h.b16 %v401
      %v678 = vunpack.c.l.b16 %v402
      %v679 = vunpack.c.h.b16 %v402
      %v680 = vunpack.c.l.b16 %v403
      %v681 = vunpack.c.h.b16 %v403
      %v682 = vunpack.c.l.b16 %v404
      %v683 = vunpack.c.h.b16 %v404
      %v684 = vunpack.c.l.b16 %v405
      %v685 = vunpack.c.h.b16 %v405
      %v686 = vunpack.c.l.b16 %v406
      %v687 = vunpack.c.h.b16 %v406
      %v688 = vunpack.c.l.b16 %v407
      %v689 = vunpack.c.h.b16 %v407
      %v690 = vunpack.c.l.b16 %v408
      %v691 = vunpack.c.h.b16 %v408
      %v692 = vunpack.c.l.b16 %v409
      %v693 = vunpack.c.h.b16 %v409
      %v694 = vunpack.c.l.b16 %v410
      %v695 = vunpack.c.h.b16 %v410
      %v696 = vunpack.c.l.b16 %v411
      %v697 = vunpack.c.h.b16 %v411
      %v698 = vunpack.c.l.b16 %v412
      %v699 = vunpack.c.h.b16 %v412
      %v700 = vunpack.c.l.b16 %v413
      %v701 = vunpack.c.h.b16 %v413
      %v702 = vunpack.c.l.b16 %v414
      %v703 = vunpack.c.h.b16 %v414
      %v704 = vunpack.c.l.b16 %v415
      %v705 = vunpack.c.h.b16 %v415
      %v706 = vunpack.c.l.b16 %v416
      %v707 = vunpack.c.h.b16 %v416
      %v708 = vunpack.c.l.b16 %v417
      %v709 = vunpack.c.h.b16 %v417
      %v710 = vunpack.c.l.b16 %v418
      %v711 = vunpack.c.h.b16 %v418
      %v712 = vunpack.c.l.b16 %v419
      %v713 = vunpack.c.h.b16 %v419
      %v714 = vunpack.c.l.b16 %v420
      %v715 = vunpack.c.h.b16 %v420
      %v716 = vunpack.c.l.b16 %v421
      %v717 = vunpack.c.h.b16 %v421
      %v718 = vunpack.c.l.b16 %v422
      %v719 = vunpack.c.h.b16 %v422
      %v720 = vunpack.c.l.b16 %v423
      %v721 = vunpack.c.h.b16 %v423
      %v722 = vunpack.c.l.b16 %v424
      %v723 = vunpack.c.h.b16 %v424
      %v724 = vunpack.c.l.b16 %v425
      %v725 = vunpack.c.h.b16 %v425
      %v726 = vunpack.c.l.b16 %v426
      %v727 = vunpack.c.h.b16 %v426
      %v728 = vunpack.c.l.b16 %v427
      %v729 = vunpack.c.h.b16 %v427
      %v730 = vunpack.c.l.b16 %v428
      %v731 = vunpack.c.h.b16 %v428
      %v732 = vunpack.c.l.b16 %v429
      %v733 = vunpack.c.h.b16 %v429
      %v734 = vunpack.c.l.b16 %v430
      %v735 = vunpack.c.h.b16 %v430
      %v736 = vunpack.c.l.b16 %v431
      %v737 = vunpack.c.h.b16 %v431
      %v738 = vunpack.c.l.b16 %v432
      %v739 = vunpack.c.h.b16 %v432
      %v740 = vunpack.c.l.b16 %v433
      %v741 = vunpack.c.h.b16 %v433
      %v742 = vunpack.c.l.b16 %v434
      %v743 = vunpack.c.h.b16 %v434
      %v744 = vunpack.c.l.b16 %v435
      %v745 = vunpack.c.h.b16 %v435
      %v746 = vunpack.c.l.b16 %v436
      %v747 = vunpack.c.h.b16 %v436
      %v748 = vunpack.c.l.b16 %v437
      %v749 = vunpack.c.h.b16 %v437
      %v750 = vunpack.c.l.b16 %v438
      %v751 = vunpack.c.h.b16 %v438
      %v752 = vunpack.c.l.b16 %v439
      %v753 = vunpack.c.h.b16 %v439
      %v754 = vunpack.c.l.b16 %v440
      %v755 = vunpack.c.h.b16 %v440
      %v756 = vunpack.c.l.b16 %v441
      %v757 = vunpack.c.h.b16 %v441
      %v758 = vunpack.c.l.b16 %v442
      %v759 = vunpack.c.h.b16 %v442
      %v760 = vunpack.c.l.b16 %v443
      %v761 = vunpack.c.h.b16 %v443
      %v762 = vunpack.c.l.b16 %v444
      %v763 = vunpack.c.h.b16 %v444
      %v764 = vunpack.c.l.b16 %v445
      %v765 = vunpack.c.h.b16 %v445
      %v766 = vpack.c.b16 %v580, %v574
      %v767 = vpack.c.b16 %v581, %v575
      %v768 = vpack.c.b16 %v582, %v576
      %v769 = vpack.c.b16 %v583, %v577
      %v770 = vpack.c.b16 %v584, %v578
      %v771 = vpack.c.b16 %v585, %v579
      %v772 = vpack.c.b16 %v592, %v586
      %v773 = vpack.c.b16 %v593, %v587
      %v774 = vpack.c.b16 %v594, %v588
      %v775 = vpack.c.b16 %v595, %v589
      %v776 = vpack.c.b16 %v596, %v590
      %v777 = vpack.c.b16 %v597, %v591
      %v778 = vpack.c.b16 %v604, %v598
      %v779 = vpack.c.b16 %v605, %v599
      %v780 = vpack.c.b16 %v606, %v600
      %v781 = vpack.c.b16 %v607, %v601
      %v782 = vpack.c.b16 %v608, %v602
      %v783 = vpack.c.b16 %v609, %v603
      %v784 = vpack.c.b16 %v616, %v610
      %v785 = vpack.c.b16 %v617, %v611
      %v786 = vpack.c.b16 %v618, %v612
      %v787 = vpack.c.b16 %v619, %v613
      %v788 = vpack.c.b16 %v620, %v614
      %v789 = vpack.c.b16 %v621, %v615
      %v790 = vpack.c.b16 %v628, %v622
      %v791 = vpack.c.b16 %v629, %v623
      %v792 = vpack.c.b16 %v630, %v624
      %v793 = vpack.c.b16 %v631, %v625
      %v794 = vpack.c.b16 %v632, %v626
      %v795 = vpack.c.b16 %v633, %v627
      %v796 = vpack.c.b16 %v640, %v634
      %v797 = vpack.c.b16 %v641, %v635
      %v798 = vpack.c.b16 %v642, %v636
      %v799 = vpack.c.b16 %v643, %v637
      %v800 = vpack.c.b16 %v644, %v638
      %v801 = vpack.c.b16 %v645, %v639
      %v802 = vpack.c.b16 %v652, %v646
      %v803 = vpack.c.b16 %v653, %v647
      %v804 = vpack.c.b16 %v654, %v648
      %v805 = vpack.c.b16 %v655, %v649
      %v806 = vpack.c.b16 %v656, %v650
      %v807 = vpack.c.b16 %v657, %v651
      %v808 = vpack.c.b16 %v664, %v658
      %v809 = vpack.c.b16 %v665, %v659
      %v810 = vpack.c.b16 %v666, %v660
      %v811 = vpack.c.b16 %v667, %v661
      %v812 = vpack.c.b16 %v668, %v662
      %v813 = vpack.c.b16 %v669, %v663
      %v814 = vpack.c.b16 %v676, %v670
      %v815 = vpack.c.b16 %v677, %v671
      %v816 = vpack.c.b16 %v678, %v672
      %v817 = vpack.c.b16 %v679, %v673
      %v818 = vpack.c.b16 %v680, %v674
      %v819 = vpack.c.b16 %v681, %v675
      %v820 = vpack.c.b16 %v688, %v682
      %v821 = vpack.c.b16 %v689, %v683
      %v822 = vpack.c.b16 %v690, %v684
      %v823 = vpack.c.b16 %v691, %v685
      %v824 = vpack.c.b16 %v692, %v686
      %v825 = vpack.c.b16 %v693, %v687
      %v826 = vpack.c.b16 %v700, %v694
      %v827 = vpack.c.b16 %v701, %v695
      %v828 = vpack.c.b16 %v702, %v696
      %v829 = vpack.c.b16 %v703, %v697
      %v830 = vpack.c.b16 %v704, %v698
      %v831 = vpack.c.b16 %v705, %v699
      %v832 = vpack.c.b16 %v712, %v706
      %v833 = vpack.c.b16 %v713, %v707
      %v834 = vpack.c.b16 %v714, %v708
      %v835 = vpack.c.b16 %v715, %v709
      %v836 = vpack.c.b16 %v716, %v710
      %v837 = vpack.c.b16 %v717, %v711
      %v838 = vpack.c.b16 %v724, %v718
      %v839 = vpack.c.b16 %v725, %v719
      %v840 = vpack.c.b16 %v726, %v720
      %v841 = vpack.c.b16 %v727, %v721
      %v842 = vpack.c.b16 %v728, %v722
      %v843 = vpack.c.b16 %v729, %v723
      %v844 = vpack.c.b16 %v736, %v730
      %v845 = vpack.c.b16 %v737, %v731
      %v846 = vpack.c.b16 %v738, %v732
      %v847 = vpack.c.b16 %v739, %v733
      %v848 = vpack.c.b16 %v740, %v734
      %v849 = vpack.c.b16 %v741, %v735
      %v850 = vpack.c.b16 %v748, %v742
      %v851 = vpack.c.b16 %v749, %v743
      %v852 = vpack.c.b16 %v750, %v744
      %v853 = vpack.c.b16 %v751, %v745
      %v854 = vpack.c.b16 %v752, %v746
      %v855 = vpack.c.b16 %v753, %v747
      %v856 = vpack.c.b16 %v760, %v754
      %v857 = vpack.c.b16 %v761, %v755
      %v858 = vpack.c.b16 %v762, %v756
      %v859 = vpack.c.b16 %v763, %v757
      %v860 = vpack.c.b16 %v764, %v758
      %v861 = vpack.c.b16 %v765, %v759
      %958 = vmatprep.subr.bf16.mxu0 %v767
      %959 = vmatpush1.bf16.msra.mxu0 %v766
      %960 = vmatprep.subr.bf16.mxu0 %v773
      %961 = vmatpush1.bf16.msra.mxu0 %v772
      %962 = vmatprep.subr.bf16.mxu0 %v779
      %963 = vmatpush1.bf16.msra.mxu0 %v778
      %964 = vmatprep.subr.bf16.mxu0 %v785
      %965 = vmatpush1.bf16.msra.mxu0 %v784
      %966 = vmatprep.subr.bf16.mxu0 %v791
      %967 = vmatpush1.bf16.msra.mxu0 %v790
      %968 = vmatprep.subr.bf16.mxu0 %v797
      %969 = vmatpush1.bf16.msra.mxu0 %v796
      %970 = vmatprep.subr.bf16.mxu0 %v803
      %971 = vmatpush1.bf16.msra.mxu0 %v802
      %972 = vmatprep.subr.bf16.mxu0 %v809
      %973 = vmatpush1.bf16.msra.mxu0 %v808
      %974 = vmatprep.subr.bf16.mxu0 %v815
      %975 = vmatpush1.bf16.msra.mxu0 %v814
      %976 = vmatprep.subr.bf16.mxu0 %v821
      %977 = vmatpush1.bf16.msra.mxu0 %v820
      %978 = vmatprep.subr.bf16.mxu0 %v827
      %979 = vmatpush1.bf16.msra.mxu0 %v826
      %980 = vmatprep.subr.bf16.mxu0 %v833
      %981 = vmatpush1.bf16.msra.mxu0 %v832
      %982 = vmatprep.subr.bf16.mxu0 %v839
      %983 = vmatpush1.bf16.msra.mxu0 %v838
      %984 = vmatprep.subr.bf16.mxu0 %v845
      %985 = vmatpush1.bf16.msra.mxu0 %v844
      %986 = vmatprep.subr.bf16.mxu0 %v851
      %987 = vmatpush1.bf16.msra.mxu0 %v850
      %988 = vmatprep.subr.bf16.mxu0 %v857
      %989 = vmatpush1.bf16.msra.mxu0 %v856
      %990 = vmatprep.mubr.bf16.mxu0 %v347
      %991 = vmatmul.mubr.bf16.gmra.mrb[0].mxu0 %v346
      %v992 = vpop.f32.mrb[0].mxu0
      %v993 = vadd.f32 %v451, %v992
      %v994 = vpop.f32.mrb[0].mxu0
      %v995 = vadd.f32 %v455, %v994
      %v996 = vpop.f32.mrb[0].mxu0
      %v997 = vadd.f32 %v451, %v996
      %v998 = vpop.f32.mrb[0].mxu0
      %v999 = vadd.f32 %v455, %v998
      %1000 = vmatprep.mubr.bf16.mxu0 %v349
      %1001 = vmatmul.mubr.bf16.gmra.mrb[0].mxu0 %v348
      %v1002 = vpop.f32.mrb[0].mxu0
      %v1003 = vadd.f32 %v451, %v1002
      %v1004 = vpop.f32.mrb[0].mxu0
      %v1005 = vadd.f32 %v455, %v1004
      %v1006 = vpop.f32.mrb[0].mxu0
      %v1007 = vadd.f32 %v451, %v1006
      %v1008 = vpop.f32.mrb[0].mxu0
      %v1009 = vadd.f32 %v455, %v1008
      %1010 = vdwg.mxu0
      %1011 = vmatprep.subr.bf16.mxu0 %v769
      %1012 = vmatpush1.bf16.msra.mxu0 %v768
      %1013 = vmatprep.subr.bf16.mxu0 %v775
      %1014 = vmatpush1.bf16.msra.mxu0 %v774
      %1015 = vmatprep.subr.bf16.mxu0 %v781
      %1016 = vmatpush1.bf16.msra.mxu0 %v780
      %1017 = vmatprep.subr.bf16.mxu0 %v787
      %1018 = vmatpush1.bf16.msra.mxu0 %v786
      %1019 = vmatprep.subr.bf16.mxu0 %v793
      %1020 = vmatpush1.bf16.msra.mxu0 %v792
      %1021 = vmatprep.subr.bf16.mxu0 %v799
      %1022 = vmatpush1.bf16.msra.mxu0 %v798
      %1023 = vmatprep.subr.bf16.mxu0 %v805
      %1024 = vmatpush1.bf16.msra.mxu0 %v804
      %1025 = vmatprep.subr.bf16.mxu0 %v811
      %1026 = vmatpush1.bf16.msra.mxu0 %v810
      %1027 = vmatprep.subr.bf16.mxu0 %v817
      %1028 = vmatpush1.bf16.msra.mxu0 %v816
      %1029 = vmatprep.subr.bf16.mxu0 %v823
      %1030 = vmatpush1.bf16.msra.mxu0 %v822
      %1031 = vmatprep.subr.bf16.mxu0 %v829
      %1032 = vmatpush1.bf16.msra.mxu0 %v828
      %1033 = vmatprep.subr.bf16.mxu0 %v835
      %1034 = vmatpush1.bf16.msra.mxu0 %v834
      %1035 = vmatprep.subr.bf16.mxu0 %v841
      %1036 = vmatpush1.bf16.msra.mxu0 %v840
      %1037 = vmatprep.subr.bf16.mxu0 %v847
      %1038 = vmatpush1.bf16.msra.mxu0 %v846
      %1039 = vmatprep.subr.bf16.mxu0 %v853
      %1040 = vmatpush1.bf16.msra.mxu0 %v852
      %1041 = vmatprep.subr.bf16.mxu0 %v859
      %1042 = vmatpush1.bf16.msra.mxu0 %v858
      %1043 = vmatprep.mubr.bf16.mxu0 %v347
      %1044 = vmatmul.mubr.bf16.gmra.mrb[0].mxu0 %v346
      %v1045 = vpop.f32.mrb[0].mxu0
      %v1046 = vadd.f32 %v459, %v1045
      %v1047 = vpop.f32.mrb[0].mxu0
      %v1048 = vadd.f32 %v463, %v1047
      %v1049 = vpop.f32.mrb[0].mxu0
      %v1050 = vadd.f32 %v459, %v1049
      %v1051 = vpop.f32.mrb[0].mxu0
      %v1052 = vadd.f32 %v463, %v1051
      %1053 = vmatprep.mubr.bf16.mxu0 %v349
      %1054 = vmatmul.mubr.bf16.gmra.mrb[0].mxu0 %v348
      %v1055 = vpop.f32.mrb[0].mxu0
      %v1056 = vadd.f32 %v459, %v1055
      %v1057 = vpop.f32.mrb[0].mxu0
      %v1058 = vadd.f32 %v463, %v1057
      %v1059 = vpop.f32.mrb[0].mxu0
      %v1060 = vadd.f32 %v459, %v1059
      %v1061 = vpop.f32.mrb[0].mxu0
      %v1062 = vadd.f32 %v463, %v1061
      %1063 = vdwg.mxu0
      %1064 = vmatprep.subr.bf16.mxu0 %v771
      %1065 = vmatpush1.bf16.msra.mxu0 %v770
      %1066 = vmatprep.subr.bf16.mxu0 %v777
      %1067 = vmatpush1.bf16.msra.mxu0 %v776
      %1068 = vmatprep.subr.bf16.mxu0 %v783
      %1069 = vmatpush1.bf16.msra.mxu0 %v782
      %1070 = vmatprep.subr.bf16.mxu0 %v789
      %1071 = vmatpush1.bf16.msra.mxu0 %v788
      %1072 = vmatprep.subr.bf16.mxu0 %v795
      %1073 = vmatpush1.bf16.msra.mxu0 %v794
      %1074 = vmatprep.subr.bf16.mxu0 %v801
      %1075 = vmatpush1.bf16.msra.mxu0 %v800
      %1076 = vmatprep.subr.bf16.mxu0 %v807
      %1077 = vmatpush1.bf16.msra.mxu0 %v806
      %1078 = vmatprep.subr.bf16.mxu0 %v813
      %1079 = vmatpush1.bf16.msra.mxu0 %v812
      %1080 = vmatprep.subr.bf16.mxu0 %v819
      %1081 = vmatpush1.bf16.msra.mxu0 %v818
      %1082 = vmatprep.subr.bf16.mxu0 %v825
      %1083 = vmatpush1.bf16.msra.mxu0 %v824
      %1084 = vmatprep.subr.bf16.mxu0 %v831
      %1085 = vmatpush1.bf16.msra.mxu0 %v830
      %1086 = vmatprep.subr.bf16.mxu0 %v837
      %1087 = vmatpush1.bf16.msra.mxu0 %v836
      %1088 = vmatprep.subr.bf16.mxu0 %v843
      %1089 = vmatpush1.bf16.msra.mxu0 %v842
      %1090 = vmatprep.subr.bf16.mxu0 %v849
      %1091 = vmatpush1.bf16.msra.mxu0 %v848
      %1092 = vmatprep.subr.bf16.mxu0 %v855
      %1093 = vmatpush1.bf16.msra.mxu0 %v854
      %1094 = vmatprep.subr.bf16.mxu0 %v861
      %1095 = vmatpush1.bf16.msra.mxu0 %v860
      %1096 = vmatprep.mubr.bf16.mxu0 %v347
      %1097 = vmatmul.mubr.bf16.gmra.mrb[0].mxu0 %v346
      %v1098 = vpop.f32.mrb[0].mxu0
      %v1099 = vadd.f32 %v467, %v1098
      %v1100 = vpop.f32.mrb[0].mxu0
      %v1101 = vadd.f32 %v471, %v1100
      %v1102 = vpop.f32.mrb[0].mxu0
      %v1103 = vadd.f32 %v467, %v1102
      %v1104 = vpop.f32.mrb[0].mxu0
      %v1105 = vadd.f32 %v471, %v1104
      %1106 = vmatprep.mubr.bf16.mxu0 %v349
      %1107 = vmatmul.mubr.bf16.gmra.mrb[0].mxu0 %v348
      %v1108 = vpop.f32.mrb[0].mxu0
      %v1109 = vadd.f32 %v467, %v1108
      %v1110 = vpop.f32.mrb[0].mxu0
      %v1111 = vadd.f32 %v471, %v1110
      %v1112 = vpop.f32.mrb[0].mxu0
      %v1113 = vadd.f32 %v467, %v1112
      %v1114 = vpop.f32.mrb[0].mxu0
      %v1115 = vadd.f32 %v471, %v1114
      %1116 = vdwg.mxu0
      %v1117 = vpack.c.bf16 %v997, %v993
      %v1118 = vpack.c.bf16 %v999, %v995
      %v1119 = vpack.c.bf16 %v1050, %v1046
      %v1120 = vpack.c.bf16 %v1052, %v1048
      %v1121 = vpack.c.bf16 %v1103, %v1099
      %v1122 = vpack.c.bf16 %v1105, %v1101
      %v1123 = vpack.c.bf16 %v1007, %v1003
      %v1124 = vpack.c.bf16 %v1009, %v1005
      %v1125 = vpack.c.bf16 %v1060, %v1056
      %v1126 = vpack.c.bf16 %v1062, %v1058
      %v1127 = vpack.c.bf16 %v1113, %v1109
      %v1128 = vpack.c.bf16 %v1115, %v1111
      %v1141 = vunpack.c.l.b16 %v1117
      %v1142 = vunpack.c.l.b16 %v1118
      %v1143 = vunpack.c.l.b16 %v1119
      %v1144 = vunpack.c.l.b16 %v1120
      %v1145 = vunpack.c.l.b16 %v1121
      %v1146 = vunpack.c.l.b16 %v1122
      %v1147 = vunpack.c.h.b16 %v1117
      %v1148 = vunpack.c.h.b16 %v1118
      %v1149 = vunpack.c.h.b16 %v1119
      %v1150 = vunpack.c.h.b16 %v1120
      %v1151 = vunpack.c.h.b16 %v1121
      %v1152 = vunpack.c.h.b16 %v1122
      %v1153 = vunpack.c.l.b16 %v1123
      %v1154 = vunpack.c.l.b16 %v1124
      %v1155 = vunpack.c.l.b16 %v1125
      %v1156 = vunpack.c.l.b16 %v1126
      %v1157 = vunpack.c.l.b16 %v1127
      %v1158 = vunpack.c.l.b16 %v1128
      %v1159 = vunpack.c.h.b16 %v1123
      %v1160 = vunpack.c.h.b16 %v1124
      %v1161 = vunpack.c.h.b16 %v1125
      %v1162 = vunpack.c.h.b16 %v1126
      %v1163 = vunpack.c.h.b16 %v1127
      %v1164 = vunpack.c.h.b16 %v1128
      %v1165 = vpack.c.b16 %v1142, %v1141
      %v1166 = vpack.c.b16 %v1144, %v1143
      %v1167 = vpack.c.b16 %v1146, %v1145
      %v1168 = vpack.c.b16 %v1148, %v1147
      %v1169 = vpack.c.b16 %v1150, %v1149
      %v1170 = vpack.c.b16 %v1152, %v1151
      %v1171 = vpack.c.b16 %v1154, %v1153
      %v1172 = vpack.c.b16 %v1156, %v1155
      %v1173 = vpack.c.b16 %v1158, %v1157
      %v1174 = vpack.c.b16 %v1160, %v1159
      %v1175 = vpack.c.b16 %v1162, %v1161
      %v1176 = vpack.c.b16 %v1164, %v1163
      %1189 = vst [vmem:[%s231] sm:$0xff] %v1165
      %1190 = vst [vmem:[%s231 + $0x8] sm:$0xff] %v1166
      %1191 = vst [vmem:[%s231 + $0x10] sm:$0xff] %v1167
      %1192 = vst [vmem:[%s231 + $0x18] sm:$0xff] %v1168
      %1193 = vst [vmem:[%s231 + $0x20] sm:$0xff] %v1169
      %1194 = vst [vmem:[%s231 + $0x28] sm:$0xff] %v1170
      %1195 = vst [vmem:[%s231 + $0x30] sm:$0xff] %v1171
      %1196 = vst [vmem:[%s231 + $0x38] sm:$0xff] %v1172
      %1197 = vst [vmem:[%s231 + $0x40] sm:$0xff] %v1173
      %1198 = vst [vmem:[%s231 + $0x48] sm:$0xff] %v1174
      %1199 = vst [vmem:[%s231 + $0x50] sm:$0xff] %v1175
      %1200 = vst [vmem:[%s231 + $0x58] sm:$0xff] %v1176
      %s1201 = smul.u32 4, %s16
      %p1202 = scmp.lt.s32.totalorder %s1201, 7
      %s1203 = scalar_select %p1202, %s1201, 7
      %s1204 = smul.addr %s1203, 6
      %s1205 = smul.addr %s1204, 4
      %s1206 = scalar_lea.vmem %s5, %s1205
      // Predicated region
      $region41: #{gpt_forward.9} parent=39 // pred_check
        %p1207 = pneg %p144
      $region42: #{gpt_forward.9} parent=39 // pred_check_branch
        %1209 = sbr.rel (%p1207) target = $region44
      $region43: #{gpt_forward.9} parent=39 // pred_region
        %s1210 = smul.u32 4, %s16
      $region44: #{gpt_forward.9} parent=39 // pred_fallthru
        _
    $region40: #{gpt_forward.9} parent=5 // pred_fallthru
      _
    %p1211 = scmp.le.s32.totalorder 2, %s11
    // Predicated region
    $region45: #{gpt_forward.9} parent=5 // pred_check
      %p1212 = pneg %p1211
    $region46: #{gpt_forward.9} parent=5 // pred_check_branch
      %1214 = sbr.rel (%p1212) target = $region48
    $region47: #{gpt_forward.9} parent=5 // pred_region
      %s1215 = ssub.s32 %s11, 2
      // Predicated region
      $region49: #{gpt_forward.9} parent=47 // pred_check
        %p1216 = pneg %p150
      $region50: #{gpt_forward.9} parent=47 // pred_check_branch
        %1218 = sbr.rel (%p1216) target = $region52
      $region51: #{gpt_forward.9} parent=47 // pred_region
        %s1219 = smul.u32 4, %s17
        %p1220 = scmp.lt.s32.totalorder %s1219, 7
        %s1221 = scalar_select %p1220, %s1219, 7
        %s1222 = smul.addr %s1221, 6
        %s1223 = smul.addr %s1222, 4
        %s1224 = scalar_lea.vmem %s5, %s1223
      $region52: #{gpt_forward.9} parent=47 // pred_fallthru
        _
    $region48: #{gpt_forward.9} parent=5 // pred_fallthru
      _
  $region6: #{gpt_forward.9} parent=0 // loop_footer
    %s15 = sadd.s32 1, %s11
  $region7: #{gpt_forward.9} parent=0 // loop_footer_branch
    %10 = sbr.rel target = $region3
  $region8: #{gpt_forward.9} parent=0 // loop_exit
    _

// kernel: gpt_forward.11
$region0: #{gpt_forward.11}
  #allocation0 [shape = 'u32[]', space=smem, size = 0x4, offset = 0x4, fixed_abs, tag = 'smem constant byte address 0x4 - core index']
  #allocation1 [shape = 'u32[144,128]{1,0:T(1,128)}', space=vmem, size = 0x12000, scoped, tag = 'internal scratch']
  %s0 = inlined_call_operand.vmem [shape: f32[64,256], index: 0, kind: input, shape index: {}]
  %s1 = inlined_call_operand.vmem [shape: f32[1,256], index: 1, kind: input, shape index: {}]
  %s2 = inlined_call_operand.vmem [shape: f32[1,256], index: 2, kind: input, shape index: {}]
  %s3 = inlined_call_operand.vmem [shape: bf16[256,1024], index: 3, kind: input, shape index: {}]
  %s4 = inlined_call_operand.vmem [shape: f32[1,1024], index: 4, kind: input, shape index: {}]
  %s5 = inlined_call_operand.vmem [shape: bf16[64,1024], index: 5, kind: output, shape index: {}]
  %s6 = sld [smem:[#allocation0]]
  $region53: #{gpt_forward.11} parent=0
    _
  %s8 = ssub.s32 1, %s6
  %s9 = scalar_select 0, %s8, %s6
  loop: start=0, step=1, limit=4
  $region2: #{gpt_forward.11} parent=0 // loop_pre_header
    _
  $region3: #{gpt_forward.11} parent=0 // loop_header
    %s11 = sphi 0, %s15
    %p12 = scmp.ge.s32.totalorder %s11, 4
    %s21 = sphi 0, %s23
    %s24 = sphi 0, %s21
    %s25 = sphi 0, %s24
    %s41 = sphi 0, %s25
    %s45 = sphi 0, %s45
    %s47 = sphi 0, %s45
    %s48 = sphi 0, %s47
    %s62 = sphi 0, %s48
    %s66 = sphi 0, %s66
    %s68 = sphi 0, %s66
    %s69 = sphi 0, %s68
    %s83 = sphi 0, %s69
    %s87 = sphi 0, %s87
    %s89 = sphi 0, %s87
    %s90 = sphi 0, %s89
    %s104 = sphi 0, %s90
    %s108 = sphi 0, %s108
    %s110 = sphi 0, %s108
    %s111 = sphi 0, %s110
    %s125 = sphi 0, %s111
    %s131 = sphi 0, %s133
    %s134 = sphi 0, %s131
    %s135 = sphi 0, %s134
    %s151 = sphi 0, %s135
  $region4: #{gpt_forward.11} parent=0 // loop_header_branch
    %14 = sbr.rel (%p12) target = $region8
  $region5: #{gpt_forward.11} parent=0 // loop_body
    %s16 = ssub.s32 %s11, 1
    %s17 = ssub.s32 %s11, 2
    %s18 = sadd.s32 %s11, 1
    %s19 = ssub.s32 %s11, %s18
    %p20 = scmp.eq.s32.totalorder %s19, 0
    %s22 = sadd.s32 %s21, 1
    %s23 = scalar_select %p20, %s21, %s22
    %p26 = pneg %p20
    %p27 = scmp.eq.s32.totalorder %s11, 1
    %p28 = por %p26, %p27
    %p29 = scmp.ne.s32.totalorder %s21, %s24
    %p30 = scmp.eq.s32.totalorder %s11, 0
    %p31 = por %p29, %p30
    %p32 = scmp.ne.s32.totalorder %s21, %s24
    %p33 = scmp.eq.s32.totalorder %s16, 1
    %p34 = por %p32, %p33
    %p35 = scmp.ne.s32.totalorder %s24, %s25
    %p36 = scmp.eq.s32.totalorder %s16, 0
    %p37 = por %p35, %p36
    %p38 = scmp.ne.s32.totalorder %s24, %s25
    %p39 = scmp.eq.s32.totalorder %s17, 1
    %p40 = por %p38, %p39
    %p42 = scmp.ne.s32.totalorder %s25, %s41
    %p43 = scmp.eq.s32.totalorder %s17, 0
    %p44 = por %p42, %p43
    %s46 = sadd.s32 %s45, 1
    %p49 = scmp.eq.s32.totalorder %s11, 1
    %p50 = scmp.ne.s32.totalorder %s45, %s47
    %p51 = scmp.eq.s32.totalorder %s11, 0
    %p52 = por %p50, %p51
    %p53 = scmp.ne.s32.totalorder %s45, %s47
    %p54 = scmp.eq.s32.totalorder %s16, 1
    %p55 = por %p53, %p54
    %p56 = scmp.ne.s32.totalorder %s47, %s48
    %p57 = scmp.eq.s32.totalorder %s16, 0
    %p58 = por %p56, %p57
    %p59 = scmp.ne.s32.totalorder %s47, %s48
    %p60 = scmp.eq.s32.totalorder %s17, 1
    %p61 = por %p59, %p60
    %p63 = scmp.ne.s32.totalorder %s48, %s62
    %p64 = scmp.eq.s32.totalorder %s17, 0
    %p65 = por %p63, %p64
    %s67 = sadd.s32 %s66, 1
    %p70 = scmp.eq.s32.totalorder %s11, 1
    %p71 = scmp.ne.s32.totalorder %s66, %s68
    %p72 = scmp.eq.s32.totalorder %s11, 0
    %p73 = por %p71, %p72
    %p74 = scmp.ne.s32.totalorder %s66, %s68
    %p75 = scmp.eq.s32.totalorder %s16, 1
    %p76 = por %p74, %p75
    %p77 = scmp.ne.s32.totalorder %s68, %s69
    %p78 = scmp.eq.s32.totalorder %s16, 0
    %p79 = por %p77, %p78
    %p80 = scmp.ne.s32.totalorder %s68, %s69
    %p81 = scmp.eq.s32.totalorder %s17, 1
    %p82 = por %p80, %p81
    %p84 = scmp.ne.s32.totalorder %s69, %s83
    %p85 = scmp.eq.s32.totalorder %s17, 0
    %p86 = por %p84, %p85
    %s88 = sadd.s32 %s87, 1
    %p91 = scmp.eq.s32.totalorder %s11, 1
    %p92 = scmp.ne.s32.totalorder %s87, %s89
    %p93 = scmp.eq.s32.totalorder %s11, 0
    %p94 = por %p92, %p93
    %p95 = scmp.ne.s32.totalorder %s87, %s89
    %p96 = scmp.eq.s32.totalorder %s16, 1
    %p97 = por %p95, %p96
    %p98 = scmp.ne.s32.totalorder %s89, %s90
    %p99 = scmp.eq.s32.totalorder %s16, 0
    %p100 = por %p98, %p99
    %p101 = scmp.ne.s32.totalorder %s89, %s90
    %p102 = scmp.eq.s32.totalorder %s17, 1
    %p103 = por %p101, %p102
    %p105 = scmp.ne.s32.totalorder %s90, %s104
    %p106 = scmp.eq.s32.totalorder %s17, 0
    %p107 = por %p105, %p106
    %s109 = sadd.s32 %s108, 1
    %p112 = scmp.eq.s32.totalorder %s11, 1
    %p113 = scmp.ne.s32.totalorder %s108, %s110
    %p114 = scmp.eq.s32.totalorder %s11, 0
    %p115 = por %p113, %p114
    %p116 = scmp.ne.s32.totalorder %s108, %s110
    %p117 = scmp.eq.s32.totalorder %s16, 1
    %p118 = por %p116, %p117
    %p119 = scmp.ne.s32.totalorder %s110, %s111
    %p120 = scmp.eq.s32.totalorder %s16, 0
    %p121 = por %p119, %p120
    %p122 = scmp.ne.s32.totalorder %s110, %s111
    %p123 = scmp.eq.s32.totalorder %s17, 1
    %p124 = por %p122, %p123
    %p126 = scmp.ne.s32.totalorder %s111, %s125
    %p127 = scmp.eq.s32.totalorder %s17, 0
    %p128 = por %p126, %p127
    %s129 = ssub.s32 %s11, %s18
    %p130 = scmp.eq.s32.totalorder %s129, 0
    %s132 = sadd.s32 %s131, 1
    %s133 = scalar_select %p130, %s131, %s132
    %p136 = pneg %p130
    %p137 = scmp.eq.s32.totalorder %s11, 1
    %p138 = por %p136, %p137
    %p139 = scmp.ne.s32.totalorder %s131, %s134
    %p140 = scmp.eq.s32.totalorder %s11, 0
    %p141 = por %p139, %p140
    %p142 = scmp.ne.s32.totalorder %s131, %s134
    %p143 = scmp.eq.s32.totalorder %s16, 1
    %p144 = por %p142, %p143
    %p145 = scmp.ne.s32.totalorder %s134, %s135
    %p146 = scmp.eq.s32.totalorder %s16, 0
    %p147 = por %p145, %p146
    %p148 = scmp.ne.s32.totalorder %s134, %s135
    %p149 = scmp.eq.s32.totalorder %s17, 1
    %p150 = por %p148, %p149
    %p152 = scmp.ne.s32.totalorder %s135, %s151
    %p153 = scmp.eq.s32.totalorder %s17, 0
    %p154 = por %p152, %p153
    %p155 = scmp.le.s32.totalorder 1, %s11
    %p156 = scmp.lt.s32.totalorder %s11, 3
    %p157 = pnand %p155, %p156
    %p158 = pneg %p157
    // Predicated region
    $region9: #{gpt_forward.11} parent=5 // pred_check
      _
    $region10: #{gpt_forward.11} parent=5 // pred_check_branch
      %160 = sbr.rel (%p157) target = $region12
    $region11: #{gpt_forward.11} parent=5 // pred_region
      %s161 = ssub.s32 %s11, 1
      // Predicated region
      $region13: #{gpt_forward.11} parent=11 // pred_check
        %p162 = pneg %p58
      $region14: #{gpt_forward.11} parent=11 // pred_check_branch
        %164 = sbr.rel (%p162) target = $region16
      $region15: #{gpt_forward.11} parent=11 // pred_region
        _
      $region16: #{gpt_forward.11} parent=11 // pred_fallthru
        _
      // Predicated region
      $region17: #{gpt_forward.11} parent=11 // pred_check
        %p165 = pneg %p79
      $region18: #{gpt_forward.11} parent=11 // pred_check_branch
        %167 = sbr.rel (%p165) target = $region20
      $region19: #{gpt_forward.11} parent=11 // pred_region
        _
      $region20: #{gpt_forward.11} parent=11 // pred_fallthru
        _
      // Predicated region
      $region21: #{gpt_forward.11} parent=11 // pred_check
        %p168 = pneg %p100
      $region22: #{gpt_forward.11} parent=11 // pred_check_branch
        %170 = sbr.rel (%p168) target = $region24
      $region23: #{gpt_forward.11} parent=11 // pred_region
        _
      $region24: #{gpt_forward.11} parent=11 // pred_fallthru
        _
      // Predicated region
      $region25: #{gpt_forward.11} parent=11 // pred_check
        %p171 = pneg %p121
      $region26: #{gpt_forward.11} parent=11 // pred_check_branch
        %173 = sbr.rel (%p171) target = $region28
      $region27: #{gpt_forward.11} parent=11 // pred_region
        _
      $region28: #{gpt_forward.11} parent=11 // pred_fallthru
        _
    $region12: #{gpt_forward.11} parent=5 // pred_fallthru
      _
    %p174 = scmp.lt.s32.totalorder %s11, 2
    // Predicated region
    $region29: #{gpt_forward.11} parent=5 // pred_check
      %p175 = pneg %p174
    $region30: #{gpt_forward.11} parent=5 // pred_check_branch
      %177 = sbr.rel (%p175) target = $region32
    $region31: #{gpt_forward.11} parent=5 // pred_region
      // Predicated region
      $region33: #{gpt_forward.11} parent=31 // pred_check
        %p178 = pneg %p31
      $region34: #{gpt_forward.11} parent=31 // pred_check_branch
        %180 = sbr.rel (%p178) target = $region36
      $region35: #{gpt_forward.11} parent=31 // pred_region
        %s181 = smul.u32 4, %s11
        %p182 = scmp.lt.s32.totalorder %s181, 7
        %s183 = scalar_select %p182, %s181, 7
        %s184 = smul.addr %s183, 2
        %s185 = smul.addr %s184, 8
        %s186 = scalar_lea.vmem %s0, %s185
        %s187 = smul.u32 4, %s11
      $region36: #{gpt_forward.11} parent=31 // pred_fallthru
        _
    $region32: #{gpt_forward.11} parent=5 // pred_fallthru
      _
    %p188 = scmp.le.s32.totalorder 1, %s11
    %p189 = scmp.lt.s32.totalorder %s11, 3
    %p190 = pnand %p188, %p189
    %p191 = pneg %p190
    // Predicated region
    $region37: #{gpt_forward.11} parent=5 // pred_check
      _
    $region38: #{gpt_forward.11} parent=5 // pred_check_branch
      %193 = sbr.rel (%p190) target = $region40
    $region39: #{gpt_forward.11} parent=5 // pred_region
      %s194 = ssub.s32 %s11, 1
      %s195 = smul.u32 4, %s16
      %p196 = scmp.lt.s32.totalorder %s195, 7
      %s197 = scalar_select %p196, %s195, 7
      %s198 = smul.addr %s197, 2
      %s199 = smul.addr %s198, 8
      %s200 = scalar_lea.vmem %s0, %s199
      %p201 = pneg %p37
      %p202 = pneg %p34
      %p203 = pneg %p58
      %p204 = pneg %p55
      %p205 = pneg %p79
      %p206 = pneg %p76
      %p207 = pneg %p100
      %p208 = pneg %p97
      %p209 = pneg %p121
      %p210 = pneg %p118
      %p211 = pneg %p147
      %p212 = pneg %p144
      %s213 = smul.u32 4, %s16
      %p214 = scmp.lt.s32.totalorder %s213, 7
      %s215 = scalar_select %p214, %s213, 7
      %s216 = smul.addr %s215, 8
      %s217 = smul.addr %s216, 4
      %s218 = scalar_lea.vmem %s5, %s217
      %s219 = smul.u32 4, %s16
      %p220 = scmp.lt.s32.totalorder %s219, 7
      %s221 = scalar_select %p220, %s219, 7
      %s222 = smul.addr %s221, 2
      %s223 = smul.addr %s222, 8
      %s224 = scalar_lea.vmem %s0, %s223
      %s225 = smul.u32 4, %s16
      %s226 = smul.u32 4, %s16
      %p227 = scmp.lt.s32.totalorder %s226, 7
      %s228 = scalar_select %p227, %s226, 7
      %s229 = smul.addr %s228, 8
      %s230 = smul.addr %s229, 4
      %s231 = scalar_lea.vmem %s5, %s230
      %s232 = smul.u32 4, %s16
      %v233 = vld [vmem:[%s224] sm:$0xff]
      %v234 = vld [vmem:[%s224 + $0x8] sm:$0xff]
      %v235 = vld [vmem:[%s224 + $0x10] sm:$0xff]
      %v236 = vld [vmem:[%s224 + $0x18] sm:$0xff]
      %v237 = vld [vmem:[%s224 + $0x20] sm:$0xff]
      %v238 = vld [vmem:[%s224 + $0x28] sm:$0xff]
      %v239 = vld [vmem:[%s224 + $0x30] sm:$0xff]
      %v240 = vld [vmem:[%s224 + $0x38] sm:$0xff]
      %v241 = vadd.f32 %v233, %v234
      %242 = vadd.xlane.f32.xlu0 %v241
      %v243 = vpop.xlane.xlu0 %242
      %v244 = vadd.f32 %v235, %v236
      %245 = vadd.xlane.f32.xlu0 %v244
      %v246 = vpop.xlane.xlu0 %245
      %v247 = vadd.f32 %v237, %v238
      %248 = vadd.xlane.f32.xlu0 %v247
      %v249 = vpop.xlane.xlu0 %248
      %v250 = vadd.f32 %v239, %v240
      %251 = vadd.xlane.f32.xlu0 %v250
      %v252 = vpop.xlane.xlu0 %251
      %v253 = vrcp.pop 256.0
      %v254 = vmul.f32 %v243, %v253
      %v255 = vmul.f32 %v246, %v253
      %v256 = vmul.f32 %v249, %v253
      %v257 = vmul.f32 %v252, %v253
      %v258 = vsub.f32 %v233, %v254
      %v259 = vsub.f32 %v234, %v254
      %v260 = vsub.f32 %v235, %v255
      %v261 = vsub.f32 %v236, %v255
      %v262 = vsub.f32 %v237, %v256
      %v263 = vsub.f32 %v238, %v256
      %v264 = vsub.f32 %v239, %v257
      %v265 = vsub.f32 %v240, %v257
      %v266 = vmul.f32 %v258, %v258
      %v267 = vmul.f32 %v259, %v259
      %v268 = vmul.f32 %v260, %v260
      %v269 = vmul.f32 %v261, %v261
      %v270 = vmul.f32 %v262, %v262
      %v271 = vmul.f32 %v263, %v263
      %v272 = vmul.f32 %v264, %v264
      %v273 = vmul.f32 %v265, %v265
      %v274 = vadd.f32 %v266, %v267
      %275 = vadd.xlane.f32.xlu0 %v274
      %v276 = vpop.xlane.xlu0 %275
      %v277 = vadd.f32 %v268, %v269
      %278 = vadd.xlane.f32.xlu0 %v277
      %v279 = vpop.xlane.xlu0 %278
      %v280 = vadd.f32 %v270, %v271
      %281 = vadd.xlane.f32.xlu0 %v280
      %v282 = vpop.xlane.xlu0 %281
      %v283 = vadd.f32 %v272, %v273
      %284 = vadd.xlane.f32.xlu0 %v283
      %v285 = vpop.xlane.xlu0 %284
      %v286 = vmul.f32 %v276, %v253
      %v287 = vmul.f32 %v279, %v253
      %v288 = vmul.f32 %v282, %v253
      %v289 = vmul.f32 %v285, %v253
      %v290 = vadd.f32 %v286, 1e-05
      %v291 = vadd.f32 %v287, 1e-05
      %v292 = vadd.f32 %v288, 1e-05
      %v293 = vadd.f32 %v289, 1e-05
      %v294 = vrsqrt.pop %v290
      %v295 = vrsqrt.pop %v291
      %v296 = vrsqrt.pop %v292
      %v297 = vrsqrt.pop %v293
      %v298 = vmul.f32 %v258, %v294
      %v299 = vmul.f32 %v259, %v294
      %v300 = vmul.f32 %v260, %v295
      %v301 = vmul.f32 %v261, %v295
      %v302 = vmul.f32 %v262, %v296
      %v303 = vmul.f32 %v263, %v296
      %v304 = vmul.f32 %v264, %v297
      %v305 = vmul.f32 %v265, %v297
      %v306 = vld [vmem:[%s1] sm:$0x3]
      %v308 = vlaneseq
      %v309 = vshrl.u32 %v308, 7
      %v310 = vsub.s32 0, %v309
      %v311 = vrot.slane %v306, %v310
      %v312 = vlaneseq
      %v313 = vshrl.u32 %v312, 7
      %v314 = vsub.s32 1, %v313
      %v315 = vrot.slane %v306, %v314
      %v318 = vmul.f32 %v298, %v311
      %v319 = vmul.f32 %v299, %v315
      %v320 = vmul.f32 %v300, %v311
      %v321 = vmul.f32 %v301, %v315
      %v322 = vmul.f32 %v302, %v311
      %v323 = vmul.f32 %v303, %v315
      %v324 = vmul.f32 %v304, %v311
      %v325 = vmul.f32 %v305, %v315
      %v326 = vld [vmem:[%s2] sm:$0x3]
      %v328 = vlaneseq
      %v329 = vshrl.u32 %v328, 7
      %v330 = vsub.s32 0, %v329
      %v331 = vrot.slane %v326, %v330
      %v332 = vlaneseq
      %v333 = vshrl.u32 %v332, 7
      %v334 = vsub.s32 1, %v333
      %v335 = vrot.slane %v326, %v334
      %v338 = vadd.f32 %v318, %v331
      %v339 = vadd.f32 %v319, %v335
      %v340 = vadd.f32 %v320, %v331
      %v341 = vadd.f32 %v321, %v335
      %v342 = vadd.f32 %v322, %v331
      %v343 = vadd.f32 %v323, %v335
      %v344 = vadd.f32 %v324, %v331
      %v345 = vadd.f32 %v325, %v335
      %v346 = vpack.c.bf16 %v340, %v338
      %v347 = vpack.c.bf16 %v341, %v339
      %v348 = vpack.c.bf16 %v344, %v342
      %v349 = vpack.c.bf16 %v345, %v343
      %v350 = vld [vmem:[%s3] sm:$0xff]
      %v351 = vld [vmem:[%s3 + $0x8] sm:$0xff]
      %v352 = vld [vmem:[%s3 + $0x10] sm:$0xff]
      %v353 = vld [vmem:[%s3 + $0x18] sm:$0xff]
      %v354 = vld [vmem:[%s3 + $0x20] sm:$0xff]
      %v355 = vld [vmem:[%s3 + $0x28] sm:$0xff]
      %v356 = vld [vmem:[%s3 + $0x30] sm:$0xff]
      %v357 = vld [vmem:[%s3 + $0x38] sm:$0xff]
      %v358 = vld [vmem:[%s3 + $0x40] sm:$0xff]
      %v359 = vld [vmem:[%s3 + $0x48] sm:$0xff]
      %v360 = vld [vmem:[%s3 + $0x50] sm:$0xff]
      %v361 = vld [vmem:[%s3 + $0x58] sm:$0xff]
      %v362 = vld [vmem:[%s3 + $0x60] sm:$0xff]
      %v363 = vld [vmem:[%s3 + $0x68] sm:$0xff]
      %v364 = vld [vmem:[%s3 + $0x70] sm:$0xff]
      %v365 = vld [vmem:[%s3 + $0x78] sm:$0xff]
      %v366 = vld [vmem:[%s3 + $0x80] sm:$0xff]
      %v367 = vld [vmem:[%s3 + $0x88] sm:$0xff]
      %v368 = vld [vmem:[%s3 + $0x90] sm:$0xff]
      %v369 = vld [vmem:[%s3 + $0x98] sm:$0xff]
      %v370 = vld [vmem:[%s3 + $0xa0] sm:$0xff]
      %v371 = vld [vmem:[%s3 + $0xa8] sm:$0xff]
      %v372 = vld [vmem:[%s3 + $0xb0] sm:$0xff]
      %v373 = vld [vmem:[%s3 + $0xb8] sm:$0xff]
      %v374 = vld [vmem:[%s3 + $0xc0] sm:$0xff]
      %v375 = vld [vmem:[%s3 + $0xc8] sm:$0xff]
      %v376 = vld [vmem:[%s3 + $0xd0] sm:$0xff]
      %v377 = vld [vmem:[%s3 + $0xd8] sm:$0xff]
      %v378 = vld [vmem:[%s3 + $0xe0] sm:$0xff]
      %v379 = vld [vmem:[%s3 + $0xe8] sm:$0xff]
      %v380 = vld [vmem:[%s3 + $0xf0] sm:$0xff]
      %v381 = vld [vmem:[%s3 + $0xf8] sm:$0xff]
      %v382 = vld [vmem:[%s3 + $0x100] sm:$0xff]
      %v383 = vld [vmem:[%s3 + $0x108] sm:$0xff]
      %v384 = vld [vmem:[%s3 + $0x110] sm:$0xff]
      %v385 = vld [vmem:[%s3 + $0x118] sm:$0xff]
      %v386 = vld [vmem:[%s3 + $0x120] sm:$0xff]
      %v387 = vld [vmem:[%s3 + $0x128] sm:$0xff]
      %v388 = vld [vmem:[%s3 + $0x130] sm:$0xff]
      %v389 = vld [vmem:[%s3 + $0x138] sm:$0xff]
      %v390 = vld [vmem:[%s3 + $0x140] sm:$0xff]
      %v391 = vld [vmem:[%s3 + $0x148] sm:$0xff]
      %v392 = vld [vmem:[%s3 + $0x150] sm:$0xff]
      %v393 = vld [vmem:[%s3 + $0x158] sm:$0xff]
      %v394 = vld [vmem:[%s3 + $0x160] sm:$0xff]
      %v395 = vld [vmem:[%s3 + $0x168] sm:$0xff]
      %v396 = vld [vmem:[%s3 + $0x170] sm:$0xff]
      %v397 = vld [vmem:[%s3 + $0x178] sm:$0xff]
      %v398 = vld [vmem:[%s3 + $0x180] sm:$0xff]
      %v399 = vld [vmem:[%s3 + $0x188] sm:$0xff]
      %v400 = vld [vmem:[%s3 + $0x190] sm:$0xff]
      %v401 = vld [vmem:[%s3 + $0x198] sm:$0xff]
      %v402 = vld [vmem:[%s3 + $0x1a0] sm:$0xff]
      %v403 = vld [vmem:[%s3 + $0x1a8] sm:$0xff]
      %v404 = vld [vmem:[%s3 + $0x1b0] sm:$0xff]
      %v405 = vld [vmem:[%s3 + $0x1b8] sm:$0xff]
      %v406 = vld [vmem:[%s3 + $0x1c0] sm:$0xff]
      %v407 = vld [vmem:[%s3 + $0x1c8] sm:$0xff]
      %v408 = vld [vmem:[%s3 + $0x1d0] sm:$0xff]
      %v409 = vld [vmem:[%s3 + $0x1d8] sm:$0xff]
      %v410 = vld [vmem:[%s3 + $0x1e0] sm:$0xff]
      %v411 = vld [vmem:[%s3 + $0x1e8] sm:$0xff]
      %v412 = vld [vmem:[%s3 + $0x1f0] sm:$0xff]
      %v413 = vld [vmem:[%s3 + $0x1f8] sm:$0xff]
      %v414 = vld [vmem:[%s3 + $0x200] sm:$0xff]
      %v415 = vld [vmem:[%s3 + $0x208] sm:$0xff]
      %v416 = vld [vmem:[%s3 + $0x210] sm:$0xff]
      %v417 = vld [vmem:[%s3 + $0x218] sm:$0xff]
      %v418 = vld [vmem:[%s3 + $0x220] sm:$0xff]
      %v419 = vld [vmem:[%s3 + $0x228] sm:$0xff]
      %v420 = vld [vmem:[%s3 + $0x230] sm:$0xff]
      %v421 = vld [vmem:[%s3 + $0x238] sm:$0xff]
      %v422 = vld [vmem:[%s3 + $0x240] sm:$0xff]
      %v423 = vld [vmem:[%s3 + $0x248] sm:$0xff]
      %v424 = vld [vmem:[%s3 + $0x250] sm:$0xff]
      %v425 = vld [vmem:[%s3 + $0x258] sm:$0xff]
      %v426 = vld [vmem:[%s3 + $0x260] sm:$0xff]
      %v427 = vld [vmem:[%s3 + $0x268] sm:$0xff]
      %v428 = vld [vmem:[%s3 + $0x270] sm:$0xff]
      %v429 = vld [vmem:[%s3 + $0x278] sm:$0xff]
      %v430 = vld [vmem:[%s3 + $0x280] sm:$0xff]
      %v431 = vld [vmem:[%s3 + $0x288] sm:$0xff]
      %v432 = vld [vmem:[%s3 + $0x290] sm:$0xff]
      %v433 = vld [vmem:[%s3 + $0x298] sm:$0xff]
      %v434 = vld [vmem:[%s3 + $0x2a0] sm:$0xff]
      %v435 = vld [vmem:[%s3 + $0x2a8] sm:$0xff]
      %v436 = vld [vmem:[%s3 + $0x2b0] sm:$0xff]
      %v437 = vld [vmem:[%s3 + $0x2b8] sm:$0xff]
      %v438 = vld [vmem:[%s3 + $0x2c0] sm:$0xff]
      %v439 = vld [vmem:[%s3 + $0x2c8] sm:$0xff]
      %v440 = vld [vmem:[%s3 + $0x2d0] sm:$0xff]
      %v441 = vld [vmem:[%s3 + $0x2d8] sm:$0xff]
      %v442 = vld [vmem:[%s3 + $0x2e0] sm:$0xff]
      %v443 = vld [vmem:[%s3 + $0x2e8] sm:$0xff]
      %v444 = vld [vmem:[%s3 + $0x2f0] sm:$0xff]
      %v445 = vld [vmem:[%s3 + $0x2f8] sm:$0xff]
      %v446 = vld [vmem:[%s3 + $0x300] sm:$0xff]
      %v447 = vld [vmem:[%s3 + $0x308] sm:$0xff]
      %v448 = vld [vmem:[%s3 + $0x310] sm:$0xff]
      %v449 = vld [vmem:[%s3 + $0x318] sm:$0xff]
      %v450 = vld [vmem:[%s3 + $0x320] sm:$0xff]
      %v451 = vld [vmem:[%s3 + $0x328] sm:$0xff]
      %v452 = vld [vmem:[%s3 + $0x330] sm:$0xff]
      %v453 = vld [vmem:[%s3 + $0x338] sm:$0xff]
      %v454 = vld [vmem:[%s3 + $0x340] sm:$0xff]
      %v455 = vld [vmem:[%s3 + $0x348] sm:$0xff]
      %v456 = vld [vmem:[%s3 + $0x350] sm:$0xff]
      %v457 = vld [vmem:[%s3 + $0x358] sm:$0xff]
      %v458 = vld [vmem:[%s3 + $0x360] sm:$0xff]
      %v459 = vld [vmem:[%s3 + $0x368] sm:$0xff]
      %v460 = vld [vmem:[%s3 + $0x370] sm:$0xff]
      %v461 = vld [vmem:[%s3 + $0x378] sm:$0xff]
      %v462 = vld [vmem:[%s3 + $0x380] sm:$0xff]
      %v463 = vld [vmem:[%s3 + $0x388] sm:$0xff]
      %v464 = vld [vmem:[%s3 + $0x390] sm:$0xff]
      %v465 = vld [vmem:[%s3 + $0x398] sm:$0xff]
      %v466 = vld [vmem:[%s3 + $0x3a0] sm:$0xff]
      %v467 = vld [vmem:[%s3 + $0x3a8] sm:$0xff]
      %v468 = vld [vmem:[%s3 + $0x3b0] sm:$0xff]
      %v469 = vld [vmem:[%s3 + $0x3b8] sm:$0xff]
      %v470 = vld [vmem:[%s3 + $0x3c0] sm:$0xff]
      %v471 = vld [vmem:[%s3 + $0x3c8] sm:$0xff]
      %v472 = vld [vmem:[%s3 + $0x3d0] sm:$0xff]
      %v473 = vld [vmem:[%s3 + $0x3d8] sm:$0xff]
      %v474 = vld [vmem:[%s3 + $0x3e0] sm:$0xff]
      %v475 = vld [vmem:[%s3 + $0x3e8] sm:$0xff]
      %v476 = vld [vmem:[%s3 + $0x3f0] sm:$0xff]
      %v477 = vld [vmem:[%s3 + $0x3f8] sm:$0xff]
      %v478 = vld [vmem:[%s4] sm:$0xff]
      %v480 = vlaneseq
      %v481 = vshrl.u32 %v480, 7
      %v482 = vsub.s32 0, %v481
      %v483 = vrot.slane %v478, %v482
      %v484 = vlaneseq
      %v485 = vshrl.u32 %v484, 7
      %v486 = vsub.s32 1, %v485
      %v487 = vrot.slane %v478, %v486
      %v488 = vlaneseq
      %v489 = vshrl.u32 %v488, 7
      %v490 = vsub.s32 2, %v489
      %v491 = vrot.slane %v478, %v490
      %v492 = vlaneseq
      %v493 = vshrl.u32 %v492, 7
      %v494 = vsub.s32 3, %v493
      %v495 = vrot.slane %v478, %v494
      %v496 = vlaneseq
      %v497 = vshrl.u32 %v496, 7
      %v498 = vsub.s32 4, %v497
      %v499 = vrot.slane %v478, %v498
      %v500 = vlaneseq
      %v501 = vshrl.u32 %v500, 7
      %v502 = vsub.s32 5, %v501
      %v503 = vrot.slane %v478, %v502
      %v504 = vlaneseq
      %v505 = vshrl.u32 %v504, 7
      %v506 = vsub.s32 6, %v505
      %v507 = vrot.slane %v478, %v506
      %v508 = vlaneseq
      %v509 = vshrl.u32 %v508, 7
      %v510 = vsub.s32 7, %v509
      %v511 = vrot.slane %v478, %v510
      %v648 = vunpack.c.l.b16 %v350
      %v649 = vunpack.c.h.b16 %v350
      %v650 = vunpack.c.l.b16 %v351
      %v651 = vunpack.c.h.b16 %v351
      %v652 = vunpack.c.l.b16 %v352
      %v653 = vunpack.c.h.b16 %v352
      %v654 = vunpack.c.l.b16 %v353
      %v655 = vunpack.c.h.b16 %v353
      %v656 = vunpack.c.l.b16 %v354
      %v657 = vunpack.c.h.b16 %v354
      %v658 = vunpack.c.l.b16 %v355
      %v659 = vunpack.c.h.b16 %v355
      %v660 = vunpack.c.l.b16 %v356
      %v661 = vunpack.c.h.b16 %v356
      %v662 = vunpack.c.l.b16 %v357
      %v663 = vunpack.c.h.b16 %v357
      %v664 = vunpack.c.l.b16 %v358
      %v665 = vunpack.c.h.b16 %v358
      %v666 = vunpack.c.l.b16 %v359
      %v667 = vunpack.c.h.b16 %v359
      %v668 = vunpack.c.l.b16 %v360
      %v669 = vunpack.c.h.b16 %v360
      %v670 = vunpack.c.l.b16 %v361
      %v671 = vunpack.c.h.b16 %v361
      %v672 = vunpack.c.l.b16 %v362
      %v673 = vunpack.c.h.b16 %v362
      %v674 = vunpack.c.l.b16 %v363
      %v675 = vunpack.c.h.b16 %v363
      %v676 = vunpack.c.l.b16 %v364
      %v677 = vunpack.c.h.b16 %v364
      %v678 = vunpack.c.l.b16 %v365
      %v679 = vunpack.c.h.b16 %v365
      %v680 = vunpack.c.l.b16 %v366
      %v681 = vunpack.c.h.b16 %v366
      %v682 = vunpack.c.l.b16 %v367
      %v683 = vunpack.c.h.b16 %v367
      %v684 = vunpack.c.l.b16 %v368
      %v685 = vunpack.c.h.b16 %v368
      %v686 = vunpack.c.l.b16 %v369
      %v687 = vunpack.c.h.b16 %v369
      %v688 = vunpack.c.l.b16 %v370
      %v689 = vunpack.c.h.b16 %v370
      %v690 = vunpack.c.l.b16 %v371
      %v691 = vunpack.c.h.b16 %v371
      %v692 = vunpack.c.l.b16 %v372
      %v693 = vunpack.c.h.b16 %v372
      %v694 = vunpack.c.l.b16 %v373
      %v695 = vunpack.c.h.b16 %v373
      %v696 = vunpack.c.l.b16 %v374
      %v697 = vunpack.c.h.b16 %v374
      %v698 = vunpack.c.l.b16 %v375
      %v699 = vunpack.c.h.b16 %v375
      %v700 = vunpack.c.l.b16 %v376
      %v701 = vunpack.c.h.b16 %v376
      %v702 = vunpack.c.l.b16 %v377
      %v703 = vunpack.c.h.b16 %v377
      %v704 = vunpack.c.l.b16 %v378
      %v705 = vunpack.c.h.b16 %v378
      %v706 = vunpack.c.l.b16 %v379
      %v707 = vunpack.c.h.b16 %v379
      %v708 = vunpack.c.l.b16 %v380
      %v709 = vunpack.c.h.b16 %v380
      %v710 = vunpack.c.l.b16 %v381
      %v711 = vunpack.c.h.b16 %v381
      %v712 = vunpack.c.l.b16 %v382
      %v713 = vunpack.c.h.b16 %v382
      %v714 = vunpack.c.l.b16 %v383
      %v715 = vunpack.c.h.b16 %v383
      %v716 = vunpack.c.l.b16 %v384
      %v717 = vunpack.c.h.b16 %v384
      %v718 = vunpack.c.l.b16 %v385
      %v719 = vunpack.c.h.b16 %v385
      %v720 = vunpack.c.l.b16 %v386
      %v721 = vunpack.c.h.b16 %v386
      %v722 = vunpack.c.l.b16 %v387
      %v723 = vunpack.c.h.b16 %v387
      %v724 = vunpack.c.l.b16 %v388
      %v725 = vunpack.c.h.b16 %v388
      %v726 = vunpack.c.l.b16 %v389
      %v727 = vunpack.c.h.b16 %v389
      %v728 = vunpack.c.l.b16 %v390
      %v729 = vunpack.c.h.b16 %v390
      %v730 = vunpack.c.l.b16 %v391
      %v731 = vunpack.c.h.b16 %v391
      %v732 = vunpack.c.l.b16 %v392
      %v733 = vunpack.c.h.b16 %v392
      %v734 = vunpack.c.l.b16 %v393
      %v735 = vunpack.c.h.b16 %v393
      %v736 = vunpack.c.l.b16 %v394
      %v737 = vunpack.c.h.b16 %v394
      %v738 = vunpack.c.l.b16 %v395
      %v739 = vunpack.c.h.b16 %v395
      %v740 = vunpack.c.l.b16 %v396
      %v741 = vunpack.c.h.b16 %v396
      %v742 = vunpack.c.l.b16 %v397
      %v743 = vunpack.c.h.b16 %v397
      %v744 = vunpack.c.l.b16 %v398
      %v745 = vunpack.c.h.b16 %v398
      %v746 = vunpack.c.l.b16 %v399
      %v747 = vunpack.c.h.b16 %v399
      %v748 = vunpack.c.l.b16 %v400
      %v749 = vunpack.c.h.b16 %v400
      %v750 = vunpack.c.l.b16 %v401
      %v751 = vunpack.c.h.b16 %v401
      %v752 = vunpack.c.l.b16 %v402
      %v753 = vunpack.c.h.b16 %v402
      %v754 = vunpack.c.l.b16 %v403
      %v755 = vunpack.c.h.b16 %v403
      %v756 = vunpack.c.l.b16 %v404
      %v757 = vunpack.c.h.b16 %v404
      %v758 = vunpack.c.l.b16 %v405
      %v759 = vunpack.c.h.b16 %v405
      %v760 = vunpack.c.l.b16 %v406
      %v761 = vunpack.c.h.b16 %v406
      %v762 = vunpack.c.l.b16 %v407
      %v763 = vunpack.c.h.b16 %v407
      %v764 = vunpack.c.l.b16 %v408
      %v765 = vunpack.c.h.b16 %v408
      %v766 = vunpack.c.l.b16 %v409
      %v767 = vunpack.c.h.b16 %v409
      %v768 = vunpack.c.l.b16 %v410
      %v769 = vunpack.c.h.b16 %v410
      %v770 = vunpack.c.l.b16 %v411
      %v771 = vunpack.c.h.b16 %v411
      %v772 = vunpack.c.l.b16 %v412
      %v773 = vunpack.c.h.b16 %v412
      %v774 = vunpack.c.l.b16 %v413
      %v775 = vunpack.c.h.b16 %v413
      %v776 = vunpack.c.l.b16 %v414
      %v777 = vunpack.c.h.b16 %v414
      %v778 = vunpack.c.l.b16 %v415
      %v779 = vunpack.c.h.b16 %v415
      %v780 = vunpack.c.l.b16 %v416
      %v781 = vunpack.c.h.b16 %v416
      %v782 = vunpack.c.l.b16 %v417
      %v783 = vunpack.c.h.b16 %v417
      %v784 = vunpack.c.l.b16 %v418
      %v785 = vunpack.c.h.b16 %v418
      %v786 = vunpack.c.l.b16 %v419
      %v787 = vunpack.c.h.b16 %v419
      %v788 = vunpack.c.l.b16 %v420
      %v789 = vunpack.c.h.b16 %v420
      %v790 = vunpack.c.l.b16 %v421
      %v791 = vunpack.c.h.b16 %v421
      %v792 = vunpack.c.l.b16 %v422
      %v793 = vunpack.c.h.b16 %v422
      %v794 = vunpack.c.l.b16 %v423
      %v795 = vunpack.c.h.b16 %v423
      %v796 = vunpack.c.l.b16 %v424
      %v797 = vunpack.c.h.b16 %v424
      %v798 = vunpack.c.l.b16 %v425
      %v799 = vunpack.c.h.b16 %v425
      %v800 = vunpack.c.l.b16 %v426
      %v801 = vunpack.c.h.b16 %v426
      %v802 = vunpack.c.l.b16 %v427
      %v803 = vunpack.c.h.b16 %v427
      %v804 = vunpack.c.l.b16 %v428
      %v805 = vunpack.c.h.b16 %v428
      %v806 = vunpack.c.l.b16 %v429
      %v807 = vunpack.c.h.b16 %v429
      %v808 = vunpack.c.l.b16 %v430
      %v809 = vunpack.c.h.b16 %v430
      %v810 = vunpack.c.l.b16 %v431
      %v811 = vunpack.c.h.b16 %v431
      %v812 = vunpack.c.l.b16 %v432
      %v813 = vunpack.c.h.b16 %v432
      %v814 = vunpack.c.l.b16 %v433
      %v815 = vunpack.c.h.b16 %v433
      %v816 = vunpack.c.l.b16 %v434
      %v817 = vunpack.c.h.b16 %v434
      %v818 = vunpack.c.l.b16 %v435
      %v819 = vunpack.c.h.b16 %v435
      %v820 = vunpack.c.l.b16 %v436
      %v821 = vunpack.c.h.b16 %v436
      %v822 = vunpack.c.l.b16 %v437
      %v823 = vunpack.c.h.b16 %v437
      %v824 = vunpack.c.l.b16 %v438
      %v825 = vunpack.c.h.b16 %v438
      %v826 = vunpack.c.l.b16 %v439
      %v827 = vunpack.c.h.b16 %v439
      %v828 = vunpack.c.l.b16 %v440
      %v829 = vunpack.c.h.b16 %v440
      %v830 = vunpack.c.l.b16 %v441
      %v831 = vunpack.c.h.b16 %v441
      %v832 = vunpack.c.l.b16 %v442
      %v833 = vunpack.c.h.b16 %v442
      %v834 = vunpack.c.l.b16 %v443
      %v835 = vunpack.c.h.b16 %v443
      %v836 = vunpack.c.l.b16 %v444
      %v837 = vunpack.c.h.b16 %v444
      %v838 = vunpack.c.l.b16 %v445
      %v839 = vunpack.c.h.b16 %v445
      %v840 = vunpack.c.l.b16 %v446
      %v841 = vunpack.c.h.b16 %v446
      %v842 = vunpack.c.l.b16 %v447
      %v843 = vunpack.c.h.b16 %v447
      %v844 = vunpack.c.l.b16 %v448
      %v845 = vunpack.c.h.b16 %v448
      %v846 = vunpack.c.l.b16 %v449
      %v847 = vunpack.c.h.b16 %v449
      %v848 = vunpack.c.l.b16 %v450
      %v849 = vunpack.c.h.b16 %v450
      %v850 = vunpack.c.l.b16 %v451
      %v851 = vunpack.c.h.b16 %v451
      %v852 = vunpack.c.l.b16 %v452
      %v853 = vunpack.c.h.b16 %v452
      %v854 = vunpack.c.l.b16 %v453
      %v855 = vunpack.c.h.b16 %v453
      %v856 = vunpack.c.l.b16 %v454
      %v857 = vunpack.c.h.b16 %v454
      %v858 = vunpack.c.l.b16 %v455
      %v859 = vunpack.c.h.b16 %v455
      %v860 = vunpack.c.l.b16 %v456
      %v861 = vunpack.c.h.b16 %v456
      %v862 = vunpack.c.l.b16 %v457
      %v863 = vunpack.c.h.b16 %v457
      %v864 = vunpack.c.l.b16 %v458
      %v865 = vunpack.c.h.b16 %v458
      %v866 = vunpack.c.l.b16 %v459
      %v867 = vunpack.c.h.b16 %v459
      %v868 = vunpack.c.l.b16 %v460
      %v869 = vunpack.c.h.b16 %v460
      %v870 = vunpack.c.l.b16 %v461
      %v871 = vunpack.c.h.b16 %v461
      %v872 = vunpack.c.l.b16 %v462
      %v873 = vunpack.c.h.b16 %v462
      %v874 = vunpack.c.l.b16 %v463
      %v875 = vunpack.c.h.b16 %v463
      %v876 = vunpack.c.l.b16 %v464
      %v877 = vunpack.c.h.b16 %v464
      %v878 = vunpack.c.l.b16 %v465
      %v879 = vunpack.c.h.b16 %v465
      %v880 = vunpack.c.l.b16 %v466
      %v881 = vunpack.c.h.b16 %v466
      %v882 = vunpack.c.l.b16 %v467
      %v883 = vunpack.c.h.b16 %v467
      %v884 = vunpack.c.l.b16 %v468
      %v885 = vunpack.c.h.b16 %v468
      %v886 = vunpack.c.l.b16 %v469
      %v887 = vunpack.c.h.b16 %v469
      %v888 = vunpack.c.l.b16 %v470
      %v889 = vunpack.c.h.b16 %v470
      %v890 = vunpack.c.l.b16 %v471
      %v891 = vunpack.c.h.b16 %v471
      %v892 = vunpack.c.l.b16 %v472
      %v893 = vunpack.c.h.b16 %v472
      %v894 = vunpack.c.l.b16 %v473
      %v895 = vunpack.c.h.b16 %v473
      %v896 = vunpack.c.l.b16 %v474
      %v897 = vunpack.c.h.b16 %v474
      %v898 = vunpack.c.l.b16 %v475
      %v899 = vunpack.c.h.b16 %v475
      %v900 = vunpack.c.l.b16 %v476
      %v901 = vunpack.c.h.b16 %v476
      %v902 = vunpack.c.l.b16 %v477
      %v903 = vunpack.c.h.b16 %v477
      %v904 = vpack.c.b16 %v656, %v648
      %v905 = vpack.c.b16 %v657, %v649
      %v906 = vpack.c.b16 %v658, %v650
      %v907 = vpack.c.b16 %v659, %v651
      %v908 = vpack.c.b16 %v660, %v652
      %v909 = vpack.c.b16 %v661, %v653
      %v910 = vpack.c.b16 %v662, %v654
      %v911 = vpack.c.b16 %v663, %v655
      %v912 = vpack.c.b16 %v672, %v664
      %v913 = vpack.c.b16 %v673, %v665
      %v914 = vpack.c.b16 %v674, %v666
      %v915 = vpack.c.b16 %v675, %v667
      %v916 = vpack.c.b16 %v676, %v668
      %v917 = vpack.c.b16 %v677, %v669
      %v918 = vpack.c.b16 %v678, %v670
      %v919 = vpack.c.b16 %v679, %v671
      %v920 = vpack.c.b16 %v688, %v680
      %v921 = vpack.c.b16 %v689, %v681
      %v922 = vpack.c.b16 %v690, %v682
      %v923 = vpack.c.b16 %v691, %v683
      %v924 = vpack.c.b16 %v692, %v684
      %v925 = vpack.c.b16 %v693, %v685
      %v926 = vpack.c.b16 %v694, %v686
      %v927 = vpack.c.b16 %v695, %v687
      %v928 = vpack.c.b16 %v704, %v696
      %v929 = vpack.c.b16 %v705, %v697
      %v930 = vpack.c.b16 %v706, %v698
      %v931 = vpack.c.b16 %v707, %v699
      %v932 = vpack.c.b16 %v708, %v700
      %v933 = vpack.c.b16 %v709, %v701
      %v934 = vpack.c.b16 %v710, %v702
      %v935 = vpack.c.b16 %v711, %v703
      %v936 = vpack.c.b16 %v720, %v712
      %v937 = vpack.c.b16 %v721, %v713
      %v938 = vpack.c.b16 %v722, %v714
      %v939 = vpack.c.b16 %v723, %v715
      %v940 = vpack.c.b16 %v724, %v716
      %v941 = vpack.c.b16 %v725, %v717
      %v942 = vpack.c.b16 %v726, %v718
      %v943 = vpack.c.b16 %v727, %v719
      %v944 = vpack.c.b16 %v736, %v728
      %v945 = vpack.c.b16 %v737, %v729
      %v946 = vpack.c.b16 %v738, %v730
      %v947 = vpack.c.b16 %v739, %v731
      %v948 = vpack.c.b16 %v740, %v732
      %v949 = vpack.c.b16 %v741, %v733
      %v950 = vpack.c.b16 %v742, %v734
      %v951 = vpack.c.b16 %v743, %v735
      %v952 = vpack.c.b16 %v752, %v744
      %v953 = vpack.c.b16 %v753, %v745
      %v954 = vpack.c.b16 %v754, %v746
      %v955 = vpack.c.b16 %v755, %v747
      %v956 = vpack.c.b16 %v756, %v748
      %v957 = vpack.c.b16 %v757, %v749
      %v958 = vpack.c.b16 %v758, %v750
      %v959 = vpack.c.b16 %v759, %v751
      %v960 = vpack.c.b16 %v768, %v760
      %v961 = vpack.c.b16 %v769, %v761
      %v962 = vpack.c.b16 %v770, %v762
      %v963 = vpack.c.b16 %v771, %v763
      %v964 = vpack.c.b16 %v772, %v764
      %v965 = vpack.c.b16 %v773, %v765
      %v966 = vpack.c.b16 %v774, %v766
      %v967 = vpack.c.b16 %v775, %v767
      %v968 = vpack.c.b16 %v784, %v776
      %v969 = vpack.c.b16 %v785, %v777
      %v970 = vpack.c.b16 %v786, %v778
      %v971 = vpack.c.b16 %v787, %v779
      %v972 = vpack.c.b16 %v788, %v780
      %v973 = vpack.c.b16 %v789, %v781
      %v974 = vpack.c.b16 %v790, %v782
      %v975 = vpack.c.b16 %v791, %v783
      %v976 = vpack.c.b16 %v800, %v792
      %v977 = vpack.c.b16 %v801, %v793
      %v978 = vpack.c.b16 %v802, %v794
      %v979 = vpack.c.b16 %v803, %v795
      %v980 = vpack.c.b16 %v804, %v796
      %v981 = vpack.c.b16 %v805, %v797
      %v982 = vpack.c.b16 %v806, %v798
      %v983 = vpack.c.b16 %v807, %v799
      %v984 = vpack.c.b16 %v816, %v808
      %v985 = vpack.c.b16 %v817, %v809
      %v986 = vpack.c.b16 %v818, %v810
      %v987 = vpack.c.b16 %v819, %v811
      %v988 = vpack.c.b16 %v820, %v812
      %v989 = vpack.c.b16 %v821, %v813
      %v990 = vpack.c.b16 %v822, %v814
      %v991 = vpack.c.b16 %v823, %v815
      %v992 = vpack.c.b16 %v832, %v824
      %v993 = vpack.c.b16 %v833, %v825
      %v994 = vpack.c.b16 %v834, %v826
      %v995 = vpack.c.b16 %v835, %v827
      %v996 = vpack.c.b16 %v836, %v828
      %v997 = vpack.c.b16 %v837, %v829
      %v998 = vpack.c.b16 %v838, %v830
      %v999 = vpack.c.b16 %v839, %v831
      %v1000 = vpack.c.b16 %v848, %v840
      %v1001 = vpack.c.b16 %v849, %v841
      %v1002 = vpack.c.b16 %v850, %v842
      %v1003 = vpack.c.b16 %v851, %v843
      %v1004 = vpack.c.b16 %v852, %v844
      %v1005 = vpack.c.b16 %v853, %v845
      %v1006 = vpack.c.b16 %v854, %v846
      %v1007 = vpack.c.b16 %v855, %v847
      %v1008 = vpack.c.b16 %v864, %v856
      %v1009 = vpack.c.b16 %v865, %v857
      %v1010 = vpack.c.b16 %v866, %v858
      %v1011 = vpack.c.b16 %v867, %v859
      %v1012 = vpack.c.b16 %v868, %v860
      %v1013 = vpack.c.b16 %v869, %v861
      %v1014 = vpack.c.b16 %v870, %v862
      %v1015 = vpack.c.b16 %v871, %v863
      %v1016 = vpack.c.b16 %v880, %v872
      %v1017 = vpack.c.b16 %v881, %v873
      %v1018 = vpack.c.b16 %v882, %v874
      %v1019 = vpack.c.b16 %v883, %v875
      %v1020 = vpack.c.b16 %v884, %v876
      %v1021 = vpack.c.b16 %v885, %v877
      %v1022 = vpack.c.b16 %v886, %v878
      %v1023 = vpack.c.b16 %v887, %v879
      %v1024 = vpack.c.b16 %v896, %v888
      %v1025 = vpack.c.b16 %v897, %v889
      %v1026 = vpack.c.b16 %v898, %v890
      %v1027 = vpack.c.b16 %v899, %v891
      %v1028 = vpack.c.b16 %v900, %v892
      %v1029 = vpack.c.b16 %v901, %v893
      %v1030 = vpack.c.b16 %v902, %v894
      %v1031 = vpack.c.b16 %v903, %v895
      %1160 = vmatprep.subr.bf16.mxu0 %v905
      %1161 = vmatpush1.bf16.msra.mxu0 %v904
      %1162 = vmatprep.subr.bf16.mxu0 %v913
      %1163 = vmatpush1.bf16.msra.mxu0 %v912
      %1164 = vmatprep.subr.bf16.mxu0 %v921
      %1165 = vmatpush1.bf16.msra.mxu0 %v920
      %1166 = vmatprep.subr.bf16.mxu0 %v929
      %1167 = vmatpush1.bf16.msra.mxu0 %v928
      %1168 = vmatprep.subr.bf16.mxu0 %v937
      %1169 = vmatpush1.bf16.msra.mxu0 %v936
      %1170 = vmatprep.subr.bf16.mxu0 %v945
      %1171 = vmatpush1.bf16.msra.mxu0 %v944
      %1172 = vmatprep.subr.bf16.mxu0 %v953
      %1173 = vmatpush1.bf16.msra.mxu0 %v952
      %1174 = vmatprep.subr.bf16.mxu0 %v961
      %1175 = vmatpush1.bf16.msra.mxu0 %v960
      %1176 = vmatprep.subr.bf16.mxu0 %v969
      %1177 = vmatpush1.bf16.msra.mxu0 %v968
      %1178 = vmatprep.subr.bf16.mxu0 %v977
      %1179 = vmatpush1.bf16.msra.mxu0 %v976
      %1180 = vmatprep.subr.bf16.mxu0 %v985
      %1181 = vmatpush1.bf16.msra.mxu0 %v984
      %1182 = vmatprep.subr.bf16.mxu0 %v993
      %1183 = vmatpush1.bf16.msra.mxu0 %v992
      %1184 = vmatprep.subr.bf16.mxu0 %v1001
      %1185 = vmatpush1.bf16.msra.mxu0 %v1000
      %1186 = vmatprep.subr.bf16.mxu0 %v1009
      %1187 = vmatpush1.bf16.msra.mxu0 %v1008
      %1188 = vmatprep.subr.bf16.mxu0 %v1017
      %1189 = vmatpush1.bf16.msra.mxu0 %v1016
      %1190 = vmatprep.subr.bf16.mxu0 %v1025
      %1191 = vmatpush1.bf16.msra.mxu0 %v1024
      %1192 = vmatprep.mubr.bf16.mxu0 %v347
      %1193 = vmatmul.mubr.bf16.gmra.mrb[0].mxu0 %v346
      %v1194 = vpop.f32.mrb[0].mxu0
      %v1195 = vadd.f32 %v483, %v1194
      %v1196 = vpop.f32.mrb[0].mxu0
      %v1197 = vadd.f32 %v487, %v1196
      %v1198 = vpop.f32.mrb[0].mxu0
      %v1199 = vadd.f32 %v483, %v1198
      %v1200 = vpop.f32.mrb[0].mxu0
      %v1201 = vadd.f32 %v487, %v1200
      %1202 = vmatprep.mubr.bf16.mxu0 %v349
      %1203 = vmatmul.mubr.bf16.gmra.mrb[0].mxu0 %v348
      %v1204 = vpop.f32.mrb[0].mxu0
      %v1205 = vadd.f32 %v483, %v1204
      %v1206 = vpop.f32.mrb[0].mxu0
      %v1207 = vadd.f32 %v487, %v1206
      %v1208 = vpop.f32.mrb[0].mxu0
      %v1209 = vadd.f32 %v483, %v1208
      %v1210 = vpop.f32.mrb[0].mxu0
      %v1211 = vadd.f32 %v487, %v1210
      %1212 = vdwg.mxu0
      %1213 = vmatprep.subr.bf16.mxu0 %v907
      %1214 = vmatpush1.bf16.msra.mxu0 %v906
      %1215 = vmatprep.subr.bf16.mxu0 %v915
      %1216 = vmatpush1.bf16.msra.mxu0 %v914
      %1217 = vmatprep.subr.bf16.mxu0 %v923
      %1218 = vmatpush1.bf16.msra.mxu0 %v922
      %1219 = vmatprep.subr.bf16.mxu0 %v931
      %1220 = vmatpush1.bf16.msra.mxu0 %v930
      %1221 = vmatprep.subr.bf16.mxu0 %v939
      %1222 = vmatpush1.bf16.msra.mxu0 %v938
      %1223 = vmatprep.subr.bf16.mxu0 %v947
      %1224 = vmatpush1.bf16.msra.mxu0 %v946
      %1225 = vmatprep.subr.bf16.mxu0 %v955
      %1226 = vmatpush1.bf16.msra.mxu0 %v954
      %1227 = vmatprep.subr.bf16.mxu0 %v963
      %1228 = vmatpush1.bf16.msra.mxu0 %v962
      %1229 = vmatprep.subr.bf16.mxu0 %v971
      %1230 = vmatpush1.bf16.msra.mxu0 %v970
      %1231 = vmatprep.subr.bf16.mxu0 %v979
      %1232 = vmatpush1.bf16.msra.mxu0 %v978
      %1233 = vmatprep.subr.bf16.mxu0 %v987
      %1234 = vmatpush1.bf16.msra.mxu0 %v986
      %1235 = vmatprep.subr.bf16.mxu0 %v995
      %1236 = vmatpush1.bf16.msra.mxu0 %v994
      %1237 = vmatprep.subr.bf16.mxu0 %v1003
      %1238 = vmatpush1.bf16.msra.mxu0 %v1002
      %1239 = vmatprep.subr.bf16.mxu0 %v1011
      %1240 = vmatpush1.bf16.msra.mxu0 %v1010
      %1241 = vmatprep.subr.bf16.mxu0 %v1019
      %1242 = vmatpush1.bf16.msra.mxu0 %v1018
      %1243 = vmatprep.subr.bf16.mxu0 %v1027
      %1244 = vmatpush1.bf16.msra.mxu0 %v1026
      %1245 = vmatprep.mubr.bf16.mxu0 %v347
      %1246 = vmatmul.mubr.bf16.gmra.mrb[0].mxu0 %v346
      %v1247 = vpop.f32.mrb[0].mxu0
      %v1248 = vadd.f32 %v491, %v1247
      %v1249 = vpop.f32.mrb[0].mxu0
      %v1250 = vadd.f32 %v495, %v1249
      %v1251 = vpop.f32.mrb[0].mxu0
      %v1252 = vadd.f32 %v491, %v1251
      %v1253 = vpop.f32.mrb[0].mxu0
      %v1254 = vadd.f32 %v495, %v1253
      %1255 = vmatprep.mubr.bf16.mxu0 %v349
      %1256 = vmatmul.mubr.bf16.gmra.mrb[0].mxu0 %v348
      %v1257 = vpop.f32.mrb[0].mxu0
      %v1258 = vadd.f32 %v491, %v1257
      %v1259 = vpop.f32.mrb[0].mxu0
      %v1260 = vadd.f32 %v495, %v1259
      %v1261 = vpop.f32.mrb[0].mxu0
      %v1262 = vadd.f32 %v491, %v1261
      %v1263 = vpop.f32.mrb[0].mxu0
      %v1264 = vadd.f32 %v495, %v1263
      %1265 = vdwg.mxu0
      %1266 = vmatprep.subr.bf16.mxu0 %v909
      %1267 = vmatpush1.bf16.msra.mxu0 %v908
      %1268 = vmatprep.subr.bf16.mxu0 %v917
      %1269 = vmatpush1.bf16.msra.mxu0 %v916
      %1270 = vmatprep.subr.bf16.mxu0 %v925
      %1271 = vmatpush1.bf16.msra.mxu0 %v924
      %1272 = vmatprep.subr.bf16.mxu0 %v933
      %1273 = vmatpush1.bf16.msra.mxu0 %v932
      %1274 = vmatprep.subr.bf16.mxu0 %v941
      %1275 = vmatpush1.bf16.msra.mxu0 %v940
      %1276 = vmatprep.subr.bf16.mxu0 %v949
      %1277 = vmatpush1.bf16.msra.mxu0 %v948
      %1278 = vmatprep.subr.bf16.mxu0 %v957
      %1279 = vmatpush1.bf16.msra.mxu0 %v956
      %1280 = vmatprep.subr.bf16.mxu0 %v965
      %1281 = vmatpush1.bf16.msra.mxu0 %v964
      %1282 = vmatprep.subr.bf16.mxu0 %v973
      %1283 = vmatpush1.bf16.msra.mxu0 %v972
      %1284 = vmatprep.subr.bf16.mxu0 %v981
      %1285 = vmatpush1.bf16.msra.mxu0 %v980
      %1286 = vmatprep.subr.bf16.mxu0 %v989
      %1287 = vmatpush1.bf16.msra.mxu0 %v988
      %1288 = vmatprep.subr.bf16.mxu0 %v997
      %1289 = vmatpush1.bf16.msra.mxu0 %v996
      %1290 = vmatprep.subr.bf16.mxu0 %v1005
      %1291 = vmatpush1.bf16.msra.mxu0 %v1004
      %1292 = vmatprep.subr.bf16.mxu0 %v1013
      %1293 = vmatpush1.bf16.msra.mxu0 %v1012
      %1294 = vmatprep.subr.bf16.mxu0 %v1021
      %1295 = vmatpush1.bf16.msra.mxu0 %v1020
      %1296 = vmatprep.subr.bf16.mxu0 %v1029
      %1297 = vmatpush1.bf16.msra.mxu0 %v1028
      %1298 = vmatprep.mubr.bf16.mxu0 %v347
      %1299 = vmatmul.mubr.bf16.gmra.mrb[0].mxu0 %v346
      %v1300 = vpop.f32.mrb[0].mxu0
      %v1301 = vadd.f32 %v499, %v1300
      %v1302 = vpop.f32.mrb[0].mxu0
      %v1303 = vadd.f32 %v503, %v1302
      %v1304 = vpop.f32.mrb[0].mxu0
      %v1305 = vadd.f32 %v499, %v1304
      %v1306 = vpop.f32.mrb[0].mxu0
      %v1307 = vadd.f32 %v503, %v1306
      %1308 = vmatprep.mubr.bf16.mxu0 %v349
      %1309 = vmatmul.mubr.bf16.gmra.mrb[0].mxu0 %v348
      %v1310 = vpop.f32.mrb[0].mxu0
      %v1311 = vadd.f32 %v499, %v1310
      %v1312 = vpop.f32.mrb[0].mxu0
      %v1313 = vadd.f32 %v503, %v1312
      %v1314 = vpop.f32.mrb[0].mxu0
      %v1315 = vadd.f32 %v499, %v1314
      %v1316 = vpop.f32.mrb[0].mxu0
      %v1317 = vadd.f32 %v503, %v1316
      %1318 = vdwg.mxu0
      %1319 = vmatprep.subr.bf16.mxu0 %v911
      %1320 = vmatpush1.bf16.msra.mxu0 %v910
      %1321 = vmatprep.subr.bf16.mxu0 %v919
      %1322 = vmatpush1.bf16.msra.mxu0 %v918
      %1323 = vmatprep.subr.bf16.mxu0 %v927
      %1324 = vmatpush1.bf16.msra.mxu0 %v926
      %1325 = vmatprep.subr.bf16.mxu0 %v935
      %1326 = vmatpush1.bf16.msra.mxu0 %v934
      %1327 = vmatprep.subr.bf16.mxu0 %v943
      %1328 = vmatpush1.bf16.msra.mxu0 %v942
      %1329 = vmatprep.subr.bf16.mxu0 %v951
      %1330 = vmatpush1.bf16.msra.mxu0 %v950
      %1331 = vmatprep.subr.bf16.mxu0 %v959
      %1332 = vmatpush1.bf16.msra.mxu0 %v958
      %1333 = vmatprep.subr.bf16.mxu0 %v967
      %1334 = vmatpush1.bf16.msra.mxu0 %v966
      %1335 = vmatprep.subr.bf16.mxu0 %v975
      %1336 = vmatpush1.bf16.msra.mxu0 %v974
      %1337 = vmatprep.subr.bf16.mxu0 %v983
      %1338 = vmatpush1.bf16.msra.mxu0 %v982
      %1339 = vmatprep.subr.bf16.mxu0 %v991
      %1340 = vmatpush1.bf16.msra.mxu0 %v990
      %1341 = vmatprep.subr.bf16.mxu0 %v999
      %1342 = vmatpush1.bf16.msra.mxu0 %v998
      %1343 = vmatprep.subr.bf16.mxu0 %v1007
      %1344 = vmatpush1.bf16.msra.mxu0 %v1006
      %1345 = vmatprep.subr.bf16.mxu0 %v1015
      %1346 = vmatpush1.bf16.msra.mxu0 %v1014
      %1347 = vmatprep.subr.bf16.mxu0 %v1023
      %1348 = vmatpush1.bf16.msra.mxu0 %v1022
      %1349 = vmatprep.subr.bf16.mxu0 %v1031
      %1350 = vmatpush1.bf16.msra.mxu0 %v1030
      %1351 = vmatprep.mubr.bf16.mxu0 %v347
      %1352 = vmatmul.mubr.bf16.gmra.mrb[0].mxu0 %v346
      %v1353 = vpop.f32.mrb[0].mxu0
      %v1354 = vadd.f32 %v507, %v1353
      %v1355 = vpop.f32.mrb[0].mxu0
      %v1356 = vadd.f32 %v511, %v1355
      %v1357 = vpop.f32.mrb[0].mxu0
      %v1358 = vadd.f32 %v507, %v1357
      %v1359 = vpop.f32.mrb[0].mxu0
      %v1360 = vadd.f32 %v511, %v1359
      %1361 = vmatprep.mubr.bf16.mxu0 %v349
      %1362 = vmatmul.mubr.bf16.gmra.mrb[0].mxu0 %v348
      %v1363 = vpop.f32.mrb[0].mxu0
      %v1364 = vadd.f32 %v507, %v1363
      %v1365 = vpop.f32.mrb[0].mxu0
      %v1366 = vadd.f32 %v511, %v1365
      %v1367 = vpop.f32.mrb[0].mxu0
      %v1368 = vadd.f32 %v507, %v1367
      %v1369 = vpop.f32.mrb[0].mxu0
      %v1370 = vadd.f32 %v511, %v1369
      %1371 = vdwg.mxu0
      %v1372 = vmul.f32 %v1195, 0.5
      %v1373 = vmul.f32 %v1197, 0.5
      %v1374 = vmul.f32 %v1248, 0.5
      %v1375 = vmul.f32 %v1250, 0.5
      %v1376 = vmul.f32 %v1301, 0.5
      %v1377 = vmul.f32 %v1303, 0.5
      %v1378 = vmul.f32 %v1354, 0.5
      %v1379 = vmul.f32 %v1356, 0.5
      %v1380 = vmul.f32 %v1199, 0.5
      %v1381 = vmul.f32 %v1201, 0.5
      %v1382 = vmul.f32 %v1252, 0.5
      %v1383 = vmul.f32 %v1254, 0.5
      %v1384 = vmul.f32 %v1305, 0.5
      %v1385 = vmul.f32 %v1307, 0.5
      %v1386 = vmul.f32 %v1358, 0.5
      %v1387 = vmul.f32 %v1360, 0.5
      %v1388 = vmul.f32 %v1205, 0.5
      %v1389 = vmul.f32 %v1207, 0.5
      %v1390 = vmul.f32 %v1258, 0.5
      %v1391 = vmul.f32 %v1260, 0.5
      %v1392 = vmul.f32 %v1311, 0.5
      %v1393 = vmul.f32 %v1313, 0.5
      %v1394 = vmul.f32 %v1364, 0.5
      %v1395 = vmul.f32 %v1366, 0.5
      %v1396 = vmul.f32 %v1209, 0.5
      %v1397 = vmul.f32 %v1211, 0.5
      %v1398 = vmul.f32 %v1262, 0.5
      %v1399 = vmul.f32 %v1264, 0.5
      %v1400 = vmul.f32 %v1315, 0.5
      %v1401 = vmul.f32 %v1317, 0.5
      %v1402 = vmul.f32 %v1368, 0.5
      %v1403 = vmul.f32 %v1370, 0.5
      %v1404 = vmul.f32 %v1195, 0.044715
      %v1405 = vmul.f32 %v1197, 0.044715
      %v1406 = vmul.f32 %v1248, 0.044715
      %v1407 = vmul.f32 %v1250, 0.044715
      %v1408 = vmul.f32 %v1301, 0.044715
      %v1409 = vmul.f32 %v1303, 0.044715
      %v1410 = vmul.f32 %v1354, 0.044715
      %v1411 = vmul.f32 %v1356, 0.044715
      %v1412 = vmul.f32 %v1199, 0.044715
      %v1413 = vmul.f32 %v1201, 0.044715
      %v1414 = vmul.f32 %v1252, 0.044715
      %v1415 = vmul.f32 %v1254, 0.044715
      %v1416 = vmul.f32 %v1305, 0.044715
      %v1417 = vmul.f32 %v1307, 0.044715
      %v1418 = vmul.f32 %v1358, 0.044715
      %v1419 = vmul.f32 %v1360, 0.044715
      %v1420 = vmul.f32 %v1205, 0.044715
      %v1421 = vmul.f32 %v1207, 0.044715
      %v1422 = vmul.f32 %v1258, 0.044715
      %v1423 = vmul.f32 %v1260, 0.044715
      %v1424 = vmul.f32 %v1311, 0.044715
      %v1425 = vmul.f32 %v1313, 0.044715
      %v1426 = vmul.f32 %v1364, 0.044715
      %v1427 = vmul.f32 %v1366, 0.044715
      %v1428 = vmul.f32 %v1209, 0.044715
      %v1429 = vmul.f32 %v1211, 0.044715
      %v1430 = vmul.f32 %v1262, 0.044715
      %v1431 = vmul.f32 %v1264, 0.044715
      %v1432 = vmul.f32 %v1315, 0.044715
      %v1433 = vmul.f32 %v1317, 0.044715
      %v1434 = vmul.f32 %v1368, 0.044715
      %v1435 = vmul.f32 %v1370, 0.044715
      %v1436 = vmul.f32 %v1404, %v1195
      %v1437 = vmul.f32 %v1405, %v1197
      %v1438 = vmul.f32 %v1406, %v1248
      %v1439 = vmul.f32 %v1407, %v1250
      %v1440 = vmul.f32 %v1408, %v1301
      %v1441 = vmul.f32 %v1409, %v1303
      %v1442 = vmul.f32 %v1410, %v1354
      %v1443 = vmul.f32 %v1411, %v1356
      %v1444 = vmul.f32 %v1412, %v1199
      %v1445 = vmul.f32 %v1413, %v1201
      %v1446 = vmul.f32 %v1414, %v1252
      %v1447 = vmul.f32 %v1415, %v1254
      %v1448 = vmul.f32 %v1416, %v1305
      %v1449 = vmul.f32 %v1417, %v1307
      %v1450 = vmul.f32 %v1418, %v1358
      %v1451 = vmul.f32 %v1419, %v1360
      %v1452 = vmul.f32 %v1420, %v1205
      %v1453 = vmul.f32 %v1421, %v1207
      %v1454 = vmul.f32 %v1422, %v1258
      %v1455 = vmul.f32 %v1423, %v1260
      %v1456 = vmul.f32 %v1424, %v1311
      %v1457 = vmul.f32 %v1425, %v1313
      %v1458 = vmul.f32 %v1426, %v1364
      %v1459 = vmul.f32 %v1427, %v1366
      %v1460 = vmul.f32 %v1428, %v1209
      %v1461 = vmul.f32 %v1429, %v1211
      %v1462 = vmul.f32 %v1430, %v1262
      %v1463 = vmul.f32 %v1431, %v1264
      %v1464 = vmul.f32 %v1432, %v1315
      %v1465 = vmul.f32 %v1433, %v1317
      %v1466 = vmul.f32 %v1434, %v1368
      %v1467 = vmul.f32 %v1435, %v1370
      %v1468 = vmul.f32 %v1436, %v1195
      %v1469 = vmul.f32 %v1437, %v1197
      %v1470 = vmul.f32 %v1438, %v1248
      %v1471 = vmul.f32 %v1439, %v1250
      %v1472 = vmul.f32 %v1440, %v1301
      %v1473 = vmul.f32 %v1441, %v1303
      %v1474 = vmul.f32 %v1442, %v1354
      %v1475 = vmul.f32 %v1443, %v1356
      %v1476 = vmul.f32 %v1444, %v1199
      %v1477 = vmul.f32 %v1445, %v1201
      %v1478 = vmul.f32 %v1446, %v1252
      %v1479 = vmul.f32 %v1447, %v1254
      %v1480 = vmul.f32 %v1448, %v1305
      %v1481 = vmul.f32 %v1449, %v1307
      %v1482 = vmul.f32 %v1450, %v1358
      %v1483 = vmul.f32 %v1451, %v1360
      %v1484 = vmul.f32 %v1452, %v1205
      %v1485 = vmul.f32 %v1453, %v1207
      %v1486 = vmul.f32 %v1454, %v1258
      %v1487 = vmul.f32 %v1455, %v1260
      %v1488 = vmul.f32 %v1456, %v1311
      %v1489 = vmul.f32 %v1457, %v1313
      %v1490 = vmul.f32 %v1458, %v1364
      %v1491 = vmul.f32 %v1459, %v1366
      %v1492 = vmul.f32 %v1460, %v1209
      %v1493 = vmul.f32 %v1461, %v1211
      %v1494 = vmul.f32 %v1462, %v1262
      %v1495 = vmul.f32 %v1463, %v1264
      %v1496 = vmul.f32 %v1464, %v1315
      %v1497 = vmul.f32 %v1465, %v1317
      %v1498 = vmul.f32 %v1466, %v1368
      %v1499 = vmul.f32 %v1467, %v1370
      %v1500 = vadd.f32 %v1195, %v1468
      %v1501 = vadd.f32 %v1197, %v1469
      %v1502 = vadd.f32 %v1248, %v1470
      %v1503 = vadd.f32 %v1250, %v1471
      %v1504 = vadd.f32 %v1301, %v1472
      %v1505 = vadd.f32 %v1303, %v1473
      %v1506 = vadd.f32 %v1354, %v1474
      %v1507 = vadd.f32 %v1356, %v1475
      %v1508 = vadd.f32 %v1199, %v1476
      %v1509 = vadd.f32 %v1201, %v1477
      %v1510 = vadd.f32 %v1252, %v1478
      %v1511 = vadd.f32 %v1254, %v1479
      %v1512 = vadd.f32 %v1305, %v1480
      %v1513 = vadd.f32 %v1307, %v1481
      %v1514 = vadd.f32 %v1358, %v1482
      %v1515 = vadd.f32 %v1360, %v1483
      %v1516 = vadd.f32 %v1205, %v1484
      %v1517 = vadd.f32 %v1207, %v1485
      %v1518 = vadd.f32 %v1258, %v1486
      %v1519 = vadd.f32 %v1260, %v1487
      %v1520 = vadd.f32 %v1311, %v1488
      %v1521 = vadd.f32 %v1313, %v1489
      %v1522 = vadd.f32 %v1364, %v1490
      %v1523 = vadd.f32 %v1366, %v1491
      %v1524 = vadd.f32 %v1209, %v1492
      %v1525 = vadd.f32 %v1211, %v1493
      %v1526 = vadd.f32 %v1262, %v1494
      %v1527 = vadd.f32 %v1264, %v1495
      %v1528 = vadd.f32 %v1315, %v1496
      %v1529 = vadd.f32 %v1317, %v1497
      %v1530 = vadd.f32 %v1368, %v1498
      %v1531 = vadd.f32 %v1370, %v1499
      %v1532 = vmul.f32 %v1500, 0.7978846
      %v1533 = vmul.f32 %v1501, 0.7978846
      %v1534 = vmul.f32 %v1502, 0.7978846
      %v1535 = vmul.f32 %v1503, 0.7978846
      %v1536 = vmul.f32 %v1504, 0.7978846
      %v1537 = vmul.f32 %v1505, 0.7978846
      %v1538 = vmul.f32 %v1506, 0.7978846
      %v1539 = vmul.f32 %v1507, 0.7978846
      %v1540 = vmul.f32 %v1508, 0.7978846
      %v1541 = vmul.f32 %v1509, 0.7978846
      %v1542 = vmul.f32 %v1510, 0.7978846
      %v1543 = vmul.f32 %v1511, 0.7978846
      %v1544 = vmul.f32 %v1512, 0.7978846
      %v1545 = vmul.f32 %v1513, 0.7978846
      %v1546 = vmul.f32 %v1514, 0.7978846
      %v1547 = vmul.f32 %v1515, 0.7978846
      %v1548 = vmul.f32 %v1516, 0.7978846
      %v1549 = vmul.f32 %v1517, 0.7978846
      %v1550 = vmul.f32 %v1518, 0.7978846
      %v1551 = vmul.f32 %v1519, 0.7978846
      %v1552 = vmul.f32 %v1520, 0.7978846
      %v1553 = vmul.f32 %v1521, 0.7978846
      %v1554 = vmul.f32 %v1522, 0.7978846
      %v1555 = vmul.f32 %v1523, 0.7978846
      %v1556 = vmul.f32 %v1524, 0.7978846
      %v1557 = vmul.f32 %v1525, 0.7978846
      %v1558 = vmul.f32 %v1526, 0.7978846
      %v1559 = vmul.f32 %v1527, 0.7978846
      %v1560 = vmul.f32 %v1528, 0.7978846
      %v1561 = vmul.f32 %v1529, 0.7978846
      %v1562 = vmul.f32 %v1530, 0.7978846
      %v1563 = vmul.f32 %v1531, 0.7978846
      %v1564 = vtanh.pop %v1532
      %v1565 = vtanh.pop %v1533
      %v1566 = vtanh.pop %v1534
      %v1567 = vtanh.pop %v1535
      %v1568 = vtanh.pop %v1536
      %v1569 = vtanh.pop %v1537
      %v1570 = vtanh.pop %v1538
      %v1571 = vtanh.pop %v1539
      %v1572 = vtanh.pop %v1540
      %v1573 = vtanh.pop %v1541
      %v1574 = vtanh.pop %v1542
      %v1575 = vtanh.pop %v1543
      %v1576 = vtanh.pop %v1544
      %v1577 = vtanh.pop %v1545
      %v1578 = vtanh.pop %v1546
      %v1579 = vtanh.pop %v1547
      %v1580 = vtanh.pop %v1548
      %v1581 = vtanh.pop %v1549
      %v1582 = vtanh.pop %v1550
      %v1583 = vtanh.pop %v1551
      %v1584 = vtanh.pop %v1552
      %v1585 = vtanh.pop %v1553
      %v1586 = vtanh.pop %v1554
      %v1587 = vtanh.pop %v1555
      %v1588 = vtanh.pop %v1556
      %v1589 = vtanh.pop %v1557
      %v1590 = vtanh.pop %v1558
      %v1591 = vtanh.pop %v1559
      %v1592 = vtanh.pop %v1560
      %v1593 = vtanh.pop %v1561
      %v1594 = vtanh.pop %v1562
      %v1595 = vtanh.pop %v1563
      %v1596 = vadd.f32 %v1564, 1.0
      %v1597 = vadd.f32 %v1565, 1.0
      %v1598 = vadd.f32 %v1566, 1.0
      %v1599 = vadd.f32 %v1567, 1.0
      %v1600 = vadd.f32 %v1568, 1.0
      %v1601 = vadd.f32 %v1569, 1.0
      %v1602 = vadd.f32 %v1570, 1.0
      %v1603 = vadd.f32 %v1571, 1.0
      %v1604 = vadd.f32 %v1572, 1.0
      %v1605 = vadd.f32 %v1573, 1.0
      %v1606 = vadd.f32 %v1574, 1.0
      %v1607 = vadd.f32 %v1575, 1.0
      %v1608 = vadd.f32 %v1576, 1.0
      %v1609 = vadd.f32 %v1577, 1.0
      %v1610 = vadd.f32 %v1578, 1.0
      %v1611 = vadd.f32 %v1579, 1.0
      %v1612 = vadd.f32 %v1580, 1.0
      %v1613 = vadd.f32 %v1581, 1.0
      %v1614 = vadd.f32 %v1582, 1.0
      %v1615 = vadd.f32 %v1583, 1.0
      %v1616 = vadd.f32 %v1584, 1.0
      %v1617 = vadd.f32 %v1585, 1.0
      %v1618 = vadd.f32 %v1586, 1.0
      %v1619 = vadd.f32 %v1587, 1.0
      %v1620 = vadd.f32 %v1588, 1.0
      %v1621 = vadd.f32 %v1589, 1.0
      %v1622 = vadd.f32 %v1590, 1.0
      %v1623 = vadd.f32 %v1591, 1.0
      %v1624 = vadd.f32 %v1592, 1.0
      %v1625 = vadd.f32 %v1593, 1.0
      %v1626 = vadd.f32 %v1594, 1.0
      %v1627 = vadd.f32 %v1595, 1.0
      %v1628 = vmul.f32 %v1372, %v1596
      %v1629 = vmul.f32 %v1373, %v1597
      %v1630 = vmul.f32 %v1374, %v1598
      %v1631 = vmul.f32 %v1375, %v1599
      %v1632 = vmul.f32 %v1376, %v1600
      %v1633 = vmul.f32 %v1377, %v1601
      %v1634 = vmul.f32 %v1378, %v1602
      %v1635 = vmul.f32 %v1379, %v1603
      %v1636 = vmul.f32 %v1380, %v1604
      %v1637 = vmul.f32 %v1381, %v1605
      %v1638 = vmul.f32 %v1382, %v1606
      %v1639 = vmul.f32 %v1383, %v1607
      %v1640 = vmul.f32 %v1384, %v1608
      %v1641 = vmul.f32 %v1385, %v1609
      %v1642 = vmul.f32 %v1386, %v1610
      %v1643 = vmul.f32 %v1387, %v1611
      %v1644 = vmul.f32 %v1388, %v1612
      %v1645 = vmul.f32 %v1389, %v1613
      %v1646 = vmul.f32 %v1390, %v1614
      %v1647 = vmul.f32 %v1391, %v1615
      %v1648 = vmul.f32 %v1392, %v1616
      %v1649 = vmul.f32 %v1393, %v1617
      %v1650 = vmul.f32 %v1394, %v1618
      %v1651 = vmul.f32 %v1395, %v1619
      %v1652 = vmul.f32 %v1396, %v1620
      %v1653 = vmul.f32 %v1397, %v1621
      %v1654 = vmul.f32 %v1398, %v1622
      %v1655 = vmul.f32 %v1399, %v1623
      %v1656 = vmul.f32 %v1400, %v1624
      %v1657 = vmul.f32 %v1401, %v1625
      %v1658 = vmul.f32 %v1402, %v1626
      %v1659 = vmul.f32 %v1403, %v1627
      %v1660 = vpack.c.bf16 %v1636, %v1628
      %v1661 = vpack.c.bf16 %v1637, %v1629
      %v1662 = vpack.c.bf16 %v1638, %v1630
      %v1663 = vpack.c.bf16 %v1639, %v1631
      %v1664 = vpack.c.bf16 %v1640, %v1632
      %v1665 = vpack.c.bf16 %v1641, %v1633
      %v1666 = vpack.c.bf16 %v1642, %v1634
      %v1667 = vpack.c.bf16 %v1643, %v1635
      %v1668 = vpack.c.bf16 %v1652, %v1644
      %v1669 = vpack.c.bf16 %v1653, %v1645
      %v1670 = vpack.c.bf16 %v1654, %v1646
      %v1671 = vpack.c.bf16 %v1655, %v1647
      %v1672 = vpack.c.bf16 %v1656, %v1648
      %v1673 = vpack.c.bf16 %v1657, %v1649
      %v1674 = vpack.c.bf16 %v1658, %v1650
      %v1675 = vpack.c.bf16 %v1659, %v1651
      %v1692 = vunpack.c.l.b16 %v1660
      %v1693 = vunpack.c.l.b16 %v1661
      %v1694 = vunpack.c.l.b16 %v1662
      %v1695 = vunpack.c.l.b16 %v1663
      %v1696 = vunpack.c.l.b16 %v1664
      %v1697 = vunpack.c.l.b16 %v1665
      %v1698 = vunpack.c.l.b16 %v1666
      %v1699 = vunpack.c.l.b16 %v1667
      %v1700 = vunpack.c.h.b16 %v1660
      %v1701 = vunpack.c.h.b16 %v1661
      %v1702 = vunpack.c.h.b16 %v1662
      %v1703 = vunpack.c.h.b16 %v1663
      %v1704 = vunpack.c.h.b16 %v1664
      %v1705 = vunpack.c.h.b16 %v1665
      %v1706 = vunpack.c.h.b16 %v1666
      %v1707 = vunpack.c.h.b16 %v1667
      %v1708 = vunpack.c.l.b16 %v1668
      %v1709 = vunpack.c.l.b16 %v1669
      %v1710 = vunpack.c.l.b16 %v1670
      %v1711 = vunpack.c.l.b16 %v1671
      %v1712 = vunpack.c.l.b16 %v1672
      %v1713 = vunpack.c.l.b16 %v1673
      %v1714 = vunpack.c.l.b16 %v1674
      %v1715 = vunpack.c.l.b16 %v1675
      %v1716 = vunpack.c.h.b16 %v1668
      %v1717 = vunpack.c.h.b16 %v1669
      %v1718 = vunpack.c.h.b16 %v1670
      %v1719 = vunpack.c.h.b16 %v1671
      %v1720 = vunpack.c.h.b16 %v1672
      %v1721 = vunpack.c.h.b16 %v1673
      %v1722 = vunpack.c.h.b16 %v1674
      %v1723 = vunpack.c.h.b16 %v1675
      %v1724 = vpack.c.b16 %v1693, %v1692
      %v1725 = vpack.c.b16 %v1695, %v1694
      %v1726 = vpack.c.b16 %v1697, %v1696
      %v1727 = vpack.c.b16 %v1699, %v1698
      %v1728 = vpack.c.b16 %v1701, %v1700
      %v1729 = vpack.c.b16 %v1703, %v1702
      %v1730 = vpack.c.b16 %v1705, %v1704
      %v1731 = vpack.c.b16 %v1707, %v1706
      %v1732 = vpack.c.b16 %v1709, %v1708
      %v1733 = vpack.c.b16 %v1711, %v1710
      %v1734 = vpack.c.b16 %v1713, %v1712
      %v1735 = vpack.c.b16 %v1715, %v1714
      %v1736 = vpack.c.b16 %v1717, %v1716
      %v1737 = vpack.c.b16 %v1719, %v1718
      %v1738 = vpack.c.b16 %v1721, %v1720
      %v1739 = vpack.c.b16 %v1723, %v1722
      %1756 = vst [vmem:[%s231] sm:$0xff] %v1724
      %1757 = vst [vmem:[%s231 + $0x8] sm:$0xff] %v1725
      %1758 = vst [vmem:[%s231 + $0x10] sm:$0xff] %v1726
      %1759 = vst [vmem:[%s231 + $0x18] sm:$0xff] %v1727
      %1760 = vst [vmem:[%s231 + $0x20] sm:$0xff] %v1728
      %1761 = vst [vmem:[%s231 + $0x28] sm:$0xff] %v1729
      %1762 = vst [vmem:[%s231 + $0x30] sm:$0xff] %v1730
      %1763 = vst [vmem:[%s231 + $0x38] sm:$0xff] %v1731
      %1764 = vst [vmem:[%s231 + $0x40] sm:$0xff] %v1732
      %1765 = vst [vmem:[%s231 + $0x48] sm:$0xff] %v1733
      %1766 = vst [vmem:[%s231 + $0x50] sm:$0xff] %v1734
      %1767 = vst [vmem:[%s231 + $0x58] sm:$0xff] %v1735
      %1768 = vst [vmem:[%s231 + $0x60] sm:$0xff] %v1736
      %1769 = vst [vmem:[%s231 + $0x68] sm:$0xff] %v1737
      %1770 = vst [vmem:[%s231 + $0x70] sm:$0xff] %v1738
      %1771 = vst [vmem:[%s231 + $0x78] sm:$0xff] %v1739
      %s1772 = smul.u32 4, %s16
      %p1773 = scmp.lt.s32.totalorder %s1772, 7
      %s1774 = scalar_select %p1773, %s1772, 7
      %s1775 = smul.addr %s1774, 8
      %s1776 = smul.addr %s1775, 4
      %s1777 = scalar_lea.vmem %s5, %s1776
      // Predicated region
      $region41: #{gpt_forward.11} parent=39 // pred_check
        %p1778 = pneg %p144
      $region42: #{gpt_forward.11} parent=39 // pred_check_branch
        %1780 = sbr.rel (%p1778) target = $region44
      $region43: #{gpt_forward.11} parent=39 // pred_region
        %s1781 = smul.u32 4, %s16
      $region44: #{gpt_forward.11} parent=39 // pred_fallthru
        _
    $region40: #{gpt_forward.11} parent=5 // pred_fallthru
      _
    %p1782 = scmp.le.s32.totalorder 2, %s11
    // Predicated region
    $region45: #{gpt_forward.11} parent=5 // pred_check
      %p1783 = pneg %p1782
    $region46: #{gpt_forward.11} parent=5 // pred_check_branch
      %1785 = sbr.rel (%p1783) target = $region48
    $region47: #{gpt_forward.11} parent=5 // pred_region
      %s1786 = ssub.s32 %s11, 2
      // Predicated region
      $region49: #{gpt_forward.11} parent=47 // pred_check
        %p1787 = pneg %p150
      $region50: #{gpt_forward.11} parent=47 // pred_check_branch
        %1789 = sbr.rel (%p1787) target = $region52
      $region51: #{gpt_forward.11} parent=47 // pred_region
        %s1790 = smul.u32 4, %s17
        %p1791 = scmp.lt.s32.totalorder %s1790, 7
        %s1792 = scalar_select %p1791, %s1790, 7
        %s1793 = smul.addr %s1792, 8
        %s1794 = smul.addr %s1793, 4
        %s1795 = scalar_lea.vmem %s5, %s1794
      $region52: #{gpt_forward.11} parent=47 // pred_fallthru
        _
    $region48: #{gpt_forward.11} parent=5 // pred_fallthru
      _
  $region6: #{gpt_forward.11} parent=0 // loop_footer
    %s15 = sadd.s32 1, %s11
  $region7: #{gpt_forward.11} parent=0 // loop_footer_branch
    %10 = sbr.rel target = $region3
  $region8: #{gpt_forward.11} parent=0 // loop_exit
    _

// kernel: gpt_forward.12
$region0: #{gpt_forward.12}
  #allocation0 [shape = 'u32[]', space=smem, size = 0x4, offset = 0x4, fixed_abs, tag = 'smem constant byte address 0x4 - core index']
  #allocation1 [shape = 'u32[144,128]{1,0:T(1,128)}', space=vmem, size = 0x12000, scoped, tag = 'internal scratch']
  %s0 = inlined_call_operand.vmem [shape: bf16[64,1024], index: 0, kind: input, shape index: {}]
  %s1 = inlined_call_operand.vmem [shape: bf16[1024,256], index: 1, kind: input, shape index: {}]
  %s2 = inlined_call_operand.vmem [shape: f32[1,256], index: 2, kind: input, shape index: {}]
  %s3 = inlined_call_operand.vmem [shape: f32[64,256], index: 3, kind: input, shape index: {}]
  %s4 = inlined_call_operand.vmem [shape: f32[64,256], index: 4, kind: output, shape index: {}]
  %s5 = sld [smem:[#allocation0]]
  $region49: #{gpt_forward.12} parent=0
    _
  %s7 = ssub.s32 1, %s5
  %s8 = scalar_select 0, %s7, %s5
  loop: start=0, step=1, limit=4
  $region2: #{gpt_forward.12} parent=0 // loop_pre_header
    _
  $region3: #{gpt_forward.12} parent=0 // loop_header
    %s10 = sphi 0, %s14
    %p11 = scmp.ge.s32.totalorder %s10, 4
    %s20 = sphi 0, %s22
    %s23 = sphi 0, %s20
    %s24 = sphi 0, %s23
    %s40 = sphi 0, %s24
    %s44 = sphi 0, %s44
    %s46 = sphi 0, %s44
    %s47 = sphi 0, %s46
    %s61 = sphi 0, %s47
    %s65 = sphi 0, %s65
    %s67 = sphi 0, %s65
    %s68 = sphi 0, %s67
    %s82 = sphi 0, %s68
    %s88 = sphi 0, %s90
    %s91 = sphi 0, %s88
    %s92 = sphi 0, %s91
    %s108 = sphi 0, %s92
    %s114 = sphi 0, %s116
    %s117 = sphi 0, %s114
    %s118 = sphi 0, %s117
    %s134 = sphi 0, %s118
  $region4: #{gpt_forward.12} parent=0 // loop_header_branch
    %13 = sbr.rel (%p11) target = $region8
  $region5: #{gpt_forward.12} parent=0 // loop_body
    %s15 = ssub.s32 %s10, 1
    %s16 = ssub.s32 %s10, 2
    %s17 = sadd.s32 %s10, 1
    %s18 = ssub.s32 %s10, %s17
    %p19 = scmp.eq.s32.totalorder %s18, 0
    %s21 = sadd.s32 %s20, 1
    %s22 = scalar_select %p19, %s20, %s21
    %p25 = pneg %p19
    %p26 = scmp.eq.s32.totalorder %s10, 1
    %p27 = por %p25, %p26
    %p28 = scmp.ne.s32.totalorder %s20, %s23
    %p29 = scmp.eq.s32.totalorder %s10, 0
    %p30 = por %p28, %p29
    %p31 = scmp.ne.s32.totalorder %s20, %s23
    %p32 = scmp.eq.s32.totalorder %s15, 1
    %p33 = por %p31, %p32
    %p34 = scmp.ne.s32.totalorder %s23, %s24
    %p35 = scmp.eq.s32.totalorder %s15, 0
    %p36 = por %p34, %p35
    %p37 = scmp.ne.s32.totalorder %s23, %s24
    %p38 = scmp.eq.s32.totalorder %s16, 1
    %p39 = por %p37, %p38
    %p41 = scmp.ne.s32.totalorder %s24, %s40
    %p42 = scmp.eq.s32.totalorder %s16, 0
    %p43 = por %p41, %p42
    %s45 = sadd.s32 %s44, 1
    %p48 = scmp.eq.s32.totalorder %s10, 1
    %p49 = scmp.ne.s32.totalorder %s44, %s46
    %p50 = scmp.eq.s32.totalorder %s10, 0
    %p51 = por %p49, %p50
    %p52 = scmp.ne.s32.totalorder %s44, %s46
    %p53 = scmp.eq.s32.totalorder %s15, 1
    %p54 = por %p52, %p53
    %p55 = scmp.ne.s32.totalorder %s46, %s47
    %p56 = scmp.eq.s32.totalorder %s15, 0
    %p57 = por %p55, %p56
    %p58 = scmp.ne.s32.totalorder %s46, %s47
    %p59 = scmp.eq.s32.totalorder %s16, 1
    %p60 = por %p58, %p59
    %p62 = scmp.ne.s32.totalorder %s47, %s61
    %p63 = scmp.eq.s32.totalorder %s16, 0
    %p64 = por %p62, %p63
    %s66 = sadd.s32 %s65, 1
    %p69 = scmp.eq.s32.totalorder %s10, 1
    %p70 = scmp.ne.s32.totalorder %s65, %s67
    %p71 = scmp.eq.s32.totalorder %s10, 0
    %p72 = por %p70, %p71
    %p73 = scmp.ne.s32.totalorder %s65, %s67
    %p74 = scmp.eq.s32.totalorder %s15, 1
    %p75 = por %p73, %p74
    %p76 = scmp.ne.s32.totalorder %s67, %s68
    %p77 = scmp.eq.s32.totalorder %s15, 0
    %p78 = por %p76, %p77
    %p79 = scmp.ne.s32.totalorder %s67, %s68
    %p80 = scmp.eq.s32.totalorder %s16, 1
    %p81 = por %p79, %p80
    %p83 = scmp.ne.s32.totalorder %s68, %s82
    %p84 = scmp.eq.s32.totalorder %s16, 0
    %p85 = por %p83, %p84
    %s86 = ssub.s32 %s10, %s17
    %p87 = scmp.eq.s32.totalorder %s86, 0
    %s89 = sadd.s32 %s88, 1
    %s90 = scalar_select %p87, %s88, %s89
    %p93 = pneg %p87
    %p94 = scmp.eq.s32.totalorder %s10, 1
    %p95 = por %p93, %p94
    %p96 = scmp.ne.s32.totalorder %s88, %s91
    %p97 = scmp.eq.s32.totalorder %s10, 0
    %p98 = por %p96, %p97
    %p99 = scmp.ne.s32.totalorder %s88, %s91
    %p100 = scmp.eq.s32.totalorder %s15, 1
    %p101 = por %p99, %p100
    %p102 = scmp.ne.s32.totalorder %s91, %s92
    %p103 = scmp.eq.s32.totalorder %s15, 0
    %p104 = por %p102, %p103
    %p105 = scmp.ne.s32.totalorder %s91, %s92
    %p106 = scmp.eq.s32.totalorder %s16, 1
    %p107 = por %p105, %p106
    %p109 = scmp.ne.s32.totalorder %s92, %s108
    %p110 = scmp.eq.s32.totalorder %s16, 0
    %p111 = por %p109, %p110
    %s112 = ssub.s32 %s10, %s17
    %p113 = scmp.eq.s32.totalorder %s112, 0
    %s115 = sadd.s32 %s114, 1
    %s116 = scalar_select %p113, %s114, %s115
    %p119 = pneg %p113
    %p120 = scmp.eq.s32.totalorder %s10, 1
    %p121 = por %p119, %p120
    %p122 = scmp.ne.s32.totalorder %s114, %s117
    %p123 = scmp.eq.s32.totalorder %s10, 0
    %p124 = por %p122, %p123
    %p125 = scmp.ne.s32.totalorder %s114, %s117
    %p126 = scmp.eq.s32.totalorder %s15, 1
    %p127 = por %p125, %p126
    %p128 = scmp.ne.s32.totalorder %s117, %s118
    %p129 = scmp.eq.s32.totalorder %s15, 0
    %p130 = por %p128, %p129
    %p131 = scmp.ne.s32.totalorder %s117, %s118
    %p132 = scmp.eq.s32.totalorder %s16, 1
    %p133 = por %p131, %p132
    %p135 = scmp.ne.s32.totalorder %s118, %s134
    %p136 = scmp.eq.s32.totalorder %s16, 0
    %p137 = por %p135, %p136
    %p138 = scmp.le.s32.totalorder 1, %s10
    %p139 = scmp.lt.s32.totalorder %s10, 3
    %p140 = pnand %p138, %p139
    %p141 = pneg %p140
    // Predicated region
    $region9: #{gpt_forward.12} parent=5 // pred_check
      _
    $region10: #{gpt_forward.12} parent=5 // pred_check_branch
      %143 = sbr.rel (%p140) target = $region12
    $region11: #{gpt_forward.12} parent=5 // pred_region
      %s144 = ssub.s32 %s10, 1
      // Predicated region
      $region13: #{gpt_forward.12} parent=11 // pred_check
        %p145 = pneg %p57
      $region14: #{gpt_forward.12} parent=11 // pred_check_branch
        %147 = sbr.rel (%p145) target = $region16
      $region15: #{gpt_forward.12} parent=11 // pred_region
        _
      $region16: #{gpt_forward.12} parent=11 // pred_fallthru
        _
      // Predicated region
      $region17: #{gpt_forward.12} parent=11 // pred_check
        %p148 = pneg %p78
      $region18: #{gpt_forward.12} parent=11 // pred_check_branch
        %150 = sbr.rel (%p148) target = $region20
      $region19: #{gpt_forward.12} parent=11 // pred_region
        _
      $region20: #{gpt_forward.12} parent=11 // pred_fallthru
        _
    $region12: #{gpt_forward.12} parent=5 // pred_fallthru
      _
    %p151 = scmp.lt.s32.totalorder %s10, 2
    // Predicated region
    $region21: #{gpt_forward.12} parent=5 // pred_check
      %p152 = pneg %p151
    $region22: #{gpt_forward.12} parent=5 // pred_check_branch
      %154 = sbr.rel (%p152) target = $region24
    $region23: #{gpt_forward.12} parent=5 // pred_region
      // Predicated region
      $region25: #{gpt_forward.12} parent=23 // pred_check
        %p155 = pneg %p30
      $region26: #{gpt_forward.12} parent=23 // pred_check_branch
        %157 = sbr.rel (%p155) target = $region28
      $region27: #{gpt_forward.12} parent=23 // pred_region
        %s158 = smul.u32 4, %s10
        %p159 = scmp.lt.s32.totalorder %s158, 7
        %s160 = scalar_select %p159, %s158, 7
        %s161 = smul.addr %s160, 8
        %s162 = smul.addr %s161, 4
        %s163 = scalar_lea.vmem %s0, %s162
        %s164 = smul.u32 4, %s10
      $region28: #{gpt_forward.12} parent=23 // pred_fallthru
        _
      // Predicated region
      $region29: #{gpt_forward.12} parent=23 // pred_check
        %p165 = pneg %p98
      $region30: #{gpt_forward.12} parent=23 // pred_check_branch
        %167 = sbr.rel (%p165) target = $region32
      $region31: #{gpt_forward.12} parent=23 // pred_region
        %s168 = smul.u32 4, %s10
        %p169 = scmp.lt.s32.totalorder %s168, 7
        %s170 = scalar_select %p169, %s168, 7
        %s171 = smul.addr %s170, 2
        %s172 = smul.addr %s171, 8
        %s173 = scalar_lea.vmem %s3, %s172
        %s174 = smul.u32 4, %s10
      $region32: #{gpt_forward.12} parent=23 // pred_fallthru
        _
    $region24: #{gpt_forward.12} parent=5 // pred_fallthru
      _
    %p175 = scmp.le.s32.totalorder 1, %s10
    %p176 = scmp.lt.s32.totalorder %s10, 3
    %p177 = pnand %p175, %p176
    %p178 = pneg %p177
    // Predicated region
    $region33: #{gpt_forward.12} parent=5 // pred_check
      _
    $region34: #{gpt_forward.12} parent=5 // pred_check_branch
      %180 = sbr.rel (%p177) target = $region36
    $region35: #{gpt_forward.12} parent=5 // pred_region
      %s181 = ssub.s32 %s10, 1
      %s182 = smul.u32 4, %s15
      %p183 = scmp.lt.s32.totalorder %s182, 7
      %s184 = scalar_select %p183, %s182, 7
      %s185 = smul.addr %s184, 8
      %s186 = smul.addr %s185, 4
      %s187 = scalar_lea.vmem %s0, %s186
      %p188 = pneg %p36
      %p189 = pneg %p33
      %p190 = pneg %p57
      %p191 = pneg %p54
      %p192 = pneg %p78
      %p193 = pneg %p75
      %s194 = smul.u32 4, %s15
      %p195 = scmp.lt.s32.totalorder %s194, 7
      %s196 = scalar_select %p195, %s194, 7
      %s197 = smul.addr %s196, 2
      %s198 = smul.addr %s197, 8
      %s199 = scalar_lea.vmem %s3, %s198
      %p200 = pneg %p104
      %p201 = pneg %p101
      %p202 = pneg %p130
      %p203 = pneg %p127
      %s204 = smul.u32 4, %s15
      %p205 = scmp.lt.s32.totalorder %s204, 7
      %s206 = scalar_select %p205, %s204, 7
      %s207 = smul.addr %s206, 2
      %s208 = smul.addr %s207, 8
      %s209 = scalar_lea.vmem %s4, %s208
      %s210 = smul.u32 4, %s15
      %p211 = scmp.lt.s32.totalorder %s210, 7
      %s212 = scalar_select %p211, %s210, 7
      %s213 = smul.addr %s212, 8
      %s214 = smul.addr %s213, 4
      %s215 = scalar_lea.vmem %s0, %s214
      %s216 = smul.u32 4, %s15
      %s217 = smul.u32 4, %s15
      %p218 = scmp.lt.s32.totalorder %s217, 7
      %s219 = scalar_select %p218, %s217, 7
      %s220 = smul.addr %s219, 2
      %s221 = smul.addr %s220, 8
      %s222 = scalar_lea.vmem %s3, %s221
      %s223 = smul.u32 4, %s15
      %s224 = smul.u32 4, %s15
      %p225 = scmp.lt.s32.totalorder %s224, 7
      %s226 = scalar_select %p225, %s224, 7
      %s227 = smul.addr %s226, 2
      %s228 = smul.addr %s227, 8
      %s229 = scalar_lea.vmem %s4, %s228
      %s230 = smul.u32 4, %s15
      %v231 = vld [vmem:[%s215] sm:$0xff]
      %v232 = vld [vmem:[%s215 + $0x8] sm:$0xff]
      %v233 = vld [vmem:[%s215 + $0x10] sm:$0xff]
      %v234 = vld [vmem:[%s215 + $0x18] sm:$0xff]
      %v235 = vld [vmem:[%s215 + $0x20] sm:$0xff]
      %v236 = vld [vmem:[%s215 + $0x28] sm:$0xff]
      %v237 = vld [vmem:[%s215 + $0x30] sm:$0xff]
      %v238 = vld [vmem:[%s215 + $0x38] sm:$0xff]
      %v239 = vld [vmem:[%s215 + $0x40] sm:$0xff]
      %v240 = vld [vmem:[%s215 + $0x48] sm:$0xff]
      %v241 = vld [vmem:[%s215 + $0x50] sm:$0xff]
      %v242 = vld [vmem:[%s215 + $0x58] sm:$0xff]
      %v243 = vld [vmem:[%s215 + $0x60] sm:$0xff]
      %v244 = vld [vmem:[%s215 + $0x68] sm:$0xff]
      %v245 = vld [vmem:[%s215 + $0x70] sm:$0xff]
      %v246 = vld [vmem:[%s215 + $0x78] sm:$0xff]
      %v247 = vld [vmem:[%s1] sm:$0xff]
      %v248 = vld [vmem:[%s1 + $0x8] sm:$0xff]
      %v249 = vld [vmem:[%s1 + $0x10] sm:$0xff]
      %v250 = vld [vmem:[%s1 + $0x18] sm:$0xff]
      %v251 = vld [vmem:[%s1 + $0x20] sm:$0xff]
      %v252 = vld [vmem:[%s1 + $0x28] sm:$0xff]
      %v253 = vld [vmem:[%s1 + $0x30] sm:$0xff]
      %v254 = vld [vmem:[%s1 + $0x38] sm:$0xff]
      %v255 = vld [vmem:[%s1 + $0x40] sm:$0xff]
      %v256 = vld [vmem:[%s1 + $0x48] sm:$0xff]
      %v257 = vld [vmem:[%s1 + $0x50] sm:$0xff]
      %v258 = vld [vmem:[%s1 + $0x58] sm:$0xff]
      %v259 = vld [vmem:[%s1 + $0x60] sm:$0xff]
      %v260 = vld [vmem:[%s1 + $0x68] sm:$0xff]
      %v261 = vld [vmem:[%s1 + $0x70] sm:$0xff]
      %v262 = vld [vmem:[%s1 + $0x78] sm:$0xff]
      %v263 = vld [vmem:[%s1 + $0x80] sm:$0xff]
      %v264 = vld [vmem:[%s1 + $0x88] sm:$0xff]
      %v265 = vld [vmem:[%s1 + $0x90] sm:$0xff]
      %v266 = vld [vmem:[%s1 + $0x98] sm:$0xff]
      %v267 = vld [vmem:[%s1 + $0xa0] sm:$0xff]
      %v268 = vld [vmem:[%s1 + $0xa8] sm:$0xff]
      %v269 = vld [vmem:[%s1 + $0xb0] sm:$0xff]
      %v270 = vld [vmem:[%s1 + $0xb8] sm:$0xff]
      %v271 = vld [vmem:[%s1 + $0xc0] sm:$0xff]
      %v272 = vld [vmem:[%s1 + $0xc8] sm:$0xff]
      %v273 = vld [vmem:[%s1 + $0xd0] sm:$0xff]
      %v274 = vld [vmem:[%s1 + $0xd8] sm:$0xff]
      %v275 = vld [vmem:[%s1 + $0xe0] sm:$0xff]
      %v276 = vld [vmem:[%s1 + $0xe8] sm:$0xff]
      %v277 = vld [vmem:[%s1 + $0xf0] sm:$0xff]
      %v278 = vld [vmem:[%s1 + $0xf8] sm:$0xff]
      %v279 = vld [vmem:[%s1 + $0x100] sm:$0xff]
      %v280 = vld [vmem:[%s1 + $0x108] sm:$0xff]
      %v281 = vld [vmem:[%s1 + $0x110] sm:$0xff]
      %v282 = vld [vmem:[%s1 + $0x118] sm:$0xff]
      %v283 = vld [vmem:[%s1 + $0x120] sm:$0xff]
      %v284 = vld [vmem:[%s1 + $0x128] sm:$0xff]
      %v285 = vld [vmem:[%s1 + $0x130] sm:$0xff]
      %v286 = vld [vmem:[%s1 + $0x138] sm:$0xff]
      %v287 = vld [vmem:[%s1 + $0x140] sm:$0xff]
      %v288 = vld [vmem:[%s1 + $0x148] sm:$0xff]
      %v289 = vld [vmem:[%s1 + $0x150] sm:$0xff]
      %v290 = vld [vmem:[%s1 + $0x158] sm:$0xff]
      %v291 = vld [vmem:[%s1 + $0x160] sm:$0xff]
      %v292 = vld [vmem:[%s1 + $0x168] sm:$0xff]
      %v293 = vld [vmem:[%s1 + $0x170] sm:$0xff]
      %v294 = vld [vmem:[%s1 + $0x178] sm:$0xff]
      %v295 = vld [vmem:[%s1 + $0x180] sm:$0xff]
      %v296 = vld [vmem:[%s1 + $0x188] sm:$0xff]
      %v297 = vld [vmem:[%s1 + $0x190] sm:$0xff]
      %v298 = vld [vmem:[%s1 + $0x198] sm:$0xff]
      %v299 = vld [vmem:[%s1 + $0x1a0] sm:$0xff]
      %v300 = vld [vmem:[%s1 + $0x1a8] sm:$0xff]
      %v301 = vld [vmem:[%s1 + $0x1b0] sm:$0xff]
      %v302 = vld [vmem:[%s1 + $0x1b8] sm:$0xff]
      %v303 = vld [vmem:[%s1 + $0x1c0] sm:$0xff]
      %v304 = vld [vmem:[%s1 + $0x1c8] sm:$0xff]
      %v305 = vld [vmem:[%s1 + $0x1d0] sm:$0xff]
      %v306 = vld [vmem:[%s1 + $0x1d8] sm:$0xff]
      %v307 = vld [vmem:[%s1 + $0x1e0] sm:$0xff]
      %v308 = vld [vmem:[%s1 + $0x1e8] sm:$0xff]
      %v309 = vld [vmem:[%s1 + $0x1f0] sm:$0xff]
      %v310 = vld [vmem:[%s1 + $0x1f8] sm:$0xff]
      %v311 = vld [vmem:[%s1 + $0x200] sm:$0xff]
      %v312 = vld [vmem:[%s1 + $0x208] sm:$0xff]
      %v313 = vld [vmem:[%s1 + $0x210] sm:$0xff]
      %v314 = vld [vmem:[%s1 + $0x218] sm:$0xff]
      %v315 = vld [vmem:[%s1 + $0x220] sm:$0xff]
      %v316 = vld [vmem:[%s1 + $0x228] sm:$0xff]
      %v317 = vld [vmem:[%s1 + $0x230] sm:$0xff]
      %v318 = vld [vmem:[%s1 + $0x238] sm:$0xff]
      %v319 = vld [vmem:[%s1 + $0x240] sm:$0xff]
      %v320 = vld [vmem:[%s1 + $0x248] sm:$0xff]
      %v321 = vld [vmem:[%s1 + $0x250] sm:$0xff]
      %v322 = vld [vmem:[%s1 + $0x258] sm:$0xff]
      %v323 = vld [vmem:[%s1 + $0x260] sm:$0xff]
      %v324 = vld [vmem:[%s1 + $0x268] sm:$0xff]
      %v325 = vld [vmem:[%s1 + $0x270] sm:$0xff]
      %v326 = vld [vmem:[%s1 + $0x278] sm:$0xff]
      %v327 = vld [vmem:[%s1 + $0x280] sm:$0xff]
      %v328 = vld [vmem:[%s1 + $0x288] sm:$0xff]
      %v329 = vld [vmem:[%s1 + $0x290] sm:$0xff]
      %v330 = vld [vmem:[%s1 + $0x298] sm:$0xff]
      %v331 = vld [vmem:[%s1 + $0x2a0] sm:$0xff]
      %v332 = vld [vmem:[%s1 + $0x2a8] sm:$0xff]
      %v333 = vld [vmem:[%s1 + $0x2b0] sm:$0xff]
      %v334 = vld [vmem:[%s1 + $0x2b8] sm:$0xff]
      %v335 = vld [vmem:[%s1 + $0x2c0] sm:$0xff]
      %v336 = vld [vmem:[%s1 + $0x2c8] sm:$0xff]
      %v337 = vld [vmem:[%s1 + $0x2d0] sm:$0xff]
      %v338 = vld [vmem:[%s1 + $0x2d8] sm:$0xff]
      %v339 = vld [vmem:[%s1 + $0x2e0] sm:$0xff]
      %v340 = vld [vmem:[%s1 + $0x2e8] sm:$0xff]
      %v341 = vld [vmem:[%s1 + $0x2f0] sm:$0xff]
      %v342 = vld [vmem:[%s1 + $0x2f8] sm:$0xff]
      %v343 = vld [vmem:[%s1 + $0x300] sm:$0xff]
      %v344 = vld [vmem:[%s1 + $0x308] sm:$0xff]
      %v345 = vld [vmem:[%s1 + $0x310] sm:$0xff]
      %v346 = vld [vmem:[%s1 + $0x318] sm:$0xff]
      %v347 = vld [vmem:[%s1 + $0x320] sm:$0xff]
      %v348 = vld [vmem:[%s1 + $0x328] sm:$0xff]
      %v349 = vld [vmem:[%s1 + $0x330] sm:$0xff]
      %v350 = vld [vmem:[%s1 + $0x338] sm:$0xff]
      %v351 = vld [vmem:[%s1 + $0x340] sm:$0xff]
      %v352 = vld [vmem:[%s1 + $0x348] sm:$0xff]
      %v353 = vld [vmem:[%s1 + $0x350] sm:$0xff]
      %v354 = vld [vmem:[%s1 + $0x358] sm:$0xff]
      %v355 = vld [vmem:[%s1 + $0x360] sm:$0xff]
      %v356 = vld [vmem:[%s1 + $0x368] sm:$0xff]
      %v357 = vld [vmem:[%s1 + $0x370] sm:$0xff]
      %v358 = vld [vmem:[%s1 + $0x378] sm:$0xff]
      %v359 = vld [vmem:[%s1 + $0x380] sm:$0xff]
      %v360 = vld [vmem:[%s1 + $0x388] sm:$0xff]
      %v361 = vld [vmem:[%s1 + $0x390] sm:$0xff]
      %v362 = vld [vmem:[%s1 + $0x398] sm:$0xff]
      %v363 = vld [vmem:[%s1 + $0x3a0] sm:$0xff]
      %v364 = vld [vmem:[%s1 + $0x3a8] sm:$0xff]
      %v365 = vld [vmem:[%s1 + $0x3b0] sm:$0xff]
      %v366 = vld [vmem:[%s1 + $0x3b8] sm:$0xff]
      %v367 = vld [vmem:[%s1 + $0x3c0] sm:$0xff]
      %v368 = vld [vmem:[%s1 + $0x3c8] sm:$0xff]
      %v369 = vld [vmem:[%s1 + $0x3d0] sm:$0xff]
      %v370 = vld [vmem:[%s1 + $0x3d8] sm:$0xff]
      %v371 = vld [vmem:[%s1 + $0x3e0] sm:$0xff]
      %v372 = vld [vmem:[%s1 + $0x3e8] sm:$0xff]
      %v373 = vld [vmem:[%s1 + $0x3f0] sm:$0xff]
      %v374 = vld [vmem:[%s1 + $0x3f8] sm:$0xff]
      %v375 = vld [vmem:[%s2] sm:$0x3]
      %v377 = vlaneseq
      %v378 = vshrl.u32 %v377, 7
      %v379 = vsub.s32 0, %v378
      %v380 = vrot.slane %v375, %v379
      %v381 = vlaneseq
      %v382 = vshrl.u32 %v381, 7
      %v383 = vsub.s32 1, %v382
      %v384 = vrot.slane %v375, %v383
      %v403 = vunpack.c.l.b16 %v231
      %v404 = vunpack.c.h.b16 %v231
      %v405 = vunpack.c.l.b16 %v232
      %v406 = vunpack.c.h.b16 %v232
      %v407 = vunpack.c.l.b16 %v233
      %v408 = vunpack.c.h.b16 %v233
      %v409 = vunpack.c.l.b16 %v234
      %v410 = vunpack.c.h.b16 %v234
      %v411 = vunpack.c.l.b16 %v235
      %v412 = vunpack.c.h.b16 %v235
      %v413 = vunpack.c.l.b16 %v236
      %v414 = vunpack.c.h.b16 %v236
      %v415 = vunpack.c.l.b16 %v237
      %v416 = vunpack.c.h.b16 %v237
      %v417 = vunpack.c.l.b16 %v238
      %v418 = vunpack.c.h.b16 %v238
      %v419 = vunpack.c.l.b16 %v239
      %v420 = vunpack.c.h.b16 %v239
      %v421 = vunpack.c.l.b16 %v240
      %v422 = vunpack.c.h.b16 %v240
      %v423 = vunpack.c.l.b16 %v241
      %v424 = vunpack.c.h.b16 %v241
      %v425 = vunpack.c.l.b16 %v242
      %v426 = vunpack.c.h.b16 %v242
      %v427 = vunpack.c.l.b16 %v243
      %v428 = vunpack.c.h.b16 %v243
      %v429 = vunpack.c.l.b16 %v244
      %v430 = vunpack.c.h.b16 %v244
      %v431 = vunpack.c.l.b16 %v245
      %v432 = vunpack.c.h.b16 %v245
      %v433 = vunpack.c.l.b16 %v246
      %v434 = vunpack.c.h.b16 %v246
      %v435 = vpack.c.b16 %v411, %v403
      %v436 = vpack.c.b16 %v412, %v404
      %v437 = vpack.c.b16 %v413, %v405
      %v438 = vpack.c.b16 %v414, %v406
      %v439 = vpack.c.b16 %v415, %v407
      %v440 = vpack.c.b16 %v416, %v408
      %v441 = vpack.c.b16 %v417, %v409
      %v442 = vpack.c.b16 %v418, %v410
      %v443 = vpack.c.b16 %v427, %v419
      %v444 = vpack.c.b16 %v428, %v420
      %v445 = vpack.c.b16 %v429, %v421
      %v446 = vpack.c.b16 %v430, %v422
      %v447 = vpack.c.b16 %v431, %v423
      %v448 = vpack.c.b16 %v432, %v424
      %v449 = vpack.c.b16 %v433, %v425
      %v450 = vpack.c.b16 %v434, %v426
      %v595 = vunpack.c.l.b16 %v247
      %v596 = vunpack.c.h.b16 %v247
      %v597 = vunpack.c.l.b16 %v248
      %v598 = vunpack.c.h.b16 %v248
      %v599 = vunpack.c.l.b16 %v249
      %v600 = vunpack.c.h.b16 %v249
      %v601 = vunpack.c.l.b16 %v250
      %v602 = vunpack.c.h.b16 %v250
      %v603 = vunpack.c.l.b16 %v251
      %v604 = vunpack.c.h.b16 %v251
      %v605 = vunpack.c.l.b16 %v252
      %v606 = vunpack.c.h.b16 %v252
      %v607 = vunpack.c.l.b16 %v253
      %v608 = vunpack.c.h.b16 %v253
      %v609 = vunpack.c.l.b16 %v254
      %v610 = vunpack.c.h.b16 %v254
      %v611 = vunpack.c.l.b16 %v255
      %v612 = vunpack.c.h.b16 %v255
      %v613 = vunpack.c.l.b16 %v256
      %v614 = vunpack.c.h.b16 %v256
      %v615 = vunpack.c.l.b16 %v257
      %v616 = vunpack.c.h.b16 %v257
      %v617 = vunpack.c.l.b16 %v258
      %v618 = vunpack.c.h.b16 %v258
      %v619 = vunpack.c.l.b16 %v259
      %v620 = vunpack.c.h.b16 %v259
      %v621 = vunpack.c.l.b16 %v260
      %v622 = vunpack.c.h.b16 %v260
      %v623 = vunpack.c.l.b16 %v261
      %v624 = vunpack.c.h.b16 %v261
      %v625 = vunpack.c.l.b16 %v262
      %v626 = vunpack.c.h.b16 %v262
      %v627 = vunpack.c.l.b16 %v263
      %v628 = vunpack.c.h.b16 %v263
      %v629 = vunpack.c.l.b16 %v264
      %v630 = vunpack.c.h.b16 %v264
      %v631 = vunpack.c.l.b16 %v265
      %v632 = vunpack.c.h.b16 %v265
      %v633 = vunpack.c.l.b16 %v266
      %v634 = vunpack.c.h.b16 %v266
      %v635 = vunpack.c.l.b16 %v267
      %v636 = vunpack.c.h.b16 %v267
      %v637 = vunpack.c.l.b16 %v268
      %v638 = vunpack.c.h.b16 %v268
      %v639 = vunpack.c.l.b16 %v269
      %v640 = vunpack.c.h.b16 %v269
      %v641 = vunpack.c.l.b16 %v270
      %v642 = vunpack.c.h.b16 %v270
      %v643 = vunpack.c.l.b16 %v271
      %v644 = vunpack.c.h.b16 %v271
      %v645 = vunpack.c.l.b16 %v272
      %v646 = vunpack.c.h.b16 %v272
      %v647 = vunpack.c.l.b16 %v273
      %v648 = vunpack.c.h.b16 %v273
      %v649 = vunpack.c.l.b16 %v274
      %v650 = vunpack.c.h.b16 %v274
      %v651 = vunpack.c.l.b16 %v275
      %v652 = vunpack.c.h.b16 %v275
      %v653 = vunpack.c.l.b16 %v276
      %v654 = vunpack.c.h.b16 %v276
      %v655 = vunpack.c.l.b16 %v277
      %v656 = vunpack.c.h.b16 %v277
      %v657 = vunpack.c.l.b16 %v278
      %v658 = vunpack.c.h.b16 %v278
      %v659 = vunpack.c.l.b16 %v279
      %v660 = vunpack.c.h.b16 %v279
      %v661 = vunpack.c.l.b16 %v280
      %v662 = vunpack.c.h.b16 %v280
      %v663 = vunpack.c.l.b16 %v281
      %v664 = vunpack.c.h.b16 %v281
      %v665 = vunpack.c.l.b16 %v282
      %v666 = vunpack.c.h.b16 %v282
      %v667 = vunpack.c.l.b16 %v283
      %v668 = vunpack.c.h.b16 %v283
      %v669 = vunpack.c.l.b16 %v284
      %v670 = vunpack.c.h.b16 %v284
      %v671 = vunpack.c.l.b16 %v285
      %v672 = vunpack.c.h.b16 %v285
      %v673 = vunpack.c.l.b16 %v286
      %v674 = vunpack.c.h.b16 %v286
      %v675 = vunpack.c.l.b16 %v287
      %v676 = vunpack.c.h.b16 %v287
      %v677 = vunpack.c.l.b16 %v288
      %v678 = vunpack.c.h.b16 %v288
      %v679 = vunpack.c.l.b16 %v289
      %v680 = vunpack.c.h.b16 %v289
      %v681 = vunpack.c.l.b16 %v290
      %v682 = vunpack.c.h.b16 %v290
      %v683 = vunpack.c.l.b16 %v291
      %v684 = vunpack.c.h.b16 %v291
      %v685 = vunpack.c.l.b16 %v292
      %v686 = vunpack.c.h.b16 %v292
      %v687 = vunpack.c.l.b16 %v293
      %v688 = vunpack.c.h.b16 %v293
      %v689 = vunpack.c.l.b16 %v294
      %v690 = vunpack.c.h.b16 %v294
      %v691 = vunpack.c.l.b16 %v295
      %v692 = vunpack.c.h.b16 %v295
      %v693 = vunpack.c.l.b16 %v296
      %v694 = vunpack.c.h.b16 %v296
      %v695 = vunpack.c.l.b16 %v297
      %v696 = vunpack.c.h.b16 %v297
      %v697 = vunpack.c.l.b16 %v298
      %v698 = vunpack.c.h.b16 %v298
      %v699 = vunpack.c.l.b16 %v299
      %v700 = vunpack.c.h.b16 %v299
      %v701 = vunpack.c.l.b16 %v300
      %v702 = vunpack.c.h.b16 %v300
      %v703 = vunpack.c.l.b16 %v301
      %v704 = vunpack.c.h.b16 %v301
      %v705 = vunpack.c.l.b16 %v302
      %v706 = vunpack.c.h.b16 %v302
      %v707 = vunpack.c.l.b16 %v303
      %v708 = vunpack.c.h.b16 %v303
      %v709 = vunpack.c.l.b16 %v304
      %v710 = vunpack.c.h.b16 %v304
      %v711 = vunpack.c.l.b16 %v305
      %v712 = vunpack.c.h.b16 %v305
      %v713 = vunpack.c.l.b16 %v306
      %v714 = vunpack.c.h.b16 %v306
      %v715 = vunpack.c.l.b16 %v307
      %v716 = vunpack.c.h.b16 %v307
      %v717 = vunpack.c.l.b16 %v308
      %v718 = vunpack.c.h.b16 %v308
      %v719 = vunpack.c.l.b16 %v309
      %v720 = vunpack.c.h.b16 %v309
      %v721 = vunpack.c.l.b16 %v310
      %v722 = vunpack.c.h.b16 %v310
      %v723 = vunpack.c.l.b16 %v311
      %v724 = vunpack.c.h.b16 %v311
      %v725 = vunpack.c.l.b16 %v312
      %v726 = vunpack.c.h.b16 %v312
      %v727 = vunpack.c.l.b16 %v313
      %v728 = vunpack.c.h.b16 %v313
      %v729 = vunpack.c.l.b16 %v314
      %v730 = vunpack.c.h.b16 %v314
      %v731 = vunpack.c.l.b16 %v315
      %v732 = vunpack.c.h.b16 %v315
      %v733 = vunpack.c.l.b16 %v316
      %v734 = vunpack.c.h.b16 %v316
      %v735 = vunpack.c.l.b16 %v317
      %v736 = vunpack.c.h.b16 %v317
      %v737 = vunpack.c.l.b16 %v318
      %v738 = vunpack.c.h.b16 %v318
      %v739 = vunpack.c.l.b16 %v319
      %v740 = vunpack.c.h.b16 %v319
      %v741 = vunpack.c.l.b16 %v320
      %v742 = vunpack.c.h.b16 %v320
      %v743 = vunpack.c.l.b16 %v321
      %v744 = vunpack.c.h.b16 %v321
      %v745 = vunpack.c.l.b16 %v322
      %v746 = vunpack.c.h.b16 %v322
      %v747 = vunpack.c.l.b16 %v323
      %v748 = vunpack.c.h.b16 %v323
      %v749 = vunpack.c.l.b16 %v324
      %v750 = vunpack.c.h.b16 %v324
      %v751 = vunpack.c.l.b16 %v325
      %v752 = vunpack.c.h.b16 %v325
      %v753 = vunpack.c.l.b16 %v326
      %v754 = vunpack.c.h.b16 %v326
      %v755 = vunpack.c.l.b16 %v327
      %v756 = vunpack.c.h.b16 %v327
      %v757 = vunpack.c.l.b16 %v328
      %v758 = vunpack.c.h.b16 %v328
      %v759 = vunpack.c.l.b16 %v329
      %v760 = vunpack.c.h.b16 %v329
      %v761 = vunpack.c.l.b16 %v330
      %v762 = vunpack.c.h.b16 %v330
      %v763 = vunpack.c.l.b16 %v331
      %v764 = vunpack.c.h.b16 %v331
      %v765 = vunpack.c.l.b16 %v332
      %v766 = vunpack.c.h.b16 %v332
      %v767 = vunpack.c.l.b16 %v333
      %v768 = vunpack.c.h.b16 %v333
      %v769 = vunpack.c.l.b16 %v334
      %v770 = vunpack.c.h.b16 %v334
      %v771 = vunpack.c.l.b16 %v335
      %v772 = vunpack.c.h.b16 %v335
      %v773 = vunpack.c.l.b16 %v336
      %v774 = vunpack.c.h.b16 %v336
      %v775 = vunpack.c.l.b16 %v337
      %v776 = vunpack.c.h.b16 %v337
      %v777 = vunpack.c.l.b16 %v338
      %v778 = vunpack.c.h.b16 %v338
      %v779 = vunpack.c.l.b16 %v339
      %v780 = vunpack.c.h.b16 %v339
      %v781 = vunpack.c.l.b16 %v340
      %v782 = vunpack.c.h.b16 %v340
      %v783 = vunpack.c.l.b16 %v341
      %v784 = vunpack.c.h.b16 %v341
      %v785 = vunpack.c.l.b16 %v342
      %v786 = vunpack.c.h.b16 %v342
      %v787 = vunpack.c.l.b16 %v343
      %v788 = vunpack.c.h.b16 %v343
      %v789 = vunpack.c.l.b16 %v344
      %v790 = vunpack.c.h.b16 %v344
      %v791 = vunpack.c.l.b16 %v345
      %v792 = vunpack.c.h.b16 %v345
      %v793 = vunpack.c.l.b16 %v346
      %v794 = vunpack.c.h.b16 %v346
      %v795 = vunpack.c.l.b16 %v347
      %v796 = vunpack.c.h.b16 %v347
      %v797 = vunpack.c.l.b16 %v348
      %v798 = vunpack.c.h.b16 %v348
      %v799 = vunpack.c.l.b16 %v349
      %v800 = vunpack.c.h.b16 %v349
      %v801 = vunpack.c.l.b16 %v350
      %v802 = vunpack.c.h.b16 %v350
      %v803 = vunpack.c.l.b16 %v351
      %v804 = vunpack.c.h.b16 %v351
      %v805 = vunpack.c.l.b16 %v352
      %v806 = vunpack.c.h.b16 %v352
      %v807 = vunpack.c.l.b16 %v353
      %v808 = vunpack.c.h.b16 %v353
      %v809 = vunpack.c.l.b16 %v354
      %v810 = vunpack.c.h.b16 %v354
      %v811 = vunpack.c.l.b16 %v355
      %v812 = vunpack.c.h.b16 %v355
      %v813 = vunpack.c.l.b16 %v356
      %v814 = vunpack.c.h.b16 %v356
      %v815 = vunpack.c.l.b16 %v357
      %v816 = vunpack.c.h.b16 %v357
      %v817 = vunpack.c.l.b16 %v358
      %v818 = vunpack.c.h.b16 %v358
      %v819 = vunpack.c.l.b16 %v359
      %v820 = vunpack.c.h.b16 %v359
      %v821 = vunpack.c.l.b16 %v360
      %v822 = vunpack.c.h.b16 %v360
      %v823 = vunpack.c.l.b16 %v361
      %v824 = vunpack.c.h.b16 %v361
      %v825 = vunpack.c.l.b16 %v362
      %v826 = vunpack.c.h.b16 %v362
      %v827 = vunpack.c.l.b16 %v363
      %v828 = vunpack.c.h.b16 %v363
      %v829 = vunpack.c.l.b16 %v364
      %v830 = vunpack.c.h.b16 %v364
      %v831 = vunpack.c.l.b16 %v365
      %v832 = vunpack.c.h.b16 %v365
      %v833 = vunpack.c.l.b16 %v366
      %v834 = vunpack.c.h.b16 %v366
      %v835 = vunpack.c.l.b16 %v367
      %v836 = vunpack.c.h.b16 %v367
      %v837 = vunpack.c.l.b16 %v368
      %v838 = vunpack.c.h.b16 %v368
      %v839 = vunpack.c.l.b16 %v369
      %v840 = vunpack.c.h.b16 %v369
      %v841 = vunpack.c.l.b16 %v370
      %v842 = vunpack.c.h.b16 %v370
      %v843 = vunpack.c.l.b16 %v371
      %v844 = vunpack.c.h.b16 %v371
      %v845 = vunpack.c.l.b16 %v372
      %v846 = vunpack.c.h.b16 %v372
      %v847 = vunpack.c.l.b16 %v373
      %v848 = vunpack.c.h.b16 %v373
      %v849 = vunpack.c.l.b16 %v374
      %v850 = vunpack.c.h.b16 %v374
      %v851 = vpack.c.b16 %v597, %v595
      %v852 = vpack.c.b16 %v598, %v596
      %v853 = vpack.c.b16 %v601, %v599
      %v854 = vpack.c.b16 %v602, %v600
      %v855 = vpack.c.b16 %v605, %v603
      %v856 = vpack.c.b16 %v606, %v604
      %v857 = vpack.c.b16 %v609, %v607
      %v858 = vpack.c.b16 %v610, %v608
      %v859 = vpack.c.b16 %v613, %v611
      %v860 = vpack.c.b16 %v614, %v612
      %v861 = vpack.c.b16 %v617, %v615
      %v862 = vpack.c.b16 %v618, %v616
      %v863 = vpack.c.b16 %v621, %v619
      %v864 = vpack.c.b16 %v622, %v620
      %v865 = vpack.c.b16 %v625, %v623
      %v866 = vpack.c.b16 %v626, %v624
      %v867 = vpack.c.b16 %v629, %v627
      %v868 = vpack.c.b16 %v630, %v628
      %v869 = vpack.c.b16 %v633, %v631
      %v870 = vpack.c.b16 %v634, %v632
      %v871 = vpack.c.b16 %v637, %v635
      %v872 = vpack.c.b16 %v638, %v636
      %v873 = vpack.c.b16 %v641, %v639
      %v874 = vpack.c.b16 %v642, %v640
      %v875 = vpack.c.b16 %v645, %v643
      %v876 = vpack.c.b16 %v646, %v644
      %v877 = vpack.c.b16 %v649, %v647
      %v878 = vpack.c.b16 %v650, %v648
      %v879 = vpack.c.b16 %v653, %v651
      %v880 = vpack.c.b16 %v654, %v652
      %v881 = vpack.c.b16 %v657, %v655
      %v882 = vpack.c.b16 %v658, %v656
      %v883 = vpack.c.b16 %v661, %v659
      %v884 = vpack.c.b16 %v662, %v660
      %v885 = vpack.c.b16 %v665, %v663
      %v886 = vpack.c.b16 %v666, %v664
      %v887 = vpack.c.b16 %v669, %v667
      %v888 = vpack.c.b16 %v670, %v668
      %v889 = vpack.c.b16 %v673, %v671
      %v890 = vpack.c.b16 %v674, %v672
      %v891 = vpack.c.b16 %v677, %v675
      %v892 = vpack.c.b16 %v678, %v676
      %v893 = vpack.c.b16 %v681, %v679
      %v894 = vpack.c.b16 %v682, %v680
      %v895 = vpack.c.b16 %v685, %v683
      %v896 = vpack.c.b16 %v686, %v684
      %v897 = vpack.c.b16 %v689, %v687
      %v898 = vpack.c.b16 %v690, %v688
      %v899 = vpack.c.b16 %v693, %v691
      %v900 = vpack.c.b16 %v694, %v692
      %v901 = vpack.c.b16 %v697, %v695
      %v902 = vpack.c.b16 %v698, %v696
      %v903 = vpack.c.b16 %v701, %v699
      %v904 = vpack.c.b16 %v702, %v700
      %v905 = vpack.c.b16 %v705, %v703
      %v906 = vpack.c.b16 %v706, %v704
      %v907 = vpack.c.b16 %v709, %v707
      %v908 = vpack.c.b16 %v710, %v708
      %v909 = vpack.c.b16 %v713, %v711
      %v910 = vpack.c.b16 %v714, %v712
      %v911 = vpack.c.b16 %v717, %v715
      %v912 = vpack.c.b16 %v718, %v716
      %v913 = vpack.c.b16 %v721, %v719
      %v914 = vpack.c.b16 %v722, %v720
      %v915 = vpack.c.b16 %v725, %v723
      %v916 = vpack.c.b16 %v726, %v724
      %v917 = vpack.c.b16 %v729, %v727
      %v918 = vpack.c.b16 %v730, %v728
      %v919 = vpack.c.b16 %v733, %v731
      %v920 = vpack.c.b16 %v734, %v732
      %v921 = vpack.c.b16 %v737, %v735
      %v922 = vpack.c.b16 %v738, %v736
      %v923 = vpack.c.b16 %v741, %v739
      %v924 = vpack.c.b16 %v742, %v740
      %v925 = vpack.c.b16 %v745, %v743
      %v926 = vpack.c.b16 %v746, %v744
      %v927 = vpack.c.b16 %v749, %v747
      %v928 = vpack.c.b16 %v750, %v748
      %v929 = vpack.c.b16 %v753, %v751
      %v930 = vpack.c.b16 %v754, %v752
      %v931 = vpack.c.b16 %v757, %v755
      %v932 = vpack.c.b16 %v758, %v756
      %v933 = vpack.c.b16 %v761, %v759
      %v934 = vpack.c.b16 %v762, %v760
      %v935 = vpack.c.b16 %v765, %v763
      %v936 = vpack.c.b16 %v766, %v764
      %v937 = vpack.c.b16 %v769, %v767
      %v938 = vpack.c.b16 %v770, %v768
      %v939 = vpack.c.b16 %v773, %v771
      %v940 = vpack.c.b16 %v774, %v772
      %v941 = vpack.c.b16 %v777, %v775
      %v942 = vpack.c.b16 %v778, %v776
      %v943 = vpack.c.b16 %v781, %v779
      %v944 = vpack.c.b16 %v782, %v780
      %v945 = vpack.c.b16 %v785, %v783
      %v946 = vpack.c.b16 %v786, %v784
      %v947 = vpack.c.b16 %v789, %v787
      %v948 = vpack.c.b16 %v790, %v788
      %v949 = vpack.c.b16 %v793, %v791
      %v950 = vpack.c.b16 %v794, %v792
      %v951 = vpack.c.b16 %v797, %v795
      %v952 = vpack.c.b16 %v798, %v796
      %v953 = vpack.c.b16 %v801, %v799
      %v954 = vpack.c.b16 %v802, %v800
      %v955 = vpack.c.b16 %v805, %v803
      %v956 = vpack.c.b16 %v806, %v804
      %v957 = vpack.c.b16 %v809, %v807
      %v958 = vpack.c.b16 %v810, %v808
      %v959 = vpack.c.b16 %v813, %v811
      %v960 = vpack.c.b16 %v814, %v812
      %v961 = vpack.c.b16 %v817, %v815
      %v962 = vpack.c.b16 %v818, %v816
      %v963 = vpack.c.b16 %v821, %v819
      %v964 = vpack.c.b16 %v822, %v820
      %v965 = vpack.c.b16 %v825, %v823
      %v966 = vpack.c.b16 %v826, %v824
      %v967 = vpack.c.b16 %v829, %v827
      %v968 = vpack.c.b16 %v830, %v828
      %v969 = vpack.c.b16 %v833, %v831
      %v970 = vpack.c.b16 %v834, %v832
      %v971 = vpack.c.b16 %v837, %v835
      %v972 = vpack.c.b16 %v838, %v836
      %v973 = vpack.c.b16 %v841, %v839
      %v974 = vpack.c.b16 %v842, %v840
      %v975 = vpack.c.b16 %v845, %v843
      %v976 = vpack.c.b16 %v846, %v844
      %v977 = vpack.c.b16 %v849, %v847
      %v978 = vpack.c.b16 %v850, %v848
      %1107 = vmatprep.subr.bf16.mxu0 %v852
      %1108 = vmatpush1.bf16.msra.mxu0 %v851
      %1109 = vmatprep.subr.bf16.mxu0 %v854
      %1110 = vmatpush1.bf16.msra.mxu0 %v853
      %1111 = vmatprep.subr.bf16.mxu0 %v856
      %1112 = vmatpush1.bf16.msra.mxu0 %v855
      %1113 = vmatprep.subr.bf16.mxu0 %v858
      %1114 = vmatpush1.bf16.msra.mxu0 %v857
      %1115 = vmatprep.subr.bf16.mxu0 %v860
      %1116 = vmatpush1.bf16.msra.mxu0 %v859
      %1117 = vmatprep.subr.bf16.mxu0 %v862
      %1118 = vmatpush1.bf16.msra.mxu0 %v861
      %1119 = vmatprep.subr.bf16.mxu0 %v864
      %1120 = vmatpush1.bf16.msra.mxu0 %v863
      %1121 = vmatprep.subr.bf16.mxu0 %v866
      %1122 = vmatpush1.bf16.msra.mxu0 %v865
      %1123 = vmatprep.subr.bf16.mxu0 %v868
      %1124 = vmatpush1.bf16.msra.mxu0 %v867
      %1125 = vmatprep.subr.bf16.mxu0 %v870
      %1126 = vmatpush1.bf16.msra.mxu0 %v869
      %1127 = vmatprep.subr.bf16.mxu0 %v872
      %1128 = vmatpush1.bf16.msra.mxu0 %v871
      %1129 = vmatprep.subr.bf16.mxu0 %v874
      %1130 = vmatpush1.bf16.msra.mxu0 %v873
      %1131 = vmatprep.subr.bf16.mxu0 %v876
      %1132 = vmatpush1.bf16.msra.mxu0 %v875
      %1133 = vmatprep.subr.bf16.mxu0 %v878
      %1134 = vmatpush1.bf16.msra.mxu0 %v877
      %1135 = vmatprep.subr.bf16.mxu0 %v880
      %1136 = vmatpush1.bf16.msra.mxu0 %v879
      %1137 = vmatprep.subr.bf16.mxu0 %v882
      %1138 = vmatpush1.bf16.msra.mxu0 %v881
      %1139 = vmatprep.mubr.bf16.mxu0 %v436
      %1140 = vmatmul.mubr.bf16.gmra.mrb[0].mxu0 %v435
      %v1141 = vpop.f32.mrb[0].mxu0
      %v1142 = vadd.f32 %v380, %v1141
      %v1143 = vpop.f32.mrb[0].mxu0
      %v1144 = vadd.f32 %v384, %v1143
      %v1145 = vpop.f32.mrb[0].mxu0
      %v1146 = vadd.f32 %v380, %v1145
      %v1147 = vpop.f32.mrb[0].mxu0
      %v1148 = vadd.f32 %v384, %v1147
      %1149 = vmatprep.mubr.bf16.mxu0 %v444
      %1150 = vmatmul.mubr.bf16.gmra.mrb[0].mxu0 %v443
      %v1151 = vpop.f32.mrb[0].mxu0
      %v1152 = vadd.f32 %v380, %v1151
      %v1153 = vpop.f32.mrb[0].mxu0
      %v1154 = vadd.f32 %v384, %v1153
      %v1155 = vpop.f32.mrb[0].mxu0
      %v1156 = vadd.f32 %v380, %v1155
      %v1157 = vpop.f32.mrb[0].mxu0
      %v1158 = vadd.f32 %v384, %v1157
      %1159 = vdwg.mxu0
      %1160 = vmatprep.subr.bf16.mxu0 %v884
      %1161 = vmatpush1.bf16.msra.mxu0 %v883
      %1162 = vmatprep.subr.bf16.mxu0 %v886
      %1163 = vmatpush1.bf16.msra.mxu0 %v885
      %1164 = vmatprep.subr.bf16.mxu0 %v888
      %1165 = vmatpush1.bf16.msra.mxu0 %v887
      %1166 = vmatprep.subr.bf16.mxu0 %v890
      %1167 = vmatpush1.bf16.msra.mxu0 %v889
      %1168 = vmatprep.subr.bf16.mxu0 %v892
      %1169 = vmatpush1.bf16.msra.mxu0 %v891
      %1170 = vmatprep.subr.bf16.mxu0 %v894
      %1171 = vmatpush1.bf16.msra.mxu0 %v893
      %1172 = vmatprep.subr.bf16.mxu0 %v896
      %1173 = vmatpush1.bf16.msra.mxu0 %v895
      %1174 = vmatprep.subr.bf16.mxu0 %v898
      %1175 = vmatpush1.bf16.msra.mxu0 %v897
      %1176 = vmatprep.subr.bf16.mxu0 %v900
      %1177 = vmatpush1.bf16.msra.mxu0 %v899
      %1178 = vmatprep.subr.bf16.mxu0 %v902
      %1179 = vmatpush1.bf16.msra.mxu0 %v901
      %1180 = vmatprep.subr.bf16.mxu0 %v904
      %1181 = vmatpush1.bf16.msra.mxu0 %v903
      %1182 = vmatprep.subr.bf16.mxu0 %v906
      %1183 = vmatpush1.bf16.msra.mxu0 %v905
      %1184 = vmatprep.subr.bf16.mxu0 %v908
      %1185 = vmatpush1.bf16.msra.mxu0 %v907
      %1186 = vmatprep.subr.bf16.mxu0 %v910
      %1187 = vmatpush1.bf16.msra.mxu0 %v909
      %1188 = vmatprep.subr.bf16.mxu0 %v912
      %1189 = vmatpush1.bf16.msra.mxu0 %v911
      %1190 = vmatprep.subr.bf16.mxu0 %v914
      %1191 = vmatpush1.bf16.msra.mxu0 %v913
      %1192 = vmatprep.mubr.bf16.mxu0 %v438
      %1193 = vmatmul.mubr.bf16.gmra.mrb[0].mxu0 %v437
      %v1194 = vpop.f32.mrb[0].mxu0
      %v1195 = vadd.f32 %v1142, %v1194
      %v1196 = vpop.f32.mrb[0].mxu0
      %v1197 = vadd.f32 %v1144, %v1196
      %v1198 = vpop.f32.mrb[0].mxu0
      %v1199 = vadd.f32 %v1146, %v1198
      %v1200 = vpop.f32.mrb[0].mxu0
      %v1201 = vadd.f32 %v1148, %v1200
      %1202 = vmatprep.mubr.bf16.mxu0 %v446
      %1203 = vmatmul.mubr.bf16.gmra.mrb[0].mxu0 %v445
      %v1204 = vpop.f32.mrb[0].mxu0
      %v1205 = vadd.f32 %v1152, %v1204
      %v1206 = vpop.f32.mrb[0].mxu0
      %v1207 = vadd.f32 %v1154, %v1206
      %v1208 = vpop.f32.mrb[0].mxu0
      %v1209 = vadd.f32 %v1156, %v1208
      %v1210 = vpop.f32.mrb[0].mxu0
      %v1211 = vadd.f32 %v1158, %v1210
      %1212 = vdwg.mxu0
      %1213 = vmatprep.subr.bf16.mxu0 %v916
      %1214 = vmatpush1.bf16.msra.mxu0 %v915
      %1215 = vmatprep.subr.bf16.mxu0 %v918
      %1216 = vmatpush1.bf16.msra.mxu0 %v917
      %1217 = vmatprep.subr.bf16.mxu0 %v920
      %1218 = vmatpush1.bf16.msra.mxu0 %v919
      %1219 = vmatprep.subr.bf16.mxu0 %v922
      %1220 = vmatpush1.bf16.msra.mxu0 %v921
      %1221 = vmatprep.subr.bf16.mxu0 %v924
      %1222 = vmatpush1.bf16.msra.mxu0 %v923
      %1223 = vmatprep.subr.bf16.mxu0 %v926
      %1224 = vmatpush1.bf16.msra.mxu0 %v925
      %1225 = vmatprep.subr.bf16.mxu0 %v928
      %1226 = vmatpush1.bf16.msra.mxu0 %v927
      %1227 = vmatprep.subr.bf16.mxu0 %v930
      %1228 = vmatpush1.bf16.msra.mxu0 %v929
      %1229 = vmatprep.subr.bf16.mxu0 %v932
      %1230 = vmatpush1.bf16.msra.mxu0 %v931
      %1231 = vmatprep.subr.bf16.mxu0 %v934
      %1232 = vmatpush1.bf16.msra.mxu0 %v933
      %1233 = vmatprep.subr.bf16.mxu0 %v936
      %1234 = vmatpush1.bf16.msra.mxu0 %v935
      %1235 = vmatprep.subr.bf16.mxu0 %v938
      %1236 = vmatpush1.bf16.msra.mxu0 %v937
      %1237 = vmatprep.subr.bf16.mxu0 %v940
      %1238 = vmatpush1.bf16.msra.mxu0 %v939
      %1239 = vmatprep.subr.bf16.mxu0 %v942
      %1240 = vmatpush1.bf16.msra.mxu0 %v941
      %1241 = vmatprep.subr.bf16.mxu0 %v944
      %1242 = vmatpush1.bf16.msra.mxu0 %v943
      %1243 = vmatprep.subr.bf16.mxu0 %v946
      %1244 = vmatpush1.bf16.msra.mxu0 %v945
      %1245 = vmatprep.mubr.bf16.mxu0 %v440
      %1246 = vmatmul.mubr.bf16.gmra.mrb[0].mxu0 %v439
      %v1247 = vpop.f32.mrb[0].mxu0
      %v1248 = vadd.f32 %v1195, %v1247
      %v1249 = vpop.f32.mrb[0].mxu0
      %v1250 = vadd.f32 %v1197, %v1249
      %v1251 = vpop.f32.mrb[0].mxu0
      %v1252 = vadd.f32 %v1199, %v1251
      %v1253 = vpop.f32.mrb[0].mxu0
      %v1254 = vadd.f32 %v1201, %v1253
      %1255 = vmatprep.mubr.bf16.mxu0 %v448
      %1256 = vmatmul.mubr.bf16.gmra.mrb[0].mxu0 %v447
      %v1257 = vpop.f32.mrb[0].mxu0
      %v1258 = vadd.f32 %v1205, %v1257
      %v1259 = vpop.f32.mrb[0].mxu0
      %v1260 = vadd.f32 %v1207, %v1259
      %v1261 = vpop.f32.mrb[0].mxu0
      %v1262 = vadd.f32 %v1209, %v1261
      %v1263 = vpop.f32.mrb[0].mxu0
      %v1264 = vadd.f32 %v1211, %v1263
      %1265 = vdwg.mxu0
      %1266 = vmatprep.subr.bf16.mxu0 %v948
      %1267 = vmatpush1.bf16.msra.mxu0 %v947
      %1268 = vmatprep.subr.bf16.mxu0 %v950
      %1269 = vmatpush1.bf16.msra.mxu0 %v949
      %1270 = vmatprep.subr.bf16.mxu0 %v952
      %1271 = vmatpush1.bf16.msra.mxu0 %v951
      %1272 = vmatprep.subr.bf16.mxu0 %v954
      %1273 = vmatpush1.bf16.msra.mxu0 %v953
      %1274 = vmatprep.subr.bf16.mxu0 %v956
      %1275 = vmatpush1.bf16.msra.mxu0 %v955
      %1276 = vmatprep.subr.bf16.mxu0 %v958
      %1277 = vmatpush1.bf16.msra.mxu0 %v957
      %1278 = vmatprep.subr.bf16.mxu0 %v960
      %1279 = vmatpush1.bf16.msra.mxu0 %v959
      %1280 = vmatprep.subr.bf16.mxu0 %v962
      %1281 = vmatpush1.bf16.msra.mxu0 %v961
      %1282 = vmatprep.subr.bf16.mxu0 %v964
      %1283 = vmatpush1.bf16.msra.mxu0 %v963
      %1284 = vmatprep.subr.bf16.mxu0 %v966
      %1285 = vmatpush1.bf16.msra.mxu0 %v965
      %1286 = vmatprep.subr.bf16.mxu0 %v968
      %1287 = vmatpush1.bf16.msra.mxu0 %v967
      %1288 = vmatprep.subr.bf16.mxu0 %v970
      %1289 = vmatpush1.bf16.msra.mxu0 %v969
      %1290 = vmatprep.subr.bf16.mxu0 %v972
      %1291 = vmatpush1.bf16.msra.mxu0 %v971
      %1292 = vmatprep.subr.bf16.mxu0 %v974
      %1293 = vmatpush1.bf16.msra.mxu0 %v973
      %1294 = vmatprep.subr.bf16.mxu0 %v976
      %1295 = vmatpush1.bf16.msra.mxu0 %v975
      %1296 = vmatprep.subr.bf16.mxu0 %v978
      %1297 = vmatpush1.bf16.msra.mxu0 %v977
      %1298 = vmatprep.mubr.bf16.mxu0 %v442
      %1299 = vmatmul.mubr.bf16.gmra.mrb[0].mxu0 %v441
      %v1300 = vpop.f32.mrb[0].mxu0
      %v1301 = vadd.f32 %v1248, %v1300
      %v1302 = vpop.f32.mrb[0].mxu0
      %v1303 = vadd.f32 %v1250, %v1302
      %v1304 = vpop.f32.mrb[0].mxu0
      %v1305 = vadd.f32 %v1252, %v1304
      %v1306 = vpop.f32.mrb[0].mxu0
      %v1307 = vadd.f32 %v1254, %v1306
      %1308 = vmatprep.mubr.bf16.mxu0 %v450
      %1309 = vmatmul.mubr.bf16.gmra.mrb[0].mxu0 %v449
      %v1310 = vpop.f32.mrb[0].mxu0
      %v1311 = vadd.f32 %v1258, %v1310
      %v1312 = vpop.f32.mrb[0].mxu0
      %v1313 = vadd.f32 %v1260, %v1312
      %v1314 = vpop.f32.mrb[0].mxu0
      %v1315 = vadd.f32 %v1262, %v1314
      %v1316 = vpop.f32.mrb[0].mxu0
      %v1317 = vadd.f32 %v1264, %v1316
      %1318 = vdwg.mxu0
      %v1319 = vld [vmem:[%s222] sm:$0xff]
      %v1320 = vld [vmem:[%s222 + $0x8] sm:$0xff]
      %v1321 = vld [vmem:[%s222 + $0x10] sm:$0xff]
      %v1322 = vld [vmem:[%s222 + $0x18] sm:$0xff]
      %v1323 = vld [vmem:[%s222 + $0x20] sm:$0xff]
      %v1324 = vld [vmem:[%s222 + $0x28] sm:$0xff]
      %v1325 = vld [vmem:[%s222 + $0x30] sm:$0xff]
      %v1326 = vld [vmem:[%s222 + $0x38] sm:$0xff]
      %v1327 = vadd.f32 %v1301, %v1319
      %v1328 = vadd.f32 %v1303, %v1320
      %v1329 = vadd.f32 %v1305, %v1321
      %v1330 = vadd.f32 %v1307, %v1322
      %v1331 = vadd.f32 %v1311, %v1323
      %v1332 = vadd.f32 %v1313, %v1324
      %v1333 = vadd.f32 %v1315, %v1325
      %v1334 = vadd.f32 %v1317, %v1326
      %1335 = vst [vmem:[%s229] sm:$0xff] %v1327
      %1336 = vst [vmem:[%s229 + $0x8] sm:$0xff] %v1328
      %1337 = vst [vmem:[%s229 + $0x10] sm:$0xff] %v1329
      %1338 = vst [vmem:[%s229 + $0x18] sm:$0xff] %v1330
      %1339 = vst [vmem:[%s229 + $0x20] sm:$0xff] %v1331
      %1340 = vst [vmem:[%s229 + $0x28] sm:$0xff] %v1332
      %1341 = vst [vmem:[%s229 + $0x30] sm:$0xff] %v1333
      %1342 = vst [vmem:[%s229 + $0x38] sm:$0xff] %v1334
      %s1343 = smul.u32 4, %s15
      %p1344 = scmp.lt.s32.totalorder %s1343, 7
      %s1345 = scalar_select %p1344, %s1343, 7
      %s1346 = smul.addr %s1345, 2
      %s1347 = smul.addr %s1346, 8
      %s1348 = scalar_lea.vmem %s4, %s1347
      // Predicated region
      $region37: #{gpt_forward.12} parent=35 // pred_check
        %p1349 = pneg %p127
      $region38: #{gpt_forward.12} parent=35 // pred_check_branch
        %1351 = sbr.rel (%p1349) target = $region40
      $region39: #{gpt_forward.12} parent=35 // pred_region
        %s1352 = smul.u32 4, %s15
      $region40: #{gpt_forward.12} parent=35 // pred_fallthru
        _
    $region36: #{gpt_forward.12} parent=5 // pred_fallthru
      _
    %p1353 = scmp.le.s32.totalorder 2, %s10
    // Predicated region
    $region41: #{gpt_forward.12} parent=5 // pred_check
      %p1354 = pneg %p1353
    $region42: #{gpt_forward.12} parent=5 // pred_check_branch
      %1356 = sbr.rel (%p1354) target = $region44
    $region43: #{gpt_forward.12} parent=5 // pred_region
      %s1357 = ssub.s32 %s10, 2
      // Predicated region
      $region45: #{gpt_forward.12} parent=43 // pred_check
        %p1358 = pneg %p133
      $region46: #{gpt_forward.12} parent=43 // pred_check_branch
        %1360 = sbr.rel (%p1358) target = $region48
      $region47: #{gpt_forward.12} parent=43 // pred_region
        %s1361 = smul.u32 4, %s16
        %p1362 = scmp.lt.s32.totalorder %s1361, 7
        %s1363 = scalar_select %p1362, %s1361, 7
        %s1364 = smul.addr %s1363, 2
        %s1365 = smul.addr %s1364, 8
        %s1366 = scalar_lea.vmem %s4, %s1365
      $region48: #{gpt_forward.12} parent=43 // pred_fallthru
        _
    $region44: #{gpt_forward.12} parent=5 // pred_fallthru
      _
  $region6: #{gpt_forward.12} parent=0 // loop_footer
    %s14 = sadd.s32 1, %s10
  $region7: #{gpt_forward.12} parent=0 // loop_footer_branch
    %9 = sbr.rel target = $region3
  $region8: #{gpt_forward.12} parent=0 // loop_exit
    _

// kernel: gpt_forward.17
$region0: #{gpt_forward.17}
  #allocation0 [shape = 'u32[]', space=smem, size = 0x4, offset = 0x4, fixed_abs, tag = 'smem constant byte address 0x4 - core index']
  #allocation1 [shape = 'u32[144,128]{1,0:T(1,128)}', space=vmem, size = 0x12000, scoped, tag = 'internal scratch']
  %s0 = inlined_call_operand.vmem [shape: f32[64,256], index: 0, kind: input, shape index: {}]
  %s1 = inlined_call_operand.vmem [shape: f32[1,256], index: 1, kind: input, shape index: {}]
  %s2 = inlined_call_operand.vmem [shape: f32[1,256], index: 2, kind: input, shape index: {}]
  %s3 = inlined_call_operand.vmem [shape: bf16[256,512], index: 3, kind: input, shape index: {}]
  %s4 = inlined_call_operand.hbm [shape: f32[64,512], index: 4, kind: output, shape index: {}]
  %s5 = sld [smem:[#allocation0]]
  $region87: #{gpt_forward.17} parent=0
    _
  %s7 = ssub.s32 1, %s5
  %s8 = scalar_select 0, %s7, %s5
  $region1: #{gpt_forward.17} parent=0
    #allocation2 [shape = 'u8[262144]{0}', space=vmem, size = 0x40000, scoped, tag = 'input window, operand 3']
    #allocation3 [shape = 'u8[65536]{0}', space=vmem, size = 0x10000, scoped, tag = 'output window, operand 0']
    #allocation4 [shape = 's32[2]{0}', space=sflag, size = 0x8, scoped, tag = 'scoped memory for gpt_forward.17']
    %9 = vsyncpa [#allocation4], 0
    %s10 = scalar_lea.sflag [#allocation4], 1
    %11 = vsyncpa %s10, 0
    loop: start=0, step=1, limit=6
    $region2: #{gpt_forward.17} parent=1 // loop_pre_header
      _
    $region3: #{gpt_forward.17} parent=1 // loop_header
      %s13 = sphi 0, %s17
      %p14 = scmp.ge.s32.totalorder %s13, 6
      %s20 = sphi 0, %s32
      %s21 = sphi 0, %s28
      %s22 = sphi 0, %s20
      %s23 = sphi 0, %s21
      %s24 = sphi 0, %s22
      %s25 = sphi 0, %s23
      %s35 = sphi 0, %s37
      %s38 = sphi 0, %s35
      %s39 = sphi 0, %s38
      %s55 = sphi 0, %s39
      %s59 = sphi 0, %s59
      %s61 = sphi 0, %s59
      %s62 = sphi 0, %s61
      %s76 = sphi 0, %s62
      %s80 = sphi 0, %s80
      %s82 = sphi 0, %s80
      %s83 = sphi 0, %s82
      %s97 = sphi 0, %s83
      %s103 = sphi 0, %s105
      %s106 = sphi 0, %s103
      %s107 = sphi 0, %s106
      %s123 = sphi 0, %s107
      %s131 = sphi 0, %s133
      %s134 = sphi 0, %s131
      %s135 = sphi 0, %s134
      %s151 = sphi 0, %s135
    $region4: #{gpt_forward.17} parent=1 // loop_header_branch
      %16 = sbr.rel (%p14) target = $region8
    $region5: #{gpt_forward.17} parent=1 // loop_body
      %s18 = ssub.s32 %s13, 1
      %s19 = ssub.s32 %s13, 2
      %s26 = sadd.s32 1, %s21
      %p27 = scmp.ge.s32.totalorder %s26, 2
      %s28 = scalar_select %p27, 0, %s26
      %s29 = sadd.s32 1, %s20
      %s30 = scalar_select %p27, %s29, %s20
      %p31 = scmp.ge.s32.totalorder %s30, 2
      %s32 = scalar_select %p31, 0, %s30
      %s33 = ssub.s32 %s20, %s32
      %p34 = scmp.eq.s32.totalorder %s33, 0
      %s36 = sadd.s32 %s35, 1
      %s37 = scalar_select %p34, %s35, %s36
      %p40 = pneg %p34
      %p41 = scmp.eq.s32.totalorder %s13, 3
      %p42 = por %p40, %p41
      %p43 = scmp.ne.s32.totalorder %s35, %s38
      %p44 = scmp.eq.s32.totalorder %s13, 0
      %p45 = por %p43, %p44
      %p46 = scmp.ne.s32.totalorder %s35, %s38
      %p47 = scmp.eq.s32.totalorder %s18, 3
      %p48 = por %p46, %p47
      %p49 = scmp.ne.s32.totalorder %s38, %s39
      %p50 = scmp.eq.s32.totalorder %s18, 0
      %p51 = por %p49, %p50
      %p52 = scmp.ne.s32.totalorder %s38, %s39
      %p53 = scmp.eq.s32.totalorder %s19, 3
      %p54 = por %p52, %p53
      %p56 = scmp.ne.s32.totalorder %s39, %s55
      %p57 = scmp.eq.s32.totalorder %s19, 0
      %p58 = por %p56, %p57
      %s60 = sadd.s32 %s59, 1
      %p63 = scmp.eq.s32.totalorder %s13, 3
      %p64 = scmp.ne.s32.totalorder %s59, %s61
      %p65 = scmp.eq.s32.totalorder %s13, 0
      %p66 = por %p64, %p65
      %p67 = scmp.ne.s32.totalorder %s59, %s61
      %p68 = scmp.eq.s32.totalorder %s18, 3
      %p69 = por %p67, %p68
      %p70 = scmp.ne.s32.totalorder %s61, %s62
      %p71 = scmp.eq.s32.totalorder %s18, 0
      %p72 = por %p70, %p71
      %p73 = scmp.ne.s32.totalorder %s61, %s62
      %p74 = scmp.eq.s32.totalorder %s19, 3
      %p75 = por %p73, %p74
      %p77 = scmp.ne.s32.totalorder %s62, %s76
      %p78 = scmp.eq.s32.totalorder %s19, 0
      %p79 = por %p77, %p78
      %s81 = sadd.s32 %s80, 1
      %p84 = scmp.eq.s32.totalorder %s13, 3
      %p85 = scmp.ne.s32.totalorder %s80, %s82
      %p86 = scmp.eq.s32.totalorder %s13, 0
      %p87 = por %p85, %p86
      %p88 = scmp.ne.s32.totalorder %s80, %s82
      %p89 = scmp.eq.s32.totalorder %s18, 3
      %p90 = por %p88, %p89
      %p91 = scmp.ne.s32.totalorder %s82, %s83
      %p92 = scmp.eq.s32.totalorder %s18, 0
      %p93 = por %p91, %p92
      %p94 = scmp.ne.s32.totalorder %s82, %s83
      %p95 = scmp.eq.s32.totalorder %s19, 3
      %p96 = por %p94, %p95
      %p98 = scmp.ne.s32.totalorder %s83, %s97
      %p99 = scmp.eq.s32.totalorder %s19, 0
      %p100 = por %p98, %p99
      %s101 = ssub.s32 %s21, %s28
      %p102 = scmp.eq.s32.totalorder %s101, 0
      %s104 = sadd.s32 %s103, 1
      %s105 = scalar_select %p102, %s103, %s104
      %p108 = pneg %p102
      %p109 = scmp.eq.s32.totalorder %s13, 3
      %p110 = por %p108, %p109
      %p111 = scmp.ne.s32.totalorder %s103, %s106
      %p112 = scmp.eq.s32.totalorder %s13, 0
      %p113 = por %p111, %p112
      %p114 = scmp.ne.s32.totalorder %s103, %s106
      %p115 = scmp.eq.s32.totalorder %s18, 3
      %p116 = por %p114, %p115
      %p117 = scmp.ne.s32.totalorder %s106, %s107
      %p118 = scmp.eq.s32.totalorder %s18, 0
      %p119 = por %p117, %p118
      %p120 = scmp.ne.s32.totalorder %s106, %s107
      %p121 = scmp.eq.s32.totalorder %s19, 3
      %p122 = por %p120, %p121
      %p124 = scmp.ne.s32.totalorder %s107, %s123
      %p125 = scmp.eq.s32.totalorder %s19, 0
      %p126 = por %p124, %p125
      %s127 = ssub.s32 %s20, %s32
      %s128 = ssub.s32 %s21, %s28
      %s129 = sor.u32 %s127, %s128
      %p130 = scmp.eq.s32.totalorder %s129, 0
      %s132 = sadd.s32 %s131, 1
      %s133 = scalar_select %p130, %s131, %s132
      %p136 = pneg %p130
      %p137 = scmp.eq.s32.totalorder %s13, 3
      %p138 = por %p136, %p137
      %p139 = scmp.ne.s32.totalorder %s131, %s134
      %p140 = scmp.eq.s32.totalorder %s13, 0
      %p141 = por %p139, %p140
      %p142 = scmp.ne.s32.totalorder %s131, %s134
      %p143 = scmp.eq.s32.totalorder %s18, 3
      %p144 = por %p142, %p143
      %p145 = scmp.ne.s32.totalorder %s134, %s135
      %p146 = scmp.eq.s32.totalorder %s18, 0
      %p147 = por %p145, %p146
      %p148 = scmp.ne.s32.totalorder %s134, %s135
      %p149 = scmp.eq.s32.totalorder %s19, 3
      %p150 = por %p148, %p149
      %p152 = scmp.ne.s32.totalorder %s135, %s151
      %p153 = scmp.eq.s32.totalorder %s19, 0
      %p154 = por %p152, %p153
      %p155 = scmp.le.s32.totalorder 1, %s13
      %p156 = scmp.lt.s32.totalorder %s13, 5
      %p157 = pnand %p155, %p156
      %p158 = pneg %p157
      // Predicated region
      $region9: #{gpt_forward.17} parent=5 // pred_check
        _
      $region10: #{gpt_forward.17} parent=5 // pred_check_branch
        %160 = sbr.rel (%p157) target = $region12
      $region11: #{gpt_forward.17} parent=5 // pred_region
        %s161 = ssub.s32 %s13, 1
        // Predicated region
        $region13: #{gpt_forward.17} parent=11 // pred_check
          %p162 = pneg %p72
        $region14: #{gpt_forward.17} parent=11 // pred_check_branch
          %164 = sbr.rel (%p162) target = $region16
        $region15: #{gpt_forward.17} parent=11 // pred_region
          _
        $region16: #{gpt_forward.17} parent=11 // pred_fallthru
          _
        // Predicated region
        $region17: #{gpt_forward.17} parent=11 // pred_check
          %p165 = pneg %p93
        $region18: #{gpt_forward.17} parent=11 // pred_check_branch
          %167 = sbr.rel (%p165) target = $region20
        $region19: #{gpt_forward.17} parent=11 // pred_region
          _
        $region20: #{gpt_forward.17} parent=11 // pred_fallthru
          _
      $region12: #{gpt_forward.17} parent=5 // pred_fallthru
        _
      %p168 = scmp.lt.s32.totalorder %s13, 4
      // Predicated region
      $region21: #{gpt_forward.17} parent=5 // pred_check
        %p169 = pneg %p168
      $region22: #{gpt_forward.17} parent=5 // pred_check_branch
        %171 = sbr.rel (%p169) target = $region24
      $region23: #{gpt_forward.17} parent=5 // pred_region
        // Predicated region
        $region25: #{gpt_forward.17} parent=23 // pred_check
          %p172 = pneg %p45
        $region26: #{gpt_forward.17} parent=23 // pred_check_branch
          %174 = sbr.rel (%p172) target = $region28
        $region27: #{gpt_forward.17} parent=23 // pred_region
          %s175 = smul.u32 4, %s20
          %p176 = scmp.lt.s32.totalorder %s175, 7
          %s177 = scalar_select %p176, %s175, 7
          %s178 = smul.addr %s177, 2
          %s179 = smul.addr %s178, 8
          %s180 = scalar_lea.vmem %s0, %s179
          %s181 = smul.u32 4, %s20
        $region28: #{gpt_forward.17} parent=23 // pred_fallthru
          _
        // Predicated region
        $region29: #{gpt_forward.17} parent=23 // pred_check
          %p182 = pneg %p113
        $region30: #{gpt_forward.17} parent=23 // pred_check_branch
          %184 = sbr.rel (%p182) target = $region32
        $region31: #{gpt_forward.17} parent=23 // pred_region
          %s185 = sand.u32 %s103, 1
          %s186 = sand.u32 %s103, 1
          %s187 = smul.addr %s186, 256
          %s188 = scalar_lea.vmem [#allocation2], %s187
          %s189 = smul.u32 2, %s21
          %s190 = smul.addr %s189, 4
          %s191 = scalar_lea.vmem %s3, %s190
          // Predicated region
          $region33: #{gpt_forward.17} parent=31 // pred_check
            _
          $region34: #{gpt_forward.17} parent=31 // pred_check_branch
            %193 = sbr.rel (0) target = $region36
          $region35: #{gpt_forward.17} parent=31 // pred_region
            // Predicated region
            $region37: #{gpt_forward.17} parent=35 // pred_check
              _
            $region38: #{gpt_forward.17} parent=35 // pred_check_branch
              %195 = sbr.rel (0) target = $region40
            $region39: #{gpt_forward.17} parent=35 // pred_region
              // Predicated region
              $region52: #{gpt_forward.17} parent=39 // pred_check
                _
              $region53: #{gpt_forward.17} parent=39 // pred_check_branch
                %272 = sbr.rel (0) target = $region55
              $region54: #{gpt_forward.17} parent=39 // pred_region
                loop: start=0, step=1, limit=1
                $region56: #{gpt_forward.17} parent=54 // loop_pre_header
                  _
                $region57: #{gpt_forward.17} parent=54 // loop_header
                  %s274 = sphi 0, %s278
                  %p275 = scmp.ge.s32.totalorder %s274, 1
                  %s279 = sphi %s191, %s191
                  %s280 = sphi %s188, %s188
                $region58: #{gpt_forward.17} parent=54 // loop_header_branch
                  %277 = sbr.rel (%p275) target = $region62
                $region59: #{gpt_forward.17} parent=54 // loop_body
                  %v281 = vld [vmem:[%s279] sm:$0xff]
                  %282 = vst [vmem:[%s280] sm:$0xff] %v281
                  %v283 = vld [vmem:[%s279 + $0x10] sm:$0xff]
                  %284 = vst [vmem:[%s280 + $0x8] sm:$0xff] %v283
                  %v285 = vld [vmem:[%s279 + $0x20] sm:$0xff]
                  %286 = vst [vmem:[%s280 + $0x10] sm:$0xff] %v285
                  %v287 = vld [vmem:[%s279 + $0x30] sm:$0xff]
                  %288 = vst [vmem:[%s280 + $0x18] sm:$0xff] %v287
                  %v289 = vld [vmem:[%s279 + $0x40] sm:$0xff]
                  %290 = vst [vmem:[%s280 + $0x20] sm:$0xff] %v289
                  %v291 = vld [vmem:[%s279 + $0x50] sm:$0xff]
                  %292 = vst [vmem:[%s280 + $0x28] sm:$0xff] %v291
                  %v293 = vld [vmem:[%s279 + $0x60] sm:$0xff]
                  %294 = vst [vmem:[%s280 + $0x30] sm:$0xff] %v293
                  %v295 = vld [vmem:[%s279 + $0x70] sm:$0xff]
                  %296 = vst [vmem:[%s280 + $0x38] sm:$0xff] %v295
                  %v297 = vld [vmem:[%s279 + $0x80] sm:$0xff]
                  %298 = vst [vmem:[%s280 + $0x40] sm:$0xff] %v297
                  %v299 = vld [vmem:[%s279 + $0x90] sm:$0xff]
                  %300 = vst [vmem:[%s280 + $0x48] sm:$0xff] %v299
                  %v301 = vld [vmem:[%s279 + $0xa0] sm:$0xff]
                  %302 = vst [vmem:[%s280 + $0x50] sm:$0xff] %v301
                  %v303 = vld [vmem:[%s279 + $0xb0] sm:$0xff]
                  %304 = vst [vmem:[%s280 + $0x58] sm:$0xff] %v303
                  %v305 = vld [vmem:[%s279 + $0xc0] sm:$0xff]
                  %306 = vst [vmem:[%s280 + $0x60] sm:$0xff] %v305
                  %v307 = vld [vmem:[%s279 + $0xd0] sm:$0xff]
                  %308 = vst [vmem:[%s280 + $0x68] sm:$0xff] %v307
                  %v309 = vld [vmem:[%s279 + $0xe0] sm:$0xff]
                  %310 = vst [vmem:[%s280 + $0x70] sm:$0xff] %v309
                  %v311 = vld [vmem:[%s279 + $0xf0] sm:$0xff]
                  %312 = vst [vmem:[%s280 + $0x78] sm:$0xff] %v311
                  %v313 = vld [vmem:[%s279 + $0x100] sm:$0xff]
                  %314 = vst [vmem:[%s280 + $0x80] sm:$0xff] %v313
                  %v315 = vld [vmem:[%s279 + $0x110] sm:$0xff]
                  %316 = vst [vmem:[%s280 + $0x88] sm:$0xff] %v315
                  %v317 = vld [vmem:[%s279 + $0x120] sm:$0xff]
                  %318 = vst [vmem:[%s280 + $0x90] sm:$0xff] %v317
                  %v319 = vld [vmem:[%s279 + $0x130] sm:$0xff]
                  %320 = vst [vmem:[%s280 + $0x98] sm:$0xff] %v319
                  %v321 = vld [vmem:[%s279 + $0x140] sm:$0xff]
                  %322 = vst [vmem:[%s280 + $0xa0] sm:$0xff] %v321
                  %v323 = vld [vmem:[%s279 + $0x150] sm:$0xff]
                  %324 = vst [vmem:[%s280 + $0xa8] sm:$0xff] %v323
                  %v325 = vld [vmem:[%s279 + $0x160] sm:$0xff]
                  %326 = vst [vmem:[%s280 + $0xb0] sm:$0xff] %v325
                  %v327 = vld [vmem:[%s279 + $0x170] sm:$0xff]
                  %328 = vst [vmem:[%s280 + $0xb8] sm:$0xff] %v327
                  %v329 = vld [vmem:[%s279 + $0x180] sm:$0xff]
                  %330 = vst [vmem:[%s280 + $0xc0] sm:$0xff] %v329
                  %v331 = vld [vmem:[%s279 + $0x190] sm:$0xff]
                  %332 = vst [vmem:[%s280 + $0xc8] sm:$0xff] %v331
                  %v333 = vld [vmem:[%s279 + $0x1a0] sm:$0xff]
                  %334 = vst [vmem:[%s280 + $0xd0] sm:$0xff] %v333
                  %v335 = vld [vmem:[%s279 + $0x1b0] sm:$0xff]
                  %336 = vst [vmem:[%s280 + $0xd8] sm:$0xff] %v335
                  %v337 = vld [vmem:[%s279 + $0x1c0] sm:$0xff]
                  %338 = vst [vmem:[%s280 + $0xe0] sm:$0xff] %v337
                  %v339 = vld [vmem:[%s279 + $0x1d0] sm:$0xff]
                  %340 = vst [vmem:[%s280 + $0xe8] sm:$0xff] %v339
                  %v341 = vld [vmem:[%s279 + $0x1e0] sm:$0xff]
                  %342 = vst [vmem:[%s280 + $0xf0] sm:$0xff] %v341
                  %v343 = vld [vmem:[%s279 + $0x1f0] sm:$0xff]
                  %344 = vst [vmem:[%s280 + $0xf8] sm:$0xff] %v343
                $region60: #{gpt_forward.17} parent=54 // loop_footer
                  %s278 = sadd.s32 1, %s274
                $region61: #{gpt_forward.17} parent=54 // loop_footer_branch
                  %273 = sbr.rel target = $region57
                $region62: #{gpt_forward.17} parent=54 // loop_exit
                  _
              $region55: #{gpt_forward.17} parent=39 // pred_fallthru
                _
              // Predicated region
              $region63: #{gpt_forward.17} parent=39 // pred_check
                _
              $region64: #{gpt_forward.17} parent=39 // pred_check_branch
                %346 = sbr.rel target = $region66
              $region65: #{gpt_forward.17} parent=39 // pred_region
                _
              $region66: #{gpt_forward.17} parent=39 // pred_fallthru
                _
            $region40: #{gpt_forward.17} parent=35 // pred_fallthru
              _
            // Predicated region
            $region41: #{gpt_forward.17} parent=35 // pred_check
              _
            $region42: #{gpt_forward.17} parent=35 // pred_check_branch
              %197 = sbr.rel target = $region44
            $region43: #{gpt_forward.17} parent=35 // pred_region
              loop: start=0, step=1, limit=1
              $region45: #{gpt_forward.17} parent=43 // loop_pre_header
                _
              $region46: #{gpt_forward.17} parent=43 // loop_header
                %s200 = sphi 0, %s204
                %p201 = scmp.ge.s32.totalorder %s200, 1
                %s205 = sphi %s191, %s191
                %s206 = sphi %s188, %s188
              $region47: #{gpt_forward.17} parent=43 // loop_header_branch
                %203 = sbr.rel (%p201) target = $region51
              $region48: #{gpt_forward.17} parent=43 // loop_body
                %v207 = vld [vmem:[%s205] sm:$0xff]
                %208 = vst [vmem:[%s206] sm:$0xff] %v207
                %v209 = vld [vmem:[%s205 + $0x10] sm:$0xff]
                %210 = vst [vmem:[%s206 + $0x8] sm:$0xff] %v209
                %v211 = vld [vmem:[%s205 + $0x20] sm:$0xff]
                %212 = vst [vmem:[%s206 + $0x10] sm:$0xff] %v211
                %v213 = vld [vmem:[%s205 + $0x30] sm:$0xff]
                %214 = vst [vmem:[%s206 + $0x18] sm:$0xff] %v213
                %v215 = vld [vmem:[%s205 + $0x40] sm:$0xff]
                %216 = vst [vmem:[%s206 + $0x20] sm:$0xff] %v215
                %v217 = vld [vmem:[%s205 + $0x50] sm:$0xff]
                %218 = vst [vmem:[%s206 + $0x28] sm:$0xff] %v217
                %v219 = vld [vmem:[%s205 + $0x60] sm:$0xff]
                %220 = vst [vmem:[%s206 + $0x30] sm:$0xff] %v219
                %v221 = vld [vmem:[%s205 + $0x70] sm:$0xff]
                %222 = vst [vmem:[%s206 + $0x38] sm:$0xff] %v221
                %v223 = vld [vmem:[%s205 + $0x80] sm:$0xff]
                %224 = vst [vmem:[%s206 + $0x40] sm:$0xff] %v223
                %v225 = vld [vmem:[%s205 + $0x90] sm:$0xff]
                %226 = vst [vmem:[%s206 + $0x48] sm:$0xff] %v225
                %v227 = vld [vmem:[%s205 + $0xa0] sm:$0xff]
                %228 = vst [vmem:[%s206 + $0x50] sm:$0xff] %v227
                %v229 = vld [vmem:[%s205 + $0xb0] sm:$0xff]
                %230 = vst [vmem:[%s206 + $0x58] sm:$0xff] %v229
                %v231 = vld [vmem:[%s205 + $0xc0] sm:$0xff]
                %232 = vst [vmem:[%s206 + $0x60] sm:$0xff] %v231
                %v233 = vld [vmem:[%s205 + $0xd0] sm:$0xff]
                %234 = vst [vmem:[%s206 + $0x68] sm:$0xff] %v233
                %v235 = vld [vmem:[%s205 + $0xe0] sm:$0xff]
                %236 = vst [vmem:[%s206 + $0x70] sm:$0xff] %v235
                %v237 = vld [vmem:[%s205 + $0xf0] sm:$0xff]
                %238 = vst [vmem:[%s206 + $0x78] sm:$0xff] %v237
                %v239 = vld [vmem:[%s205 + $0x100] sm:$0xff]
                %240 = vst [vmem:[%s206 + $0x80] sm:$0xff] %v239
                %v241 = vld [vmem:[%s205 + $0x110] sm:$0xff]
                %242 = vst [vmem:[%s206 + $0x88] sm:$0xff] %v241
                %v243 = vld [vmem:[%s205 + $0x120] sm:$0xff]
                %244 = vst [vmem:[%s206 + $0x90] sm:$0xff] %v243
                %v245 = vld [vmem:[%s205 + $0x130] sm:$0xff]
                %246 = vst [vmem:[%s206 + $0x98] sm:$0xff] %v245
                %v247 = vld [vmem:[%s205 + $0x140] sm:$0xff]
                %248 = vst [vmem:[%s206 + $0xa0] sm:$0xff] %v247
                %v249 = vld [vmem:[%s205 + $0x150] sm:$0xff]
                %250 = vst [vmem:[%s206 + $0xa8] sm:$0xff] %v249
                %v251 = vld [vmem:[%s205 + $0x160] sm:$0xff]
                %252 = vst [vmem:[%s206 + $0xb0] sm:$0xff] %v251
                %v253 = vld [vmem:[%s205 + $0x170] sm:$0xff]
                %254 = vst [vmem:[%s206 + $0xb8] sm:$0xff] %v253
                %v255 = vld [vmem:[%s205 + $0x180] sm:$0xff]
                %256 = vst [vmem:[%s206 + $0xc0] sm:$0xff] %v255
                %v257 = vld [vmem:[%s205 + $0x190] sm:$0xff]
                %258 = vst [vmem:[%s206 + $0xc8] sm:$0xff] %v257
                %v259 = vld [vmem:[%s205 + $0x1a0] sm:$0xff]
                %260 = vst [vmem:[%s206 + $0xd0] sm:$0xff] %v259
                %v261 = vld [vmem:[%s205 + $0x1b0] sm:$0xff]
                %262 = vst [vmem:[%s206 + $0xd8] sm:$0xff] %v261
                %v263 = vld [vmem:[%s205 + $0x1c0] sm:$0xff]
                %264 = vst [vmem:[%s206 + $0xe0] sm:$0xff] %v263
                %v265 = vld [vmem:[%s205 + $0x1d0] sm:$0xff]
                %266 = vst [vmem:[%s206 + $0xe8] sm:$0xff] %v265
                %v267 = vld [vmem:[%s205 + $0x1e0] sm:$0xff]
                %268 = vst [vmem:[%s206 + $0xf0] sm:$0xff] %v267
                %v269 = vld [vmem:[%s205 + $0x1f0] sm:$0xff]
                %270 = vst [vmem:[%s206 + $0xf8] sm:$0xff] %v269
              $region49: #{gpt_forward.17} parent=43 // loop_footer
                %s204 = sadd.s32 1, %s200
              $region50: #{gpt_forward.17} parent=43 // loop_footer_branch
                %199 = sbr.rel target = $region46
              $region51: #{gpt_forward.17} parent=43 // loop_exit
                _
            $region44: #{gpt_forward.17} parent=35 // pred_fallthru
              _
          $region36: #{gpt_forward.17} parent=31 // pred_fallthru
            _
          %347 = vnop
        $region32: #{gpt_forward.17} parent=23 // pred_fallthru
          _
      $region24: #{gpt_forward.17} parent=5 // pred_fallthru
        _
      %p348 = scmp.le.s32.totalorder 1, %s13
      %p349 = scmp.lt.s32.totalorder %s13, 5
      %p350 = pnand %p348, %p349
      %p351 = pneg %p350
      // Predicated region
      $region67: #{gpt_forward.17} parent=5 // pred_check
        _
      $region68: #{gpt_forward.17} parent=5 // pred_check_branch
        %353 = sbr.rel (%p350) target = $region70
      $region69: #{gpt_forward.17} parent=5 // pred_region
        %s354 = ssub.s32 %s13, 1
        %s355 = sand.u32 %s106, 1
        %s356 = sand.u32 %s106, 1
        %s357 = smul.addr %s356, 256
        %s358 = scalar_lea.vmem [#allocation2], %s357
        // Predicated region
        $region71: #{gpt_forward.17} parent=69 // pred_check
          %p359 = pneg %p119
        $region72: #{gpt_forward.17} parent=69 // pred_check_branch
          %361 = sbr.rel (%p359) target = $region74
        $region73: #{gpt_forward.17} parent=69 // pred_region
          _
        $region74: #{gpt_forward.17} parent=69 // pred_fallthru
          _
        %s362 = smul.u32 4, %s22
        %p363 = scmp.lt.s32.totalorder %s362, 7
        %s364 = scalar_select %p363, %s362, 7
        %s365 = smul.addr %s364, 2
        %s366 = smul.addr %s365, 8
        %s367 = scalar_lea.vmem %s0, %s366
        %p368 = pneg %p51
        %p369 = pneg %p48
        %p370 = pneg %p72
        %p371 = pneg %p69
        %p372 = pneg %p93
        %p373 = pneg %p90
        %s374 = sand.u32 %s106, 1
        %s375 = sand.u32 %s106, 1
        %s376 = smul.addr %s375, 256
        %s377 = scalar_lea.vmem [#allocation2], %s376
        %p378 = pneg %p119
        %p379 = pneg %p116
        %p380 = pneg %p147
        %p381 = pneg %p144
        %s382 = sand.u32 %s134, 1
        %s383 = scalar_lea.sflag [#allocation4], %s382
        %s384 = sand.u32 %s134, 1
        %s385 = smul.addr %s384, 64
        %s386 = scalar_lea.vmem [#allocation3], %s385
        %s387 = smul.u32 4, %s22
        %p388 = scmp.lt.s32.totalorder %s387, 7
        %s389 = scalar_select %p388, %s387, 7
        %s390 = smul.addr %s389, 2
        %s391 = smul.addr %s390, 8
        %s392 = scalar_lea.vmem %s0, %s391
        %s393 = smul.u32 4, %s22
        %s394 = smul.u32 2, %s23
        %s395 = smul.u32 4, %s22
        %s396 = smul.u32 2, %s23
        %v397 = vld [vmem:[%s392] sm:$0xff]
        %v398 = vld [vmem:[%s392 + $0x8] sm:$0xff]
        %v399 = vld [vmem:[%s392 + $0x10] sm:$0xff]
        %v400 = vld [vmem:[%s392 + $0x18] sm:$0xff]
        %v401 = vld [vmem:[%s392 + $0x20] sm:$0xff]
        %v402 = vld [vmem:[%s392 + $0x28] sm:$0xff]
        %v403 = vld [vmem:[%s392 + $0x30] sm:$0xff]
        %v404 = vld [vmem:[%s392 + $0x38] sm:$0xff]
        %v405 = vadd.f32 %v397, %v398
        %406 = vadd.xlane.f32.xlu0 %v405
        %v407 = vpop.xlane.xlu0 %406
        %v408 = vadd.f32 %v399, %v400
        %409 = vadd.xlane.f32.xlu0 %v408
        %v410 = vpop.xlane.xlu0 %409
        %v411 = vadd.f32 %v401, %v402
        %412 = vadd.xlane.f32.xlu0 %v411
        %v413 = vpop.xlane.xlu0 %412
        %v414 = vadd.f32 %v403, %v404
        %415 = vadd.xlane.f32.xlu0 %v414
        %v416 = vpop.xlane.xlu0 %415
        %v417 = vrcp.pop 256.0
        %v418 = vmul.f32 %v407, %v417
        %v419 = vmul.f32 %v410, %v417
        %v420 = vmul.f32 %v413, %v417
        %v421 = vmul.f32 %v416, %v417
        %v422 = vsub.f32 %v397, %v418
        %v423 = vsub.f32 %v398, %v418
        %v424 = vsub.f32 %v399, %v419
        %v425 = vsub.f32 %v400, %v419
        %v426 = vsub.f32 %v401, %v420
        %v427 = vsub.f32 %v402, %v420
        %v428 = vsub.f32 %v403, %v421
        %v429 = vsub.f32 %v404, %v421
        %v430 = vmul.f32 %v422, %v422
        %v431 = vmul.f32 %v423, %v423
        %v432 = vmul.f32 %v424, %v424
        %v433 = vmul.f32 %v425, %v425
        %v434 = vmul.f32 %v426, %v426
        %v435 = vmul.f32 %v427, %v427
        %v436 = vmul.f32 %v428, %v428
        %v437 = vmul.f32 %v429, %v429
        %v438 = vadd.f32 %v430, %v431
        %439 = vadd.xlane.f32.xlu0 %v438
        %v440 = vpop.xlane.xlu0 %439
        %v441 = vadd.f32 %v432, %v433
        %442 = vadd.xlane.f32.xlu0 %v441
        %v443 = vpop.xlane.xlu0 %442
        %v444 = vadd.f32 %v434, %v435
        %445 = vadd.xlane.f32.xlu0 %v444
        %v446 = vpop.xlane.xlu0 %445
        %v447 = vadd.f32 %v436, %v437
        %448 = vadd.xlane.f32.xlu0 %v447
        %v449 = vpop.xlane.xlu0 %448
        %v450 = vmul.f32 %v440, %v417
        %v451 = vmul.f32 %v443, %v417
        %v452 = vmul.f32 %v446, %v417
        %v453 = vmul.f32 %v449, %v417
        %v454 = vadd.f32 %v450, 1e-05
        %v455 = vadd.f32 %v451, 1e-05
        %v456 = vadd.f32 %v452, 1e-05
        %v457 = vadd.f32 %v453, 1e-05
        %v458 = vrsqrt.pop %v454
        %v459 = vrsqrt.pop %v455
        %v460 = vrsqrt.pop %v456
        %v461 = vrsqrt.pop %v457
        %v462 = vmul.f32 %v422, %v458
        %v463 = vmul.f32 %v423, %v458
        %v464 = vmul.f32 %v424, %v459
        %v465 = vmul.f32 %v425, %v459
        %v466 = vmul.f32 %v426, %v460
        %v467 = vmul.f32 %v427, %v460
        %v468 = vmul.f32 %v428, %v461
        %v469 = vmul.f32 %v429, %v461
        %v470 = vld [vmem:[%s1] sm:$0x3]
        %v472 = vlaneseq
        %v473 = vshrl.u32 %v472, 7
        %v474 = vsub.s32 0, %v473
        %v475 = vrot.slane %v470, %v474
        %v476 = vlaneseq
        %v477 = vshrl.u32 %v476, 7
        %v478 = vsub.s32 1, %v477
        %v479 = vrot.slane %v470, %v478
        %v482 = vmul.f32 %v462, %v475
        %v483 = vmul.f32 %v463, %v479
        %v484 = vmul.f32 %v464, %v475
        %v485 = vmul.f32 %v465, %v479
        %v486 = vmul.f32 %v466, %v475
        %v487 = vmul.f32 %v467, %v479
        %v488 = vmul.f32 %v468, %v475
        %v489 = vmul.f32 %v469, %v479
        %v490 = vld [vmem:[%s2] sm:$0x3]
        %v492 = vlaneseq
        %v493 = vshrl.u32 %v492, 7
        %v494 = vsub.s32 0, %v493
        %v495 = vrot.slane %v490, %v494
        %v496 = vlaneseq
        %v497 = vshrl.u32 %v496, 7
        %v498 = vsub.s32 1, %v497
        %v499 = vrot.slane %v490, %v498
        %v502 = vadd.f32 %v482, %v495
        %v503 = vadd.f32 %v483, %v499
        %v504 = vadd.f32 %v484, %v495
        %v505 = vadd.f32 %v485, %v499
        %v506 = vadd.f32 %v486, %v495
        %v507 = vadd.f32 %v487, %v499
        %v508 = vadd.f32 %v488, %v495
        %v509 = vadd.f32 %v489, %v499
        %v510 = vpack.c.bf16 %v504, %v502
        %v511 = vpack.c.bf16 %v505, %v503
        %v512 = vpack.c.bf16 %v508, %v506
        %v513 = vpack.c.bf16 %v509, %v507
        %v514 = vld [vmem:[%s358] sm:$0xff]
        %v515 = vld [vmem:[%s358 + $0x8] sm:$0xff]
        %v516 = vld [vmem:[%s358 + $0x10] sm:$0xff]
        %v517 = vld [vmem:[%s358 + $0x18] sm:$0xff]
        %v518 = vld [vmem:[%s358 + $0x20] sm:$0xff]
        %v519 = vld [vmem:[%s358 + $0x28] sm:$0xff]
        %v520 = vld [vmem:[%s358 + $0x30] sm:$0xff]
        %v521 = vld [vmem:[%s358 + $0x38] sm:$0xff]
        %v522 = vld [vmem:[%s358 + $0x40] sm:$0xff]
        %v523 = vld [vmem:[%s358 + $0x48] sm:$0xff]
        %v524 = vld [vmem:[%s358 + $0x50] sm:$0xff]
        %v525 = vld [vmem:[%s358 + $0x58] sm:$0xff]
        %v526 = vld [vmem:[%s358 + $0x60] sm:$0xff]
        %v527 = vld [vmem:[%s358 + $0x68] sm:$0xff]
        %v528 = vld [vmem:[%s358 + $0x70] sm:$0xff]
        %v529 = vld [vmem:[%s358 + $0x78] sm:$0xff]
        %v530 = vld [vmem:[%s358 + $0x80] sm:$0xff]
        %v531 = vld [vmem:[%s358 + $0x88] sm:$0xff]
        %v532 = vld [vmem:[%s358 + $0x90] sm:$0xff]
        %v533 = vld [vmem:[%s358 + $0x98] sm:$0xff]
        %v534 = vld [vmem:[%s358 + $0xa0] sm:$0xff]
        %v535 = vld [vmem:[%s358 + $0xa8] sm:$0xff]
        %v536 = vld [vmem:[%s358 + $0xb0] sm:$0xff]
        %v537 = vld [vmem:[%s358 + $0xb8] sm:$0xff]
        %v538 = vld [vmem:[%s358 + $0xc0] sm:$0xff]
        %v539 = vld [vmem:[%s358 + $0xc8] sm:$0xff]
        %v540 = vld [vmem:[%s358 + $0xd0] sm:$0xff]
        %v541 = vld [vmem:[%s358 + $0xd8] sm:$0xff]
        %v542 = vld [vmem:[%s358 + $0xe0] sm:$0xff]
        %v543 = vld [vmem:[%s358 + $0xe8] sm:$0xff]
        %v544 = vld [vmem:[%s358 + $0xf0] sm:$0xff]
        %v545 = vld [vmem:[%s358 + $0xf8] sm:$0xff]
        %v578 = vunpack.c.l.b16 %v514
        %v579 = vunpack.c.h.b16 %v514
        %v580 = vunpack.c.l.b16 %v515
        %v581 = vunpack.c.h.b16 %v515
        %v582 = vunpack.c.l.b16 %v516
        %v583 = vunpack.c.h.b16 %v516
        %v584 = vunpack.c.l.b16 %v517
        %v585 = vunpack.c.h.b16 %v517
        %v586 = vunpack.c.l.b16 %v518
        %v587 = vunpack.c.h.b16 %v518
        %v588 = vunpack.c.l.b16 %v519
        %v589 = vunpack.c.h.b16 %v519
        %v590 = vunpack.c.l.b16 %v520
        %v591 = vunpack.c.h.b16 %v520
        %v592 = vunpack.c.l.b16 %v521
        %v593 = vunpack.c.h.b16 %v521
        %v594 = vunpack.c.l.b16 %v522
        %v595 = vunpack.c.h.b16 %v522
        %v596 = vunpack.c.l.b16 %v523
        %v597 = vunpack.c.h.b16 %v523
        %v598 = vunpack.c.l.b16 %v524
        %v599 = vunpack.c.h.b16 %v524
        %v600 = vunpack.c.l.b16 %v525
        %v601 = vunpack.c.h.b16 %v525
        %v602 = vunpack.c.l.b16 %v526
        %v603 = vunpack.c.h.b16 %v526
        %v604 = vunpack.c.l.b16 %v527
        %v605 = vunpack.c.h.b16 %v527
        %v606 = vunpack.c.l.b16 %v528
        %v607 = vunpack.c.h.b16 %v528
        %v608 = vunpack.c.l.b16 %v529
        %v609 = vunpack.c.h.b16 %v529
        %v610 = vunpack.c.l.b16 %v530
        %v611 = vunpack.c.h.b16 %v530
        %v612 = vunpack.c.l.b16 %v531
        %v613 = vunpack.c.h.b16 %v531
        %v614 = vunpack.c.l.b16 %v532
        %v615 = vunpack.c.h.b16 %v532
        %v616 = vunpack.c.l.b16 %v533
        %v617 = vunpack.c.h.b16 %v533
        %v618 = vunpack.c.l.b16 %v534
        %v619 = vunpack.c.h.b16 %v534
        %v620 = vunpack.c.l.b16 %v535
        %v621 = vunpack.c.h.b16 %v535
        %v622 = vunpack.c.l.b16 %v536
        %v623 = vunpack.c.h.b16 %v536
        %v624 = vunpack.c.l.b16 %v537
        %v625 = vunpack.c.h.b16 %v537
        %v626 = vunpack.c.l.b16 %v538
        %v627 = vunpack.c.h.b16 %v538
        %v628 = vunpack.c.l.b16 %v539
        %v629 = vunpack.c.h.b16 %v539
        %v630 = vunpack.c.l.b16 %v540
        %v631 = vunpack.c.h.b16 %v540
        %v632 = vunpack.c.l.b16 %v541
        %v633 = vunpack.c.h.b16 %v541
        %v634 = vunpack.c.l.b16 %v542
        %v635 = vunpack.c.h.b16 %v542
        %v636 = vunpack.c.l.b16 %v543
        %v637 = vunpack.c.h.b16 %v543
        %v638 = vunpack.c.l.b16 %v544
        %v639 = vunpack.c.h.b16 %v544
        %v640 = vunpack.c.l.b16 %v545
        %v641 = vunpack.c.h.b16 %v545
        %v642 = vpack.c.b16 %v580, %v578
        %v643 = vpack.c.b16 %v581, %v579
        %v644 = vpack.c.b16 %v584, %v582
        %v645 = vpack.c.b16 %v585, %v583
        %v646 = vpack.c.b16 %v588, %v586
        %v647 = vpack.c.b16 %v589, %v587
        %v648 = vpack.c.b16 %v592, %v590
        %v649 = vpack.c.b16 %v593, %v591
        %v650 = vpack.c.b16 %v596, %v594
        %v651 = vpack.c.b16 %v597, %v595
        %v652 = vpack.c.b16 %v600, %v598
        %v653 = vpack.c.b16 %v601, %v599
        %v654 = vpack.c.b16 %v604, %v602
        %v655 = vpack.c.b16 %v605, %v603
        %v656 = vpack.c.b16 %v608, %v606
        %v657 = vpack.c.b16 %v609, %v607
        %v658 = vpack.c.b16 %v612, %v610
        %v659 = vpack.c.b16 %v613, %v611
        %v660 = vpack.c.b16 %v616, %v614
        %v661 = vpack.c.b16 %v617, %v615
        %v662 = vpack.c.b16 %v620, %v618
        %v663 = vpack.c.b16 %v621, %v619
        %v664 = vpack.c.b16 %v624, %v622
        %v665 = vpack.c.b16 %v625, %v623
        %v666 = vpack.c.b16 %v628, %v626
        %v667 = vpack.c.b16 %v629, %v627
        %v668 = vpack.c.b16 %v632, %v630
        %v669 = vpack.c.b16 %v633, %v631
        %v670 = vpack.c.b16 %v636, %v634
        %v671 = vpack.c.b16 %v637, %v635
        %v672 = vpack.c.b16 %v640, %v638
        %v673 = vpack.c.b16 %v641, %v639
        %706 = vmatprep.subr.bf16.mxu0 %v643
        %707 = vmatpush1.bf16.msra.mxu0 %v642
        %708 = vmatprep.subr.bf16.mxu0 %v645
        %709 = vmatpush1.bf16.msra.mxu0 %v644
        %710 = vmatprep.subr.bf16.mxu0 %v647
        %711 = vmatpush1.bf16.msra.mxu0 %v646
        %712 = vmatprep.subr.bf16.mxu0 %v649
        %713 = vmatpush1.bf16.msra.mxu0 %v648
        %714 = vmatprep.subr.bf16.mxu0 %v651
        %715 = vmatpush1.bf16.msra.mxu0 %v650
        %716 = vmatprep.subr.bf16.mxu0 %v653
        %717 = vmatpush1.bf16.msra.mxu0 %v652
        %718 = vmatprep.subr.bf16.mxu0 %v655
        %719 = vmatpush1.bf16.msra.mxu0 %v654
        %720 = vmatprep.subr.bf16.mxu0 %v657
        %721 = vmatpush1.bf16.msra.mxu0 %v656
        %722 = vmatprep.subr.bf16.mxu0 %v659
        %723 = vmatpush1.bf16.msra.mxu0 %v658
        %724 = vmatprep.subr.bf16.mxu0 %v661
        %725 = vmatpush1.bf16.msra.mxu0 %v660
        %726 = vmatprep.subr.bf16.mxu0 %v663
        %727 = vmatpush1.bf16.msra.mxu0 %v662
        %728 = vmatprep.subr.bf16.mxu0 %v665
        %729 = vmatpush1.bf16.msra.mxu0 %v664
        %730 = vmatprep.subr.bf16.mxu0 %v667
        %731 = vmatpush1.bf16.msra.mxu0 %v666
        %732 = vmatprep.subr.bf16.mxu0 %v669
        %733 = vmatpush1.bf16.msra.mxu0 %v668
        %734 = vmatprep.subr.bf16.mxu0 %v671
        %735 = vmatpush1.bf16.msra.mxu0 %v670
        %736 = vmatprep.subr.bf16.mxu0 %v673
        %737 = vmatpush1.bf16.msra.mxu0 %v672
        %738 = vmatprep.mubr.bf16.mxu0 %v511
        %739 = vmatmul.mubr.bf16.gmra.mrb[0].mxu0 %v510
        %v740 = vpop.f32.mrb[0].mxu0
        %v741 = vadd.f32 0.0, %v740
        %v742 = vpop.f32.mrb[0].mxu0
        %v743 = vadd.f32 0.0, %v742
        %v744 = vpop.f32.mrb[0].mxu0
        %v745 = vadd.f32 0.0, %v744
        %v746 = vpop.f32.mrb[0].mxu0
        %v747 = vadd.f32 0.0, %v746
        %748 = vmatprep.mubr.bf16.mxu0 %v513
        %749 = vmatmul.mubr.bf16.gmra.mrb[0].mxu0 %v512
        %v750 = vpop.f32.mrb[0].mxu0
        %v751 = vadd.f32 0.0, %v750
        %v752 = vpop.f32.mrb[0].mxu0
        %v753 = vadd.f32 0.0, %v752
        %v754 = vpop.f32.mrb[0].mxu0
        %v755 = vadd.f32 0.0, %v754
        %v756 = vpop.f32.mrb[0].mxu0
        %v757 = vadd.f32 0.0, %v756
        %758 = vdwg.mxu0
        %759 = vst [vmem:[%s386] sm:$0xff] %v741
        %760 = vst [vmem:[%s386 + $0x8] sm:$0xff] %v743
        %761 = vst [vmem:[%s386 + $0x10] sm:$0xff] %v745
        %762 = vst [vmem:[%s386 + $0x18] sm:$0xff] %v747
        %763 = vst [vmem:[%s386 + $0x20] sm:$0xff] %v751
        %764 = vst [vmem:[%s386 + $0x28] sm:$0xff] %v753
        %765 = vst [vmem:[%s386 + $0x30] sm:$0xff] %v755
        %766 = vst [vmem:[%s386 + $0x38] sm:$0xff] %v757
        %s767 = sand.u32 %s134, 1
        %s768 = scalar_lea.sflag [#allocation4], %s767
        %s769 = sand.u32 %s134, 1
        %s770 = smul.addr %s769, 64
        %s771 = scalar_lea.vmem [#allocation3], %s770
        // Predicated region
        $region75: #{gpt_forward.17} parent=69 // pred_check
          %p772 = pneg %p144
        $region76: #{gpt_forward.17} parent=69 // pred_check_branch
          %774 = sbr.rel (%p772) target = $region78
        $region77: #{gpt_forward.17} parent=69 // pred_region
          %s775 = smul.u32 4, %s22
          %s776 = smul.u32 2, %s23
          %s778 = ssub.s32 1024, 1024
          %779 = vsyncadd %s768, %s778
          %s780 = smul.addr %s775, 4
          %s781 = sadd.s32 %s776, %s780
          %s782 = smul.addr %s781, 128
          %s783 = scalar_lea.hbm %s4, %s782
          %s784 = sshll.u32 %s771, 4
          %s785 = int_to_ptr.vmem [resolvable:$true] %s784
          %790 = dma.vmem_to_hbm [thread:$0]  %s785, 1024, %s783, %s768, 256, 512, 16
        $region78: #{gpt_forward.17} parent=69 // pred_fallthru
          _
      $region70: #{gpt_forward.17} parent=5 // pred_fallthru
        _
      %p791 = scmp.le.s32.totalorder 2, %s13
      // Predicated region
      $region79: #{gpt_forward.17} parent=5 // pred_check
        %p792 = pneg %p791
      $region80: #{gpt_forward.17} parent=5 // pred_check_branch
        %794 = sbr.rel (%p792) target = $region82
      $region81: #{gpt_forward.17} parent=5 // pred_region
        %s795 = ssub.s32 %s13, 2
        // Predicated region
        $region83: #{gpt_forward.17} parent=81 // pred_check
          %p796 = pneg %p150
        $region84: #{gpt_forward.17} parent=81 // pred_check_branch
          %798 = sbr.rel (%p796) target = $region86
        $region85: #{gpt_forward.17} parent=81 // pred_region
          %s799 = sand.u32 %s135, 1
          %s800 = scalar_lea.sflag [#allocation4], %s799
          %s801 = sand.u32 %s135, 1
          %s802 = smul.addr %s801, 64
          %s803 = scalar_lea.vmem [#allocation3], %s802
          %804 = dma.done %s800, 1024
        $region86: #{gpt_forward.17} parent=81 // pred_fallthru
          _
      $region82: #{gpt_forward.17} parent=5 // pred_fallthru
        _
    $region6: #{gpt_forward.17} parent=1 // loop_footer
      %s17 = sadd.s32 1, %s13
    $region7: #{gpt_forward.17} parent=1 // loop_footer_branch
      %12 = sbr.rel target = $region3
    $region8: #{gpt_forward.17} parent=1 // loop_exit
      _
    %805 = vsyncpa [#allocation4], 1
    %s806 = scalar_lea.sflag [#allocation4], 1
    %807 = vsyncpa %s806, 1

</llo_original>
